<compile_context>
chip_gen: v6e
topology: v6e:2x2x1
jax: 0.10.0
libtpu: 0.0.40
codegen_flags: <defaults>
</compile_context>

<pallas_src>
import math
import functools

import numpy as np
import jax
import jax.numpy as jnp
from jax import lax
from jax.experimental import pallas as pl
from jax.experimental.pallas import tpu as pltpu

# ----------------------------- model hyper-parameters -----------------------------
B = 2            # batch
P = 2            # players
H = 3            # rows
W = 4            # columns
C = 16           # card types
F_NS = 8         # non-spatial feature dim
E = 16           # embedding_dimensions
G = 32           # global_state_embedding_dimensions
NUM_HEADS = 4
HEAD_DIM = E // NUM_HEADS
SCALE = 1.0 / math.sqrt(HEAD_DIM)             # 0.5, exact in bf16/f32
NON_POS_ACTIONS = 4
N_SLOTS = H * W                               # 12
N_ACTIONS = NON_POS_ACTIONS + 2 * N_SLOTS     # 28
SEQ = 2 + H                                   # [cls, non_spatial, row0..row2] = 5
N_TOK = B * P * W                             # 16 per-column sequences
SN = SEQ * N_TOK                              # 80 stacked tokens
WIDE = SEQ * E                                # 80 lanes, (key-block j, feature d)
SH = SEQ * NUM_HEADS                          # 20 lanes, (key-block j, head h)
OUT_LANES = 128
OUT_ROWS = 8

# activation slab layout (f32, (56,128))
SP_ROWS = B * P * H * W                       # 48 rows, natural (b,p,h,w) order
NS_ROW = SP_ROWS                              # rows 48..49
MASK_ROW = NS_ROW + B                         # rows 50..51
ACT_ROWS = 56

_VMEM = pl.BlockSpec(memory_space=pltpu.MemorySpace.VMEM)


# ------------------------------ packed slab layouts ------------------------------
# bf16 slab: learned matmul weights + the input permutation (exact 0/1 in bf16).
W_ENTRIES = [
    ("perm",   (SP_ROWS, SP_ROWS)),     # (b,p,h,w) -> (h,b,p,w) row permutation
    ("card_w", (C, E)),
    ("ns_w",   (F_NS, E)),
    ("wqkv",   (E, 3 * E)),
    ("wo",     (E, E)),
    ("g_w1",   ((P + 1) * E, G)),
    ("g_w2",   (G, G)),
    ("v_w",    (G, P)),
    ("p_wc",   (E, 2)),
    ("p_wg",   (G, 2)),
    ("np_w",   (G, NON_POS_ACTIONS)),
]
# f32 slab: biases, LayerNorm, cls token, and all structural selection constants.
C_ENTRIES = [
    ("bqkv",    (1, 3 * E)),
    ("bo",      (1, E)),
    ("g_b1",    (1, G)),
    ("g_b2",    (1, G)),
    ("v_b",     (1, P)),
    ("p_b",     (1, 2)),
    ("np_b",    (1, NON_POS_ACTIONS)),
    ("ln_g",    (1, E)),
    ("ln_b",    (1, E)),
    ("cls",     (1, E)),
    ("tile_q",  (E, WIDE)),          # lane-tile: (.,d) -> (j,d) for all j
    ("bd",      (SN, WIDE)),         # block-diagonal mask [row-block == lane-block]
    ("rsum",    (N_TOK, SN)),        # sum rows with same sequence index n
    ("hsum",    (WIDE, SH)),         # per-(block,head) sum, SCALE folded in
    ("dsum",    (SH, NUM_HEADS)),    # sum over key blocks j per head
    ("hexp_jd", (SH, WIDE)),         # expand (j,h) -> (j,d)
    ("jsum",    (WIDE, E)),          # sum over key blocks j per feature d
    ("hexp",    (NUM_HEADS, E)),     # expand h -> d
    ("sel",     (P * B, N_TOK)),     # board-summary pooling (sum over columns)
    ("slot2",   (H * N_TOK, 2 * N_SLOTS)),   # card row -> (flip,replace) slot mask
    ("qsel",    (B, H * N_TOK)),     # player-0 row select per batch
    ("gexp",    (2, 2 * N_SLOTS)),   # [flip,replace] -> 24 action lanes
]
W_SHAPES = dict(W_ENTRIES)
C_SHAPES = dict(C_ENTRIES)


def _pack_layout(entries, align):
    offs, row = {}, 0
    for name, (r, _c) in entries:
        row = ((row + align - 1) // align) * align
        offs[name] = row
        row += r
    total = ((row + align - 1) // align) * align
    return offs, total


W_OFF, W_ROWS = _pack_layout(W_ENTRIES, 16)   # bf16 -> 16-row alignment
C_OFF, C_ROWS = _pack_layout(C_ENTRIES, 8)    # f32  -> 8-row alignment


def _structural_constants():
    cst = {}
    # spatial row permutation: natural (b,p,h,w) -> token order (h,b,p,w)
    perm = np.zeros((SP_ROWS, SP_ROWS), np.float32)
    for b in range(B):
        for p in range(P):
            for h in range(H):
                for w in range(W):
                    perm[((h * B + b) * P + p) * W + w,
                         ((b * P + p) * H + h) * W + w] = 1.0
    cst["perm"] = perm

    lw = np.arange(WIDE)[None, :]
    cst["tile_q"] = (lw % E == np.arange(E)[:, None]).astype(np.float32)
    cst["bd"] = (np.arange(SN)[:, None] // N_TOK == lw // E).astype(np.float32)
    cst["rsum"] = (np.arange(SN)[None, :] % N_TOK ==
                   np.arange(N_TOK)[:, None]).astype(np.float32)

    rw = np.arange(WIDE)[:, None]
    ch = np.arange(SH)[None, :]
    cst["hsum"] = np.where((rw // E == ch // NUM_HEADS) &
                           ((rw % E) // HEAD_DIM == ch % NUM_HEADS),
                           np.float32(SCALE), np.float32(0.0))
    rh = np.arange(SH)[:, None]
    cst["dsum"] = (rh % NUM_HEADS == np.arange(NUM_HEADS)[None, :]).astype(np.float32)
    cst["hexp_jd"] = ((rh // NUM_HEADS == lw // E) &
                      ((lw % E) // HEAD_DIM == rh % NUM_HEADS)).astype(np.float32)
    ce = np.arange(E)[None, :]
    cst["jsum"] = (rw % E == ce).astype(np.float32)
    cst["hexp"] = (ce // HEAD_DIM == np.arange(NUM_HEADS)[:, None]).astype(np.float32)

    m = np.arange(P * B)[:, None]
    nn = np.arange(N_TOK)[None, :]
    cst["sel"] = ((nn // (P * W) == m % B) &
                  ((nn // W) % P == m // B)).astype(np.float32)

    rr = np.arange(H * N_TOK)[:, None]
    aa = np.arange(2 * N_SLOTS)[None, :]
    slot = (rr // N_TOK) * W + (rr % W)
    cst["slot2"] = (aa % N_SLOTS == slot).astype(np.float32)
    cst["qsel"] = (((np.arange(H * N_TOK)[None, :] // (P * W)) % B ==
                    np.arange(B)[:, None]) &
                   ((np.arange(H * N_TOK)[None, :] // W) % P == 0)).astype(np.float32)
    cst["gexp"] = (aa // N_SLOTS == np.arange(2)[:, None]).astype(np.float32)
    return cst


# ----------------------------------- fused kernel -----------------------------------
def _skynet_kernel(act_ref, w_ref, c_ref, out_ref):
    f32, bf16 = jnp.float32, jnp.bfloat16
    dot = functools.partial(jnp.dot, preferred_element_type=f32)

    def wld(name):  # bf16 matmul weight
        r0 = W_OFF[name]
        r, c = W_SHAPES[name]
        return w_ref[r0:r0 + r, 0:c]

    def cld(name):  # f32 bias / LN / structural constant
        r0 = C_OFF[name]
        r, c = C_SHAPES[name]
        return c_ref[r0:r0 + r, 0:c]

    # ------------------------------- embedders -------------------------------
    sp = act_ref[0:SP_ROWS, 0:C].astype(bf16)            # natural (b,p,h,w) rows
    sp_hbpw = dot(wld("perm"), sp)                       # rows reordered to (h,b,p,w)
    cards = dot(sp_hbpw.astype(bf16), wld("card_w"))     # (48, E)
    ns_in = act_ref[NS_ROW:NS_ROW + B, 0:F_NS].astype(bf16)
    ns = dot(ns_in, wld("ns_w"))                         # (B, E)

    # --------------------- token matrix (SN, E), s-major ---------------------
    cls_tok = jnp.broadcast_to(cld("cls"), (N_TOK, E))
    ns_tok = jnp.broadcast_to(ns[:, None, :], (B, P * W, E)).reshape(N_TOK, E)
    x = jnp.concatenate([cls_tok, ns_tok, cards], axis=0)          # (80, E) f32

    # --------------------------- pre-LN + fused QKV ---------------------------
    mu = jnp.mean(x, axis=-1, keepdims=True)
    var = jnp.mean((x - mu) * (x - mu), axis=-1, keepdims=True)
    xn = (x - mu) * lax.rsqrt(var + 1e-5) * cld("ln_g") + cld("ln_b")
    qkv = dot(xn.astype(bf16), wld("wqkv")) + cld("bqkv")          # (80, 3E)
    q = qkv[:, 0:E]
    k = qkv[:, E:2 * E]
    v = qkv[:, 2 * E:3 * E]

    # --------- lane-packed attention: lanes carry (key-block j, feature/head) ---------
    tile_q = cld("tile_q")
    bd = cld("bd")
    rsum = cld("rsum")

    def widen(z):
        # (80, E) row (j,n) -> (80, WIDE) row (i,n), lane (j,d) = z[(j,n), d]
        zn = dot(rsum, dot(z, tile_q) * bd)                        # (16, WIDE)
        return jnp.broadcast_to(zn[None], (SEQ, N_TOK, WIDE)).reshape(SN, WIDE)

    q_wide = dot(q, tile_q)                                        # (80, WIDE)
    scores = dot(q_wide * widen(k), cld("hsum"))                   # (80, SH), scaled
    # Per-row max (constant across the key axis for every head) keeps softmax exact
    # while staying a single lane reduction.
    m = jnp.max(scores, axis=-1, keepdims=True)
    e = jnp.exp(scores - m)
    denom = dot(e, cld("dsum"))                                    # (80, NH)
    ctx_un = dot(dot(e, cld("hexp_jd")) * widen(v), cld("jsum"))   # (80, E)
    ctx = ctx_un * dot(pl.reciprocal(denom, approx=True), cld("hexp"))
    attn = dot(ctx.astype(bf16), wld("wo")) + cld("bo")
    y = x + attn                                                   # residual, (80, E)

    # ------------- board summaries (sum over columns) + global MLP -------------
    bs = dot(cld("sel"), y[0:N_TOK])                               # (P*B, E), rows (p, b)
    g_w1 = wld("g_w1")
    h1 = (dot(bs[0:B].astype(bf16), g_w1[0:E]) +
          dot(bs[B:2 * B].astype(bf16), g_w1[E:2 * E]) +
          dot(ns.astype(bf16), g_w1[2 * E:3 * E]) + cld("g_b1"))
    h1 = jnp.maximum(h1, 0.0)
    gse = dot(h1.astype(bf16), wld("g_w2")) + cld("g_b2")          # (B, G)

    # ------------------------------- value tail -------------------------------
    vlog = dot(gse.astype(bf16), wld("v_w")) + cld("v_b")          # (B, P)
    ve = jnp.exp(vlog - jnp.max(vlog, axis=-1, keepdims=True))
    value = ve / jnp.sum(ve, axis=-1, keepdims=True)               # exact softmax

    # ------------------------------- policy tail -------------------------------
    gexp = cld("gexp")
    card_pos = dot(y[2 * N_TOK:SN].astype(bf16), wld("p_wc"))      # (48, 2)
    z = dot(card_pos, gexp) * cld("slot2")                         # (48, 24)
    pos_cards = dot(cld("qsel"), z)                                # (B, 24) player-0 scatter
    glob = dot(gse.astype(bf16), wld("p_wg")) + cld("p_b")         # (B, 2)
    non_pos = dot(gse.astype(bf16), wld("np_w")) + cld("np_b")     # (B, 4)
    logits = jnp.concatenate([non_pos, pos_cards + dot(glob, gexp)], axis=1)
    mask = act_ref[MASK_ROW:MASK_ROW + B, 0:N_ACTIONS]
    # NOTE: wrapper guarantees >=1 valid action per row (else downstream softmax undefined).
    policy = jnp.where(mask != 0, logits, jnp.float32(-1e10))

    # ------------------ single lane-dense (8,128) output slab ------------------
    points = jnp.zeros((B, P), f32)                                # zeros_like(value)
    lane_pad = jnp.zeros((B, OUT_LANES - 2 * P - N_ACTIONS), f32)
    packed = jnp.concatenate([value, points, policy, lane_pad], axis=1)
    row_pad = jnp.zeros((OUT_ROWS - B, OUT_LANES), f32)
    out_ref[...] = jnp.concatenate([packed, row_pad], axis=0)


# ----------------------------- parameter initialisation -----------------------------
def init_params(key):
    keys = jax.random.split(key, 24)

    def rnd(i, shape, scale=0.1):
        return scale * jax.random.normal(keys[i], shape, dtype=jnp.float32)

    return {
        "card_w": rnd(0, (C, E)),                  # card_embedder (no bias)
        "ns_w": rnd(1, (F_NS, E)),                 # non_spatial_embedder (no bias)
        "cls": rnd(2, (1, E)),                     # column_summary_token
        # column_attention (TransformerBlock, mlp_ratio=None, dropout=0)
        "ln_g": jnp.ones((1, E), jnp.float32),
        "ln_b": jnp.zeros((1, E), jnp.float32),
        "wqkv": rnd(3, (E, 3 * E)), "bqkv": rnd(4, (1, 3 * E), 0.01),
        "wo": rnd(5, (E, E)), "bo": rnd(6, (1, E), 0.01),
        # global_state_embedder: Linear((P+1)*E -> G) -> ReLU -> Linear(G -> G)
        "g_w1": rnd(7, ((P + 1) * E, G)), "g_b1": rnd(8, (1, G), 0.01),
        "g_w2": rnd(9, (G, G)), "g_b2": rnd(10, (1, G), 0.01),
        # value tail: Linear(G -> P) + softmax
        "v_w": rnd(11, (G, P)), "v_b": rnd(12, (1, P), 0.01),
        # policy tail: positional Linear(E + G -> 2) split into card / global parts
        "p_wc": rnd(13, (E, 2)), "p_wg": rnd(14, (G, 2)), "p_b": rnd(15, (1, 2), 0.01),
        # policy tail: non-positional Linear(G -> 4)
        "np_w": rnd(16, (G, NON_POS_ACTIONS)), "np_b": rnd(17, (1, NON_POS_ACTIONS), 0.01),
    }
    # NOTE: column_attention2 is constructed in the PyTorch module but never used in
    # forward(), so it is intentionally omitted.


def pack_params(params):
    """Builds the cached bf16 weight slab and f32 bias/constant slab (one-time)."""
    cst = _structural_constants()
    host = {k: np.asarray(jax.device_get(v), np.float32) for k, v in params.items()}

    wslab = np.zeros((W_ROWS, OUT_LANES), np.float32)
    for name, (r, c) in W_ENTRIES:
        src = cst[name] if name == "perm" else host[name]
        wslab[W_OFF[name]:W_OFF[name] + r, :c] = src

    cslab = np.zeros((C_ROWS, OUT_LANES), np.float32)
    for name, (r, c) in C_ENTRIES:
        src = host[name] if name in host else cst[name]
        cslab[C_OFF[name]:C_OFF[name] + r, :c] = src

    return (jnp.asarray(wslab).astype(jnp.bfloat16),
            jnp.asarray(cslab, dtype=jnp.float32))


# ----------------------------- forward pass (wrapper) -----------------------------
def _build_act_slab(spatial, non_spatial, mask):
    act = jnp.zeros((ACT_ROWS, OUT_LANES), jnp.float32)
    act = act.at[0:SP_ROWS, 0:C].set(spatial.reshape(SP_ROWS, C))
    act = act.at[NS_ROW:NS_ROW + B, 0:F_NS].set(non_spatial)
    act = act.at[MASK_ROW:MASK_ROW + B, 0:N_ACTIONS].set(mask.astype(jnp.float32))
    return act


@jax.jit
def equivariant_skynet_forward(wslab, cslab, spatial, non_spatial, mask):
    act = _build_act_slab(spatial, non_spatial, mask)
    slab = pl.pallas_call(
        _skynet_kernel,
        out_shape=jax.ShapeDtypeStruct((OUT_ROWS, OUT_LANES), jnp.float32),
        in_specs=[_VMEM, _VMEM, _VMEM],
        out_specs=_VMEM,
    )(act, wslab, cslab)
    value = slab[0:B, 0:P]
    points = slab[0:B, P:2 * P]
    policy = slab[0:B, 2 * P:2 * P + N_ACTIONS]
    return value, points, policy


# ----------------------------------------- main -----------------------------------------
if __name__ == "__main__":
    key = jax.random.PRNGKey(0)
    k_par, k_sp, k_ns, k_mask = jax.random.split(key, 4)

    params = init_params(k_par)
    wslab, cslab = pack_params(params)     # built once, cached across calls

    spatial = jax.random.normal(k_sp, (B, P, H, W, C), dtype=jnp.float32)
    non_spatial = jax.random.normal(k_ns, (B, F_NS), dtype=jnp.float32)
    mask = (jax.random.uniform(k_mask, (B, N_ACTIONS)) > 0.2).astype(jnp.float32)
    mask = mask.at[:, 0].set(1.0)          # guarantee >=1 valid action per sample

    value, points, policy = equivariant_skynet_forward(
        wslab, cslab, spatial, non_spatial, mask)
    jax.block_until_ready((value, points, policy))

    assert value.shape == (B, P) and points.shape == (B, P) and policy.shape == (B, N_ACTIONS)
    assert bool(jnp.all(jnp.isfinite(value))) and bool(jnp.all(jnp.isfinite(policy)))
    assert bool(jnp.all(points == 0.0))
    assert bool(jnp.allclose(jnp.sum(value, axis=-1), 1.0, atol=1e-5))
    print("KERNEL_OK")
</pallas_src>

<mosaic_0001>
module attributes {stable_mosaic.version = 11 : i64} {
  func.func @_skynet_kernel(%arg0: memref<56x128xf32, #tpu.memory_space<vmem>>, %arg1: memref<304x128xbf16, #tpu.memory_space<vmem>>, %arg2: memref<480x128xf32, #tpu.memory_space<vmem>>, %arg3: memref<8x128xf32, #tpu.memory_space<vmem>>) attributes {dimension_semantics = [], scalar_prefetch = 0 : i64, scratch_operands = 0 : i64, tpu.core_type = #tpu.core_type<tc>} {
    %c0 = arith.constant 0 : index
    %c0_0 = arith.constant 0 : index
    %0 = vector.load %arg0[%c0, %c0_0] : memref<56x128xf32, #tpu.memory_space<vmem>>, vector<48x16xf32>
    %1 = arith.truncf %0 : vector<48x16xf32> to vector<48x16xbf16>
    %c0_1 = arith.constant 0 : index
    %c0_2 = arith.constant 0 : index
    %2 = vector.load %arg1[%c0_1, %c0_2] : memref<304x128xbf16, #tpu.memory_space<vmem>>, vector<48x48xbf16>
    %cst = arith.constant dense<0.000000e+00> : vector<48x16xf32>
    %3 = tpu.matmul %2, %1, %cst {dimension_numbers = #tpu.dot_dimension_numbers<[1], [0], [0], [1], [0, 0, 1, 1], [], []>} : vector<48x48xbf16>, vector<48x16xbf16>, vector<48x16xf32> -> vector<48x16xf32>
    %4 = arith.truncf %3 : vector<48x16xf32> to vector<48x16xbf16>
    %c48 = arith.constant 48 : index
    %c0_3 = arith.constant 0 : index
    %5 = vector.load %arg1[%c48, %c0_3] : memref<304x128xbf16, #tpu.memory_space<vmem>>, vector<16x16xbf16>
    %cst_4 = arith.constant dense<0.000000e+00> : vector<48x16xf32>
    %6 = tpu.matmul %4, %5, %cst_4 {dimension_numbers = #tpu.dot_dimension_numbers<[1], [0], [0], [1], [0, 0, 1, 1], [], []>} : vector<48x16xbf16>, vector<16x16xbf16>, vector<48x16xf32> -> vector<48x16xf32>
    %c48_5 = arith.constant 48 : index
    %c0_6 = arith.constant 0 : index
    %7 = vector.load %arg0[%c48_5, %c0_6] : memref<56x128xf32, #tpu.memory_space<vmem>>, vector<2x8xf32>
    %8 = arith.truncf %7 : vector<2x8xf32> to vector<2x8xbf16>
    %c64 = arith.constant 64 : index
    %c0_7 = arith.constant 0 : index
    %9 = vector.load %arg1[%c64, %c0_7] : memref<304x128xbf16, #tpu.memory_space<vmem>>, vector<8x16xbf16>
    %cst_8 = arith.constant dense<0.000000e+00> : vector<2x16xf32>
    %10 = tpu.matmul %8, %9, %cst_8 {dimension_numbers = #tpu.dot_dimension_numbers<[1], [0], [0], [1], [0, 0, 1, 1], [], []>} : vector<2x8xbf16>, vector<8x16xbf16>, vector<2x16xf32> -> vector<2x16xf32>
    %c72 = arith.constant 72 : index
    %c0_9 = arith.constant 0 : index
    %11 = vector.load %arg2[%c72, %c0_9] : memref<480x128xf32, #tpu.memory_space<vmem>>, vector<1x16xf32>
    %12 = vector.shape_cast %11 : vector<1x16xf32> to vector<1x16xf32>
    %13 = vector.broadcast %12 : vector<1x16xf32> to vector<16x16xf32>
    %14 = vector.shape_cast %10 : vector<2x16xf32> to vector<2x1x16xf32>
    %15 = vector.shape_cast %14 : vector<2x1x16xf32> to vector<2x1x16xf32>
    %16 = vector.broadcast %15 : vector<2x1x16xf32> to vector<2x8x16xf32>
    %17 = vector.shape_cast %16 : vector<2x8x16xf32> to vector<16x16xf32>
    %18 = tpu.concatenate %13, %17, %6 in 0 : vector<16x16xf32>, vector<16x16xf32>, vector<48x16xf32> -> vector<80x16xf32>
    %cst_10 = arith.constant dense<0.000000e+00> : vector<80xf32>
    %19 = vector.multi_reduction <add>, %18, %cst_10 [1] : vector<80x16xf32> to vector<80xf32>
    %20 = vector.shape_cast %19 : vector<80xf32> to vector<80x1xf32>
    %cst_11 = arith.constant 1.600000e+01 : f32
    %21 = vector.broadcast %cst_11 : f32 to vector<80x1xf32>
    %22 = arith.divf %20, %21 : vector<80x1xf32>
    %23 = vector.broadcast %22 : vector<80x1xf32> to vector<80x16xf32>
    %24 = arith.subf %18, %23 : vector<80x16xf32>
    %25 = vector.broadcast %22 : vector<80x1xf32> to vector<80x16xf32>
    %26 = arith.subf %18, %25 : vector<80x16xf32>
    %27 = arith.mulf %24, %26 : vector<80x16xf32>
    %cst_12 = arith.constant dense<0.000000e+00> : vector<80xf32>
    %28 = vector.multi_reduction <add>, %27, %cst_12 [1] : vector<80x16xf32> to vector<80xf32>
    %29 = vector.shape_cast %28 : vector<80xf32> to vector<80x1xf32>
    %cst_13 = arith.constant 1.600000e+01 : f32
    %30 = vector.broadcast %cst_13 : f32 to vector<80x1xf32>
    %31 = arith.divf %29, %30 : vector<80x1xf32>
    %32 = vector.broadcast %22 : vector<80x1xf32> to vector<80x16xf32>
    %33 = arith.subf %18, %32 : vector<80x16xf32>
    %cst_14 = arith.constant 9.99999974E-6 : f32
    %34 = vector.broadcast %cst_14 : f32 to vector<80x1xf32>
    %35 = arith.addf %31, %34 : vector<80x1xf32>
    %36 = math.rsqrt %35 : vector<80x1xf32>
    %37 = vector.broadcast %36 : vector<80x1xf32> to vector<80x16xf32>
    %38 = arith.mulf %33, %37 : vector<80x16xf32>
    %c56 = arith.constant 56 : index
    %c0_15 = arith.constant 0 : index
    %39 = vector.load %arg2[%c56, %c0_15] : memref<480x128xf32, #tpu.memory_space<vmem>>, vector<1x16xf32>
    %40 = vector.broadcast %39 : vector<1x16xf32> to vector<80x16xf32>
    %41 = arith.mulf %38, %40 : vector<80x16xf32>
    %c64_16 = arith.constant 64 : index
    %c0_17 = arith.constant 0 : index
    %42 = vector.load %arg2[%c64_16, %c0_17] : memref<480x128xf32, #tpu.memory_space<vmem>>, vector<1x16xf32>
    %43 = vector.broadcast %42 : vector<1x16xf32> to vector<80x16xf32>
    %44 = arith.addf %41, %43 : vector<80x16xf32>
    %45 = arith.truncf %44 : vector<80x16xf32> to vector<80x16xbf16>
    %c80 = arith.constant 80 : index
    %c0_18 = arith.constant 0 : index
    %46 = vector.load %arg1[%c80, %c0_18] : memref<304x128xbf16, #tpu.memory_space<vmem>>, vector<16x48xbf16>
    %cst_19 = arith.constant dense<0.000000e+00> : vector<80x48xf32>
    %47 = tpu.matmul %45, %46, %cst_19 {dimension_numbers = #tpu.dot_dimension_numbers<[1], [0], [0], [1], [0, 0, 1, 1], [], []>} : vector<80x16xbf16>, vector<16x48xbf16>, vector<80x48xf32> -> vector<80x48xf32>
    %c0_20 = arith.constant 0 : index
    %c0_21 = arith.constant 0 : index
    %48 = vector.load %arg2[%c0_20, %c0_21] : memref<480x128xf32, #tpu.memory_space<vmem>>, vector<1x48xf32>
    %49 = vector.broadcast %48 : vector<1x48xf32> to vector<80x48xf32>
    %50 = arith.addf %47, %49 : vector<80x48xf32>
    %51 = vector.extract_strided_slice %50 {offsets = [0, 0], sizes = [80, 16], strides = [1, 1]} : vector<80x48xf32> to vector<80x16xf32>
    %52 = vector.extract_strided_slice %50 {offsets = [0, 16], sizes = [80, 16], strides = [1, 1]} : vector<80x48xf32> to vector<80x16xf32>
    %53 = vector.extract_strided_slice %50 {offsets = [0, 32], sizes = [80, 16], strides = [1, 1]} : vector<80x48xf32> to vector<80x16xf32>
    %c80_22 = arith.constant 80 : index
    %c0_23 = arith.constant 0 : index
    %54 = vector.load %arg2[%c80_22, %c0_23] : memref<480x128xf32, #tpu.memory_space<vmem>>, vector<16x80xf32>
    %c96 = arith.constant 96 : index
    %c0_24 = arith.constant 0 : index
    %55 = vector.load %arg2[%c96, %c0_24] : memref<480x128xf32, #tpu.memory_space<vmem>>, vector<80x80xf32>
    %c176 = arith.constant 176 : index
    %c0_25 = arith.constant 0 : index
    %56 = vector.load %arg2[%c176, %c0_25] : memref<480x128xf32, #tpu.memory_space<vmem>>, vector<16x80xf32>
    %cst_26 = arith.constant dense<0.000000e+00> : vector<80x80xf32>
    %57 = tpu.matmul %51, %54, %cst_26 {dimension_numbers = #tpu.dot_dimension_numbers<[1], [0], [0], [1], [0, 0, 1, 1], [], []>} : vector<80x16xf32>, vector<16x80xf32>, vector<80x80xf32> -> vector<80x80xf32>
    %cst_27 = arith.constant dense<0.000000e+00> : vector<80x80xf32>
    %58 = tpu.matmul %52, %54, %cst_27 {dimension_numbers = #tpu.dot_dimension_numbers<[1], [0], [0], [1], [0, 0, 1, 1], [], []>} : vector<80x16xf32>, vector<16x80xf32>, vector<80x80xf32> -> vector<80x80xf32>
    %59 = arith.mulf %58, %55 : vector<80x80xf32>
    %cst_28 = arith.constant dense<0.000000e+00> : vector<16x80xf32>
    %60 = tpu.matmul %56, %59, %cst_28 {dimension_numbers = #tpu.dot_dimension_numbers<[1], [0], [0], [1], [0, 0, 1, 1], [], []>} : vector<16x80xf32>, vector<80x80xf32>, vector<16x80xf32> -> vector<16x80xf32>
    %61 = vector.shape_cast %60 : vector<16x80xf32> to vector<1x16x80xf32>
    %62 = vector.shape_cast %61 : vector<1x16x80xf32> to vector<1x16x80xf32>
    %63 = vector.broadcast %62 : vector<1x16x80xf32> to vector<5x16x80xf32>
    %64 = vector.shape_cast %63 : vector<5x16x80xf32> to vector<80x80xf32>
    %65 = arith.mulf %57, %64 : vector<80x80xf32>
    %c192 = arith.constant 192 : index
    %c0_29 = arith.constant 0 : index
    %66 = vector.load %arg2[%c192, %c0_29] : memref<480x128xf32, #tpu.memory_space<vmem>>, vector<80x20xf32>
    %cst_30 = arith.constant dense<0.000000e+00> : vector<80x20xf32>
    %67 = tpu.matmul %65, %66, %cst_30 {dimension_numbers = #tpu.dot_dimension_numbers<[1], [0], [0], [1], [0, 0, 1, 1], [], []>} : vector<80x80xf32>, vector<80x20xf32>, vector<80x20xf32> -> vector<80x20xf32>
    %cst_31 = arith.constant dense<0xFF800000> : vector<80xf32>
    %68 = vector.multi_reduction <maximumf>, %67, %cst_31 [1] : vector<80x20xf32> to vector<80xf32>
    %69 = vector.shape_cast %68 : vector<80xf32> to vector<80x1xf32>
    %70 = vector.broadcast %69 : vector<80x1xf32> to vector<80x20xf32>
    %71 = arith.subf %67, %70 : vector<80x20xf32>
    %72 = math.exp %71 : vector<80x20xf32>
    %c272 = arith.constant 272 : index
    %c0_32 = arith.constant 0 : index
    %73 = vector.load %arg2[%c272, %c0_32] : memref<480x128xf32, #tpu.memory_space<vmem>>, vector<20x4xf32>
    %cst_33 = arith.constant dense<0.000000e+00> : vector<80x4xf32>
    %74 = tpu.matmul %72, %73, %cst_33 {dimension_numbers = #tpu.dot_dimension_numbers<[1], [0], [0], [1], [0, 0, 1, 1], [], []>} : vector<80x20xf32>, vector<20x4xf32>, vector<80x4xf32> -> vector<80x4xf32>
    %c296 = arith.constant 296 : index
    %c0_34 = arith.constant 0 : index
    %75 = vector.load %arg2[%c296, %c0_34] : memref<480x128xf32, #tpu.memory_space<vmem>>, vector<20x80xf32>
    %cst_35 = arith.constant dense<0.000000e+00> : vector<80x80xf32>
    %76 = tpu.matmul %72, %75, %cst_35 {dimension_numbers = #tpu.dot_dimension_numbers<[1], [0], [0], [1], [0, 0, 1, 1], [], []>} : vector<80x20xf32>, vector<20x80xf32>, vector<80x80xf32> -> vector<80x80xf32>
    %cst_36 = arith.constant dense<0.000000e+00> : vector<80x80xf32>
    %77 = tpu.matmul %53, %54, %cst_36 {dimension_numbers = #tpu.dot_dimension_numbers<[1], [0], [0], [1], [0, 0, 1, 1], [], []>} : vector<80x16xf32>, vector<16x80xf32>, vector<80x80xf32> -> vector<80x80xf32>
    %78 = arith.mulf %77, %55 : vector<80x80xf32>
    %cst_37 = arith.constant dense<0.000000e+00> : vector<16x80xf32>
    %79 = tpu.matmul %56, %78, %cst_37 {dimension_numbers = #tpu.dot_dimension_numbers<[1], [0], [0], [1], [0, 0, 1, 1], [], []>} : vector<16x80xf32>, vector<80x80xf32>, vector<16x80xf32> -> vector<16x80xf32>
    %80 = vector.shape_cast %79 : vector<16x80xf32> to vector<1x16x80xf32>
    %81 = vector.shape_cast %80 : vector<1x16x80xf32> to vector<1x16x80xf32>
    %82 = vector.broadcast %81 : vector<1x16x80xf32> to vector<5x16x80xf32>
    %83 = vector.shape_cast %82 : vector<5x16x80xf32> to vector<80x80xf32>
    %84 = arith.mulf %76, %83 : vector<80x80xf32>
    %c320 = arith.constant 320 : index
    %c0_38 = arith.constant 0 : index
    %85 = vector.load %arg2[%c320, %c0_38] : memref<480x128xf32, #tpu.memory_space<vmem>>, vector<80x16xf32>
    %cst_39 = arith.constant dense<0.000000e+00> : vector<80x16xf32>
    %86 = tpu.matmul %84, %85, %cst_39 {dimension_numbers = #tpu.dot_dimension_numbers<[1], [0], [0], [1], [0, 0, 1, 1], [], []>} : vector<80x80xf32>, vector<80x16xf32>, vector<80x16xf32> -> vector<80x16xf32>
    %87 = tpu.reciprocal %74 {approx = true} : vector<80x4xf32> -> vector<80x4xf32>
    %c400 = arith.constant 400 : index
    %c0_40 = arith.constant 0 : index
    %88 = vector.load %arg2[%c400, %c0_40] : memref<480x128xf32, #tpu.memory_space<vmem>>, vector<4x16xf32>
    %cst_41 = arith.constant dense<0.000000e+00> : vector<80x16xf32>
    %89 = tpu.matmul %87, %88, %cst_41 {dimension_numbers = #tpu.dot_dimension_numbers<[1], [0], [0], [1], [0, 0, 1, 1], [], []>} : vector<80x4xf32>, vector<4x16xf32>, vector<80x16xf32> -> vector<80x16xf32>
    %90 = arith.mulf %86, %89 : vector<80x16xf32>
    %91 = arith.truncf %90 : vector<80x16xf32> to vector<80x16xbf16>
    %c96_42 = arith.constant 96 : index
    %c0_43 = arith.constant 0 : index
    %92 = vector.load %arg1[%c96_42, %c0_43] : memref<304x128xbf16, #tpu.memory_space<vmem>>, vector<16x16xbf16>
    %cst_44 = arith.constant dense<0.000000e+00> : vector<80x16xf32>
    %93 = tpu.matmul %91, %92, %cst_44 {dimension_numbers = #tpu.dot_dimension_numbers<[1], [0], [0], [1], [0, 0, 1, 1], [], []>} : vector<80x16xbf16>, vector<16x16xbf16>, vector<80x16xf32> -> vector<80x16xf32>
    %c8 = arith.constant 8 : index
    %c0_45 = arith.constant 0 : index
    %94 = vector.load %arg2[%c8, %c0_45] : memref<480x128xf32, #tpu.memory_space<vmem>>, vector<1x16xf32>
    %95 = vector.broadcast %94 : vector<1x16xf32> to vector<80x16xf32>
    %96 = arith.addf %93, %95 : vector<80x16xf32>
    %97 = arith.addf %18, %96 : vector<80x16xf32>
    %c408 = arith.constant 408 : index
    %c0_46 = arith.constant 0 : index
    %98 = vector.load %arg2[%c408, %c0_46] : memref<480x128xf32, #tpu.memory_space<vmem>>, vector<4x16xf32>
    %99 = vector.extract_strided_slice %97 {offsets = [0, 0], sizes = [16, 16], strides = [1, 1]} : vector<80x16xf32> to vector<16x16xf32>
    %cst_47 = arith.constant dense<0.000000e+00> : vector<4x16xf32>
    %100 = tpu.matmul %98, %99, %cst_47 {dimension_numbers = #tpu.dot_dimension_numbers<[1], [0], [0], [1], [0, 0, 1, 1], [], []>} : vector<4x16xf32>, vector<16x16xf32>, vector<4x16xf32> -> vector<4x16xf32>
    %c112 = arith.constant 112 : index
    %c0_48 = arith.constant 0 : index
    %101 = vector.load %arg1[%c112, %c0_48] : memref<304x128xbf16, #tpu.memory_space<vmem>>, vector<48x32xbf16>
    %102 = vector.extract_strided_slice %100 {offsets = [0, 0], sizes = [2, 16], strides = [1, 1]} : vector<4x16xf32> to vector<2x16xf32>
    %103 = arith.truncf %102 : vector<2x16xf32> to vector<2x16xbf16>
    %104 = vector.extract_strided_slice %101 {offsets = [0, 0], sizes = [16, 32], strides = [1, 1]} : vector<48x32xbf16> to vector<16x32xbf16>
    %cst_49 = arith.constant dense<0.000000e+00> : vector<2x32xf32>
    %105 = tpu.matmul %103, %104, %cst_49 {dimension_numbers = #tpu.dot_dimension_numbers<[1], [0], [0], [1], [0, 0, 1, 1], [], []>} : vector<2x16xbf16>, vector<16x32xbf16>, vector<2x32xf32> -> vector<2x32xf32>
    %106 = vector.extract_strided_slice %100 {offsets = [2, 0], sizes = [2, 16], strides = [1, 1]} : vector<4x16xf32> to vector<2x16xf32>
    %107 = arith.truncf %106 : vector<2x16xf32> to vector<2x16xbf16>
    %108 = vector.extract_strided_slice %101 {offsets = [16, 0], sizes = [16, 32], strides = [1, 1]} : vector<48x32xbf16> to vector<16x32xbf16>
    %cst_50 = arith.constant dense<0.000000e+00> : vector<2x32xf32>
    %109 = tpu.matmul %107, %108, %cst_50 {dimension_numbers = #tpu.dot_dimension_numbers<[1], [0], [0], [1], [0, 0, 1, 1], [], []>} : vector<2x16xbf16>, vector<16x32xbf16>, vector<2x32xf32> -> vector<2x32xf32>
    %110 = arith.addf %105, %109 : vector<2x32xf32>
    %111 = arith.truncf %10 : vector<2x16xf32> to vector<2x16xbf16>
    %112 = vector.extract_strided_slice %101 {offsets = [32, 0], sizes = [16, 32], strides = [1, 1]} : vector<48x32xbf16> to vector<16x32xbf16>
    %cst_51 = arith.constant dense<0.000000e+00> : vector<2x32xf32>
    %113 = tpu.matmul %111, %112, %cst_51 {dimension_numbers = #tpu.dot_dimension_numbers<[1], [0], [0], [1], [0, 0, 1, 1], [], []>} : vector<2x16xbf16>, vector<16x32xbf16>, vector<2x32xf32> -> vector<2x32xf32>
    %114 = arith.addf %110, %113 : vector<2x32xf32>
    %c16 = arith.constant 16 : index
    %c0_52 = arith.constant 0 : index
    %115 = vector.load %arg2[%c16, %c0_52] : memref<480x128xf32, #tpu.memory_space<vmem>>, vector<1x32xf32>
    %116 = vector.broadcast %115 : vector<1x32xf32> to vector<2x32xf32>
    %117 = arith.addf %114, %116 : vector<2x32xf32>
    %cst_53 = arith.constant 0.000000e+00 : f32
    %118 = vector.broadcast %cst_53 : f32 to vector<2x32xf32>
    %119 = arith.maximumf %117, %118 : vector<2x32xf32>
    %120 = arith.truncf %119 : vector<2x32xf32> to vector<2x32xbf16>
    %c160 = arith.constant 160 : index
    %c0_54 = arith.constant 0 : index
    %121 = vector.load %arg1[%c160, %c0_54] : memref<304x128xbf16, #tpu.memory_space<vmem>>, vector<32x32xbf16>
    %cst_55 = arith.constant dense<0.000000e+00> : vector<2x32xf32>
    %122 = tpu.matmul %120, %121, %cst_55 {dimension_numbers = #tpu.dot_dimension_numbers<[1], [0], [0], [1], [0, 0, 1, 1], [], []>} : vector<2x32xbf16>, vector<32x32xbf16>, vector<2x32xf32> -> vector<2x32xf32>
    %c24 = arith.constant 24 : index
    %c0_56 = arith.constant 0 : index
    %123 = vector.load %arg2[%c24, %c0_56] : memref<480x128xf32, #tpu.memory_space<vmem>>, vector<1x32xf32>
    %124 = vector.broadcast %123 : vector<1x32xf32> to vector<2x32xf32>
    %125 = arith.addf %122, %124 : vector<2x32xf32>
    %126 = arith.truncf %125 : vector<2x32xf32> to vector<2x32xbf16>
    %c192_57 = arith.constant 192 : index
    %c0_58 = arith.constant 0 : index
    %127 = vector.load %arg1[%c192_57, %c0_58] : memref<304x128xbf16, #tpu.memory_space<vmem>>, vector<32x2xbf16>
    %cst_59 = arith.constant dense<0.000000e+00> : vector<2x2xf32>
    %128 = tpu.matmul %126, %127, %cst_59 {dimension_numbers = #tpu.dot_dimension_numbers<[1], [0], [0], [1], [0, 0, 1, 1], [], []>} : vector<2x32xbf16>, vector<32x2xbf16>, vector<2x2xf32> -> vector<2x2xf32>
    %c32 = arith.constant 32 : index
    %c0_60 = arith.constant 0 : index
    %129 = vector.load %arg2[%c32, %c0_60] : memref<480x128xf32, #tpu.memory_space<vmem>>, vector<1x2xf32>
    %130 = vector.broadcast %129 : vector<1x2xf32> to vector<2x2xf32>
    %131 = arith.addf %128, %130 : vector<2x2xf32>
    %cst_61 = arith.constant dense<0xFF800000> : vector<2xf32>
    %132 = vector.multi_reduction <maximumf>, %131, %cst_61 [1] : vector<2x2xf32> to vector<2xf32>
    %133 = vector.shape_cast %132 : vector<2xf32> to vector<2x1xf32>
    %134 = vector.broadcast %133 : vector<2x1xf32> to vector<2x2xf32>
    %135 = arith.subf %131, %134 : vector<2x2xf32>
    %136 = math.exp %135 : vector<2x2xf32>
    %cst_62 = arith.constant dense<0.000000e+00> : vector<2xf32>
    %137 = vector.multi_reduction <add>, %136, %cst_62 [1] : vector<2x2xf32> to vector<2xf32>
    %138 = vector.shape_cast %137 : vector<2xf32> to vector<2x1xf32>
    %139 = vector.broadcast %138 : vector<2x1xf32> to vector<2x2xf32>
    %140 = arith.divf %136, %139 : vector<2x2xf32>
    %c472 = arith.constant 472 : index
    %c0_63 = arith.constant 0 : index
    %141 = vector.load %arg2[%c472, %c0_63] : memref<480x128xf32, #tpu.memory_space<vmem>>, vector<2x24xf32>
    %142 = vector.extract_strided_slice %97 {offsets = [32, 0], sizes = [48, 16], strides = [1, 1]} : vector<80x16xf32> to vector<48x16xf32>
    %143 = arith.truncf %142 : vector<48x16xf32> to vector<48x16xbf16>
    %c224 = arith.constant 224 : index
    %c0_64 = arith.constant 0 : index
    %144 = vector.load %arg1[%c224, %c0_64] : memref<304x128xbf16, #tpu.memory_space<vmem>>, vector<16x2xbf16>
    %cst_65 = arith.constant dense<0.000000e+00> : vector<48x2xf32>
    %145 = tpu.matmul %143, %144, %cst_65 {dimension_numbers = #tpu.dot_dimension_numbers<[1], [0], [0], [1], [0, 0, 1, 1], [], []>} : vector<48x16xbf16>, vector<16x2xbf16>, vector<48x2xf32> -> vector<48x2xf32>
    %cst_66 = arith.constant dense<0.000000e+00> : vector<48x24xf32>
    %146 = tpu.matmul %145, %141, %cst_66 {dimension_numbers = #tpu.dot_dimension_numbers<[1], [0], [0], [1], [0, 0, 1, 1], [], []>} : vector<48x2xf32>, vector<2x24xf32>, vector<48x24xf32> -> vector<48x24xf32>
    %c416 = arith.constant 416 : index
    %c0_67 = arith.constant 0 : index
    %147 = vector.load %arg2[%c416, %c0_67] : memref<480x128xf32, #tpu.memory_space<vmem>>, vector<48x24xf32>
    %148 = arith.mulf %146, %147 : vector<48x24xf32>
    %c464 = arith.constant 464 : index
    %c0_68 = arith.constant 0 : index
    %149 = vector.load %arg2[%c464, %c0_68] : memref<480x128xf32, #tpu.memory_space<vmem>>, vector<2x48xf32>
    %cst_69 = arith.constant dense<0.000000e+00> : vector<2x24xf32>
    %150 = tpu.matmul %149, %148, %cst_69 {dimension_numbers = #tpu.dot_dimension_numbers<[1], [0], [0], [1], [0, 0, 1, 1], [], []>} : vector<2x48xf32>, vector<48x24xf32>, vector<2x24xf32> -> vector<2x24xf32>
    %151 = arith.truncf %125 : vector<2x32xf32> to vector<2x32xbf16>
    %c240 = arith.constant 240 : index
    %c0_70 = arith.constant 0 : index
    %152 = vector.load %arg1[%c240, %c0_70] : memref<304x128xbf16, #tpu.memory_space<vmem>>, vector<32x2xbf16>
    %cst_71 = arith.constant dense<0.000000e+00> : vector<2x2xf32>
    %153 = tpu.matmul %151, %152, %cst_71 {dimension_numbers = #tpu.dot_dimension_numbers<[1], [0], [0], [1], [0, 0, 1, 1], [], []>} : vector<2x32xbf16>, vector<32x2xbf16>, vector<2x2xf32> -> vector<2x2xf32>
    %c40 = arith.constant 40 : index
    %c0_72 = arith.constant 0 : index
    %154 = vector.load %arg2[%c40, %c0_72] : memref<480x128xf32, #tpu.memory_space<vmem>>, vector<1x2xf32>
    %155 = vector.broadcast %154 : vector<1x2xf32> to vector<2x2xf32>
    %156 = arith.addf %153, %155 : vector<2x2xf32>
    %157 = arith.truncf %125 : vector<2x32xf32> to vector<2x32xbf16>
    %c272_73 = arith.constant 272 : index
    %c0_74 = arith.constant 0 : index
    %158 = vector.load %arg1[%c272_73, %c0_74] : memref<304x128xbf16, #tpu.memory_space<vmem>>, vector<32x4xbf16>
    %cst_75 = arith.constant dense<0.000000e+00> : vector<2x4xf32>
    %159 = tpu.matmul %157, %158, %cst_75 {dimension_numbers = #tpu.dot_dimension_numbers<[1], [0], [0], [1], [0, 0, 1, 1], [], []>} : vector<2x32xbf16>, vector<32x4xbf16>, vector<2x4xf32> -> vector<2x4xf32>
    %c48_76 = arith.constant 48 : index
    %c0_77 = arith.constant 0 : index
    %160 = vector.load %arg2[%c48_76, %c0_77] : memref<480x128xf32, #tpu.memory_space<vmem>>, vector<1x4xf32>
    %161 = vector.broadcast %160 : vector<1x4xf32> to vector<2x4xf32>
    %162 = arith.addf %159, %161 : vector<2x4xf32>
    %cst_78 = arith.constant dense<0.000000e+00> : vector<2x24xf32>
    %163 = tpu.matmul %156, %141, %cst_78 {dimension_numbers = #tpu.dot_dimension_numbers<[1], [0], [0], [1], [0, 0, 1, 1], [], []>} : vector<2x2xf32>, vector<2x24xf32>, vector<2x24xf32> -> vector<2x24xf32>
    %164 = arith.addf %150, %163 : vector<2x24xf32>
    %165 = tpu.concatenate %162, %164 in 1 : vector<2x4xf32>, vector<2x24xf32> -> vector<2x28xf32>
    %c50 = arith.constant 50 : index
    %c0_79 = arith.constant 0 : index
    %166 = vector.load %arg0[%c50, %c0_79] : memref<56x128xf32, #tpu.memory_space<vmem>>, vector<2x28xf32>
    %cst_80 = arith.constant 0.000000e+00 : f32
    %167 = vector.broadcast %cst_80 : f32 to vector<2x28xf32>
    %168 = arith.cmpf one, %166, %167 : vector<2x28xf32>
    %cst_81 = arith.constant -1.000000e+10 : f32
    %169 = vector.broadcast %cst_81 : f32 to vector<2x28xf32>
    %170 = arith.select %168, %165, %169 : vector<2x28xi1>, vector<2x28xf32>
    %cst_82 = arith.constant 0.000000e+00 : f32
    %171 = vector.broadcast %cst_82 : f32 to vector<2x2xf32>
    %cst_83 = arith.constant 0.000000e+00 : f32
    %172 = vector.broadcast %cst_83 : f32 to vector<2x96xf32>
    %173 = tpu.concatenate %140, %171, %170, %172 in 1 : vector<2x2xf32>, vector<2x2xf32>, vector<2x28xf32>, vector<2x96xf32> -> vector<2x128xf32>
    %cst_84 = arith.constant 0.000000e+00 : f32
    %174 = vector.broadcast %cst_84 : f32 to vector<6x128xf32>
    %175 = tpu.concatenate %173, %174 in 0 : vector<2x128xf32>, vector<6x128xf32> -> vector<8x128xf32>
    %c0_85 = arith.constant 0 : index
    %c0_86 = arith.constant 0 : index
    %176 = vector.load %arg3[%c0_85, %c0_86] : memref<8x128xf32, #tpu.memory_space<vmem>>, vector<8x128xf32>
    tpu.vector_store %arg3[%c0_85, %c0_86], %175 {strides = array<i32>} : memref<8x128xf32, #tpu.memory_space<vmem>>, vector<8x128xf32>,
    return
  }
}

</mosaic_0001>

<llo_original>
// kernel: equivariant_skynet_forward.1
$region0: #{equivariant_skynet_forward.1}
  #allocation0 [shape = 'u32[]', space=smem, size = 0x4, offset = 0x4, fixed_abs, tag = 'smem constant byte address 0x4 - core index']
  #allocation1 [shape = 'u32[144,128]{1,0:T(1,128)}', space=vmem, size = 0x12000, scoped, tag = 'internal scratch']
  %s0 = inlined_call_operand.vmem [shape: f32[56,128], index: 0, kind: input, shape index: {}]
  %s1 = inlined_call_operand.hbm [shape: bf16[304,128], index: 1, kind: input, shape index: {}]
  %s2 = inlined_call_operand.hbm [shape: f32[480,128], index: 2, kind: input, shape index: {}]
  %s3 = inlined_call_operand.vmem [shape: f32[8,128], index: 3, kind: output, shape index: {}]
  %s4 = sld [smem:[#allocation0]]
  $region30: #{equivariant_skynet_forward.1} parent=0
    _
  %s6 = ssub.s32 1, %s4
  %s7 = scalar_select 0, %s6, %s4
  $region1: #{equivariant_skynet_forward.1} parent=0
    #allocation2 [shape = 'u8[77824]{0}', space=vmem, size = 0x13000, scoped, tag = 'input window, operand 1, single buffered']
    #allocation3 [shape = 's32[1]{0}', space=sflag, size = 0x4, scoped, tag = 'scoped memory for equivariant_skynet_forward.1']
    #allocation4 [shape = 'u8[245760]{0}', space=vmem, size = 0x3c000, scoped, tag = 'input window, operand 2, single buffered']
    #allocation5 [shape = 's32[1]{0}', space=sflag, size = 0x4, scoped, tag = 'scoped memory for equivariant_skynet_forward.1']
    %8 = vsyncpa [#allocation3], 0
    %9 = vsyncpa [#allocation5], 0
    // Predicated region
    $region2: #{equivariant_skynet_forward.1} parent=1 // pred_check
      _
    $region3: #{equivariant_skynet_forward.1} parent=1 // pred_check_branch
      %11 = sbr.rel (0) target = $region5
    $region4: #{equivariant_skynet_forward.1} parent=1 // pred_region
      _
    $region5: #{equivariant_skynet_forward.1} parent=1 // pred_fallthru
      _
    // Predicated region
    $region6: #{equivariant_skynet_forward.1} parent=1 // pred_check
      _
    $region7: #{equivariant_skynet_forward.1} parent=1 // pred_check_branch
      %13 = sbr.rel (0) target = $region9
    $region8: #{equivariant_skynet_forward.1} parent=1 // pred_region
      %s15 = ssub.s32 2432, 2432
      %16 = vsyncadd [#allocation3], %s15
      %s17 = sshll.u32 [#allocation2], 4
      %s18 = int_to_ptr.vmem [resolvable:$true] %s17
      %23 = dma.hbm_to_vmem [thread:$0]  %s1, 2432, %s18, [#allocation3], 64, 64, 4
    $region9: #{equivariant_skynet_forward.1} parent=1 // pred_fallthru
      _
    // Predicated region
    $region10: #{equivariant_skynet_forward.1} parent=1 // pred_check
      _
    $region11: #{equivariant_skynet_forward.1} parent=1 // pred_check_branch
      %25 = sbr.rel (0) target = $region13
    $region12: #{equivariant_skynet_forward.1} parent=1 // pred_region
      %s27 = ssub.s32 7680, 7680
      %28 = vsyncadd [#allocation5], %s27
      %s29 = sshll.u32 [#allocation4], 4
      %s30 = int_to_ptr.vmem [resolvable:$true] %s29
      %35 = dma.hbm_to_vmem [thread:$0]  %s2, 7680, %s30, [#allocation5], 128, 128, 8
    $region13: #{equivariant_skynet_forward.1} parent=1 // pred_fallthru
      _
    // Predicated region
    $region14: #{equivariant_skynet_forward.1} parent=1 // pred_check
      _
    $region15: #{equivariant_skynet_forward.1} parent=1 // pred_check_branch
      %37 = sbr.rel (0) target = $region17
    $region16: #{equivariant_skynet_forward.1} parent=1 // pred_region
      %38 = dma.done [#allocation3], 2432
    $region17: #{equivariant_skynet_forward.1} parent=1 // pred_fallthru
      _
    // Predicated region
    $region18: #{equivariant_skynet_forward.1} parent=1 // pred_check
      _
    $region19: #{equivariant_skynet_forward.1} parent=1 // pred_check_branch
      %40 = sbr.rel (0) target = $region21
    $region20: #{equivariant_skynet_forward.1} parent=1 // pred_region
      %41 = dma.done [#allocation5], 7680
    $region21: #{equivariant_skynet_forward.1} parent=1 // pred_fallthru
      _
    %v43 = vld [vmem:[%s0] sm:$0xff]
    %v44 = vld [vmem:[%s0 + $0x8] sm:$0xff]
    %v45 = vld [vmem:[%s0 + $0x10] sm:$0xff]
    %v46 = vld [vmem:[%s0 + $0x18] sm:$0xff]
    %v47 = vld [vmem:[%s0 + $0x20] sm:$0xff]
    %v48 = vld [vmem:[%s0 + $0x28] sm:$0xff]
    %v49 = vpack.c.bf16 %v44, %v43
    %v50 = vpack.c.bf16 %v46, %v45
    %v51 = vpack.c.bf16 %v48, %v47
    %v52 = vld [vmem:[#allocation2] sm:$0xf]
    %v53 = vld [vmem:[#allocation2 + $0x4] sm:$0xf]
    %v54 = vld [vmem:[#allocation2 + $0x8] sm:$0xf]
    %v55 = vld [vmem:[#allocation2 + $0xc] sm:$0xf]
    %v56 = vld [vmem:[#allocation2 + $0x10] sm:$0xf]
    %v57 = vld [vmem:[#allocation2 + $0x14] sm:$0xf]
    %v64 = vunpack.c.l.b16 %v52
    %v65 = vunpack.c.l.b16 %v53
    %v66 = vunpack.c.l.b16 %v54
    %v67 = vunpack.c.l.b16 %v55
    %v68 = vunpack.c.l.b16 %v56
    %v69 = vunpack.c.l.b16 %v57
    %v70 = vpack.c.b16 %v65, %v64
    %v71 = vpack.c.b16 %v67, %v66
    %v72 = vpack.c.b16 %v69, %v68
    %vm73 = vcmask 392192
    %v75 = vsel %vm73, %v70, 0
    %v78 = vsel %vm73, %v71, 0
    %v81 = vsel %vm73, %v72, 0
    %83 = vmatprep.subr.bf16.mxu0 0
    %84 = vmatpush1.bf16.msra.mxu0 0
    %85 = vmatprep.subr.bf16.mxu0 0
    %86 = vmatpush1.bf16.msra.mxu0 0
    %87 = vmatprep.subr.bf16.mxu0 0
    %88 = vmatpush1.bf16.msra.mxu0 0
    %89 = vmatprep.subr.bf16.mxu0 0
    %90 = vmatpush1.bf16.msra.mxu0 0
    %91 = vmatprep.subr.bf16.mxu0 0
    %92 = vmatpush1.bf16.msra.mxu0 0
    %93 = vmatprep.subr.bf16.mxu0 0
    %94 = vmatpush1.bf16.msra.mxu0 %v51
    %95 = vmatprep.subr.bf16.mxu0 0
    %96 = vmatpush1.bf16.msra.mxu0 %v50
    %97 = vmatprep.subr.bf16.mxu0 0
    %98 = vmatpush1.bf16.msra.mxu0 %v49
    %99 = vmatprep.subr.bf16.mxu0 0
    %100 = vmatpush2.bf16.msra.mxu0 0
    %101 = vmatprep.subr.bf16.mxu0 0
    %102 = vmatpush2.bf16.msra.mxu0 0
    %103 = vmatprep.subr.bf16.mxu0 0
    %104 = vmatpush2.bf16.msra.mxu0 0
    %105 = vmatprep.subr.bf16.mxu0 0
    %106 = vmatpush2.bf16.msra.mxu0 0
    %107 = vmatprep.subr.bf16.mxu0 0
    %108 = vmatpush2.bf16.msra.mxu0 0
    %109 = vmatprep.subr.bf16.mxu0 0
    %110 = vmatpush2.bf16.msra.mxu0 0
    %111 = vmatprep.subr.bf16.mxu0 0
    %112 = vmatpush2.bf16.msra.mxu0 0
    %113 = vmatprep.subr.bf16.mxu0 0
    %114 = vmatpush2.bf16.msra.mxu0 0
    %115 = vmatprep.mubr.bf16.mxu0 0
    %116 = vmatmul.mubr.bf16.gmra.mxu0 %v75
    %v117 = vpop.f32.mrf.mxu0
    %v118 = vadd.f32 0.0, %v117
    %v119 = vpop.f32.mrf.mxu0
    %v120 = vpop.f32.mrf.mxu0
    %v121 = vadd.f32 0.0, %v120
    %v122 = vpop.f32.mrf.mxu0
    %123 = vmatprep.mubr.bf16.mxu0 0
    %124 = vmatmul.mubr.bf16.gmra.mxu0 %v78
    %v125 = vpop.f32.mrf.mxu0
    %v126 = vadd.f32 0.0, %v125
    %v127 = vpop.f32.mrf.mxu0
    %v128 = vpop.f32.mrf.mxu0
    %v129 = vadd.f32 0.0, %v128
    %v130 = vpop.f32.mrf.mxu0
    %131 = vmatprep.mubr.bf16.mxu0 0
    %132 = vmatmul.mubr.bf16.gmra.mxu0 %v81
    %v133 = vpop.f32.mrf.mxu0
    %v134 = vadd.f32 0.0, %v133
    %v135 = vpop.f32.mrf.mxu0
    %v136 = vpop.f32.mrf.mxu0
    %v137 = vadd.f32 0.0, %v136
    %v138 = vpop.f32.mrf.mxu0
    %139 = vdwg.mxu0
    %v140 = vpack.c.bf16 %v121, %v118
    %v141 = vpack.c.bf16 %v129, %v126
    %v142 = vpack.c.bf16 %v137, %v134
    %v143 = vld [vmem:[#allocation2 + $0x18] sm:$0xf]
    %v144 = vld [vmem:[#allocation2 + $0x1c] sm:$0xf]
    %v147 = vunpack.c.l.b16 %v143
    %v148 = vunpack.c.l.b16 %v144
    %v149 = vpack.c.b16 %v148, %v147
    %vm151 = vcmask 130048
    %v153 = vsel %vm151, %v140, 0
    %v156 = vsel %vm151, %v141, 0
    %v159 = vsel %vm151, %v142, 0
    %161 = vmatprep.subr.bf16.mxu0 0
    %162 = vmatpush1.bf16.msra.mxu0 0
    %163 = vmatprep.subr.bf16.mxu0 0
    %164 = vmatpush1.bf16.msra.mxu0 0
    %165 = vmatprep.subr.bf16.mxu0 0
    %166 = vmatpush1.bf16.msra.mxu0 0
    %167 = vmatprep.subr.bf16.mxu0 0
    %168 = vmatpush1.bf16.msra.mxu0 0
    %169 = vmatprep.subr.bf16.mxu0 0
    %170 = vmatpush1.bf16.msra.mxu0 0
    %171 = vmatprep.subr.bf16.mxu0 0
    %172 = vmatpush1.bf16.msra.mxu0 0
    %173 = vmatprep.subr.bf16.mxu0 0
    %174 = vmatpush1.bf16.msra.mxu0 0
    %175 = vmatprep.subr.bf16.mxu0 0
    %176 = vmatpush1.bf16.msra.mxu0 %v149
    %177 = vmatprep.subr.bf16.mxu0 0
    %178 = vmatpush2.bf16.msra.mxu0 0
    %179 = vmatprep.subr.bf16.mxu0 0
    %180 = vmatpush2.bf16.msra.mxu0 0
    %181 = vmatprep.subr.bf16.mxu0 0
    %182 = vmatpush2.bf16.msra.mxu0 0
    %183 = vmatprep.subr.bf16.mxu0 0
    %184 = vmatpush2.bf16.msra.mxu0 0
    %185 = vmatprep.subr.bf16.mxu0 0
    %186 = vmatpush2.bf16.msra.mxu0 0
    %187 = vmatprep.subr.bf16.mxu0 0
    %188 = vmatpush2.bf16.msra.mxu0 0
    %189 = vmatprep.subr.bf16.mxu0 0
    %190 = vmatpush2.bf16.msra.mxu0 0
    %191 = vmatprep.subr.bf16.mxu0 0
    %192 = vmatpush2.bf16.msra.mxu0 0
    %193 = vmatprep.mubr.bf16.mxu0 0
    %194 = vmatmul.mubr.bf16.gmra.mxu0 %v153
    %v195 = vpop.f32.mrf.mxu0
    %v196 = vadd.f32 0.0, %v195
    %v197 = vpop.f32.mrf.mxu0
    %v198 = vpop.f32.mrf.mxu0
    %v199 = vadd.f32 0.0, %v198
    %v200 = vpop.f32.mrf.mxu0
    %201 = vmatprep.mubr.bf16.mxu0 0
    %202 = vmatmul.mubr.bf16.gmra.mxu0 %v156
    %v203 = vpop.f32.mrf.mxu0
    %v204 = vadd.f32 0.0, %v203
    %v205 = vpop.f32.mrf.mxu0
    %v206 = vpop.f32.mrf.mxu0
    %v207 = vadd.f32 0.0, %v206
    %v208 = vpop.f32.mrf.mxu0
    %209 = vmatprep.mubr.bf16.mxu0 0
    %210 = vmatmul.mubr.bf16.gmra.mxu0 %v159
    %v211 = vpop.f32.mrf.mxu0
    %v212 = vadd.f32 0.0, %v211
    %v213 = vpop.f32.mrf.mxu0
    %v214 = vpop.f32.mrf.mxu0
    %v215 = vadd.f32 0.0, %v214
    %v216 = vpop.f32.mrf.mxu0
    %217 = vdwg.mxu0
    %v218 = vld [vmem:[%s0 + $0x30] sm:$0x3]
    %v219 = vpack.c.bf16 %v218, %v218
    %v220 = vld [vmem:[#allocation2 + $0x20] sm:$0xf]
    %vm221 = vcmask 64512
    %v223 = vsel %vm221, %v219, 0
    %vm225 = vcmask 1043456
    %v227 = vsel %vm225, %v220, 0
    %229 = vmatprep.subr.bf16.mxu0 0
    %230 = vmatpush1.bf16.msra.mxu0 0
    %231 = vmatprep.subr.bf16.mxu0 0
    %232 = vmatpush1.bf16.msra.mxu0 0
    %233 = vmatprep.subr.bf16.mxu0 0
    %234 = vmatpush1.bf16.msra.mxu0 0
    %235 = vmatprep.subr.bf16.mxu0 0
    %236 = vmatpush1.bf16.msra.mxu0 0
    %237 = vmatprep.subr.bf16.mxu0 0
    %238 = vmatpush1.bf16.msra.mxu0 0
    %239 = vmatprep.subr.bf16.mxu0 0
    %240 = vmatpush1.bf16.msra.mxu0 0
    %241 = vmatprep.subr.bf16.mxu0 0
    %242 = vmatpush1.bf16.msra.mxu0 0
    %243 = vmatprep.subr.bf16.mxu0 0
    %244 = vmatpush1.bf16.msra.mxu0 %v227
    %245 = vmatprep.subr.bf16.mxu0 0
    %246 = vmatpush2.bf16.msra.mxu0 0
    %247 = vmatprep.subr.bf16.mxu0 0
    %248 = vmatpush2.bf16.msra.mxu0 0
    %249 = vmatprep.subr.bf16.mxu0 0
    %250 = vmatpush2.bf16.msra.mxu0 0
    %251 = vmatprep.subr.bf16.mxu0 0
    %252 = vmatpush2.bf16.msra.mxu0 0
    %253 = vmatprep.subr.bf16.mxu0 0
    %254 = vmatpush2.bf16.msra.mxu0 0
    %255 = vmatprep.subr.bf16.mxu0 0
    %256 = vmatpush2.bf16.msra.mxu0 0
    %257 = vmatprep.subr.bf16.mxu0 0
    %258 = vmatpush2.bf16.msra.mxu0 0
    %259 = vmatprep.subr.bf16.mxu0 0
    %260 = vmatpush2.bf16.msra.mxu0 0
    %261 = vmatprep.mubr.bf16.mxu0 0
    %262 = vmatmul.mubr.bf16.gmra.mxu0 %v223
    %v263 = vpop.f32.mrf.mxu0
    %v264 = vadd.f32 0.0, %v263
    %v265 = vpop.f32.mrf.mxu0
    %v266 = vpop.f32.mrf.mxu0
    %v267 = vpop.f32.mrf.mxu0
    %268 = vdwg.mxu0
    %v269 = vld [vmem:[#allocation4 + $0x48] sm:$0x1]
    %v270 = vlaneseq
    %v271 = vshrl.u32 %v270, 7
    %v272 = vsub.s32 0, %v271
    %v273 = vrot.slane %v269, %v272
    %v276 = vunpack.c.l.s4 1966171168
    %v277 = vunpack.c.0.s8 %v276
    %v278 = vlaneseq
    %v279 = vshrl.u32 %v278, 7
    %v280 = vsub.s32 %v277, %v279
    %v281 = vrot.slane %v264, %v280
    %v282 = vcombine.high %v281, %v281
    %v284 = vunpack.c.l.s4 1966171168
    %v285 = vunpack.c.0.s8 %v284
    %v286 = vlaneseq
    %v287 = vshrl.u32 %v286, 7
    %v288 = vsub.s32 %v285, %v287
    %v289 = vrot.slane %v281, %v288
    %v291 = vunpack.c.l.s4 1966171168
    %v292 = vunpack.c.0.s8 %v291
    %v293 = vlaneseq
    %v294 = vshrl.u32 %v293, 7
    %v295 = vsub.s32 %v292, %v294
    %v296 = vrot.slane %v282, %v295
    %v297 = vlaneseq
    %v298 = vshrl.u32 %v297, 7
    %v299 = vsub.s32 0, %v298
    %v300 = vrot.slane %v289, %v299
    %v301 = vlaneseq
    %v302 = vshrl.u32 %v301, 7
    %v303 = vsub.s32 0, %v302
    %v304 = vrot.slane %v296, %v303
    %v307 = vsel %vm151, %v273, 0.0
    %308 = vadd.xlane.f32.xlu0 %v307
    %v309 = vpop.xlane.xlu0 %308
    %v310 = vsel %vm151, %v300, 0.0
    %311 = vadd.xlane.f32.xlu0 %v310
    %v312 = vpop.xlane.xlu0 %311
    %v313 = vsel %vm151, %v304, 0.0
    %314 = vadd.xlane.f32.xlu0 %v313
    %v315 = vpop.xlane.xlu0 %314
    %v316 = vsel %vm151, %v196, 0.0
    %317 = vadd.xlane.f32.xlu0 %v316
    %v318 = vpop.xlane.xlu0 %317
    %v319 = vsel %vm151, %v199, 0.0
    %320 = vadd.xlane.f32.xlu0 %v319
    %v321 = vpop.xlane.xlu0 %320
    %v322 = vsel %vm151, %v204, 0.0
    %323 = vadd.xlane.f32.xlu0 %v322
    %v324 = vpop.xlane.xlu0 %323
    %v325 = vsel %vm151, %v207, 0.0
    %326 = vadd.xlane.f32.xlu0 %v325
    %v327 = vpop.xlane.xlu0 %326
    %v328 = vsel %vm151, %v212, 0.0
    %329 = vadd.xlane.f32.xlu0 %v328
    %v330 = vpop.xlane.xlu0 %329
    %v331 = vsel %vm151, %v215, 0.0
    %332 = vadd.xlane.f32.xlu0 %v331
    %v333 = vpop.xlane.xlu0 %332
    %v334 = vrcp.pop 16.0
    %v335 = vmul.f32 %v309, %v334
    %v336 = vmul.f32 %v312, %v334
    %v337 = vmul.f32 %v315, %v334
    %v338 = vmul.f32 %v318, %v334
    %v339 = vmul.f32 %v321, %v334
    %v340 = vmul.f32 %v324, %v334
    %v341 = vmul.f32 %v327, %v334
    %v342 = vmul.f32 %v330, %v334
    %v343 = vmul.f32 %v333, %v334
    %v344 = vsub.f32 %v273, %v335
    %v345 = vsub.f32 %v300, %v336
    %v346 = vsub.f32 %v304, %v337
    %v347 = vsub.f32 %v196, %v338
    %v348 = vsub.f32 %v199, %v339
    %v349 = vsub.f32 %v204, %v340
    %v350 = vsub.f32 %v207, %v341
    %v351 = vsub.f32 %v212, %v342
    %v352 = vsub.f32 %v215, %v343
    %v353 = vmul.f32 %v344, %v344
    %v354 = vmul.f32 %v345, %v345
    %v355 = vmul.f32 %v346, %v346
    %v356 = vmul.f32 %v347, %v347
    %v357 = vmul.f32 %v348, %v348
    %v358 = vmul.f32 %v349, %v349
    %v359 = vmul.f32 %v350, %v350
    %v360 = vmul.f32 %v351, %v351
    %v361 = vmul.f32 %v352, %v352
    %v362 = vsel %vm151, %v353, 0.0
    %363 = vadd.xlane.f32.xlu0 %v362
    %v364 = vpop.xlane.xlu0 %363
    %v365 = vsel %vm151, %v354, 0.0
    %366 = vadd.xlane.f32.xlu0 %v365
    %v367 = vpop.xlane.xlu0 %366
    %v368 = vsel %vm151, %v355, 0.0
    %369 = vadd.xlane.f32.xlu0 %v368
    %v370 = vpop.xlane.xlu0 %369
    %v371 = vsel %vm151, %v356, 0.0
    %372 = vadd.xlane.f32.xlu0 %v371
    %v373 = vpop.xlane.xlu0 %372
    %v374 = vsel %vm151, %v357, 0.0
    %375 = vadd.xlane.f32.xlu0 %v374
    %v376 = vpop.xlane.xlu0 %375
    %v377 = vsel %vm151, %v358, 0.0
    %378 = vadd.xlane.f32.xlu0 %v377
    %v379 = vpop.xlane.xlu0 %378
    %v380 = vsel %vm151, %v359, 0.0
    %381 = vadd.xlane.f32.xlu0 %v380
    %v382 = vpop.xlane.xlu0 %381
    %v383 = vsel %vm151, %v360, 0.0
    %384 = vadd.xlane.f32.xlu0 %v383
    %v385 = vpop.xlane.xlu0 %384
    %v386 = vsel %vm151, %v361, 0.0
    %387 = vadd.xlane.f32.xlu0 %v386
    %v388 = vpop.xlane.xlu0 %387
    %v389 = vmul.f32 %v364, %v334
    %v390 = vmul.f32 %v367, %v334
    %v391 = vmul.f32 %v370, %v334
    %v392 = vmul.f32 %v373, %v334
    %v393 = vmul.f32 %v376, %v334
    %v394 = vmul.f32 %v379, %v334
    %v395 = vmul.f32 %v382, %v334
    %v396 = vmul.f32 %v385, %v334
    %v397 = vmul.f32 %v388, %v334
    %v398 = vadd.f32 %v389, 1e-05
    %v399 = vadd.f32 %v390, 1e-05
    %v400 = vadd.f32 %v391, 1e-05
    %v401 = vadd.f32 %v392, 1e-05
    %v402 = vadd.f32 %v393, 1e-05
    %v403 = vadd.f32 %v394, 1e-05
    %v404 = vadd.f32 %v395, 1e-05
    %v405 = vadd.f32 %v396, 1e-05
    %v406 = vadd.f32 %v397, 1e-05
    %v407 = vrsqrt.pop %v398
    %v408 = vrsqrt.pop %v399
    %v409 = vrsqrt.pop %v400
    %v410 = vrsqrt.pop %v401
    %v411 = vrsqrt.pop %v402
    %v412 = vrsqrt.pop %v403
    %v413 = vrsqrt.pop %v404
    %v414 = vrsqrt.pop %v405
    %v415 = vrsqrt.pop %v406
    %v416 = vmul.f32 %v344, %v407
    %v417 = vmul.f32 %v345, %v408
    %v418 = vmul.f32 %v346, %v409
    %v419 = vmul.f32 %v347, %v410
    %v420 = vmul.f32 %v348, %v411
    %v421 = vmul.f32 %v349, %v412
    %v422 = vmul.f32 %v350, %v413
    %v423 = vmul.f32 %v351, %v414
    %v424 = vmul.f32 %v352, %v415
    %v425 = vld [vmem:[#allocation4 + $0x38] sm:$0x1]
    %v426 = vlaneseq
    %v427 = vshrl.u32 %v426, 7
    %v428 = vsub.s32 0, %v427
    %v429 = vrot.slane %v425, %v428
    %v430 = vmul.f32 %v416, %v429
    %v431 = vmul.f32 %v417, %v429
    %v432 = vmul.f32 %v418, %v429
    %v433 = vmul.f32 %v419, %v429
    %v434 = vmul.f32 %v420, %v429
    %v435 = vmul.f32 %v421, %v429
    %v436 = vmul.f32 %v422, %v429
    %v437 = vmul.f32 %v423, %v429
    %v438 = vmul.f32 %v424, %v429
    %v439 = vld [vmem:[#allocation4 + $0x40] sm:$0x1]
    %v440 = vlaneseq
    %v441 = vshrl.u32 %v440, 7
    %v442 = vsub.s32 0, %v441
    %v443 = vrot.slane %v439, %v442
    %v444 = vadd.f32 %v430, %v443
    %v445 = vadd.f32 %v431, %v443
    %v446 = vadd.f32 %v432, %v443
    %v447 = vadd.f32 %v433, %v443
    %v448 = vadd.f32 %v434, %v443
    %v449 = vadd.f32 %v435, %v443
    %v450 = vadd.f32 %v436, %v443
    %v451 = vadd.f32 %v437, %v443
    %v452 = vadd.f32 %v438, %v443
    %v453 = vpack.c.bf16 %v444, %v444
    %v454 = vpack.c.bf16 %v446, %v445
    %v455 = vpack.c.bf16 %v448, %v447
    %v456 = vpack.c.bf16 %v450, %v449
    %v457 = vpack.c.bf16 %v452, %v451
    %v458 = vld [vmem:[#allocation2 + $0x28] sm:$0xf]
    %v459 = vld [vmem:[#allocation2 + $0x2c] sm:$0xf]
    %v460 = vld [vmem:[#allocation4] sm:$0x1]
    %v461 = vlaneseq
    %v462 = vshrl.u32 %v461, 7
    %v463 = vsub.s32 0, %v462
    %v464 = vrot.slane %v460, %v463
    %v467 = vunpack.c.l.b16 %v458
    %v468 = vunpack.c.l.b16 %v459
    %v469 = vpack.c.b16 %v468, %v467
    %v472 = vsel %vm151, %v453, 0
    %v475 = vsel %vm151, %v454, 0
    %v478 = vsel %vm151, %v455, 0
    %v481 = vsel %vm151, %v456, 0
    %v484 = vsel %vm151, %v457, 0
    %486 = vmatprep.subr.bf16.mxu0 0
    %487 = vmatpush1.bf16.msra.mxu0 0
    %488 = vmatprep.subr.bf16.mxu0 0
    %489 = vmatpush1.bf16.msra.mxu0 0
    %490 = vmatprep.subr.bf16.mxu0 0
    %491 = vmatpush1.bf16.msra.mxu0 0
    %492 = vmatprep.subr.bf16.mxu0 0
    %493 = vmatpush1.bf16.msra.mxu0 0
    %494 = vmatprep.subr.bf16.mxu0 0
    %495 = vmatpush1.bf16.msra.mxu0 0
    %496 = vmatprep.subr.bf16.mxu0 0
    %497 = vmatpush1.bf16.msra.mxu0 0
    %498 = vmatprep.subr.bf16.mxu0 0
    %499 = vmatpush1.bf16.msra.mxu0 0
    %500 = vmatprep.subr.bf16.mxu0 0
    %501 = vmatpush1.bf16.msra.mxu0 %v469
    %502 = vmatprep.subr.bf16.mxu0 0
    %503 = vmatpush2.bf16.msra.mxu0 0
    %504 = vmatprep.subr.bf16.mxu0 0
    %505 = vmatpush2.bf16.msra.mxu0 0
    %506 = vmatprep.subr.bf16.mxu0 0
    %507 = vmatpush2.bf16.msra.mxu0 0
    %508 = vmatprep.subr.bf16.mxu0 0
    %509 = vmatpush2.bf16.msra.mxu0 0
    %510 = vmatprep.subr.bf16.mxu0 0
    %511 = vmatpush2.bf16.msra.mxu0 0
    %512 = vmatprep.subr.bf16.mxu0 0
    %513 = vmatpush2.bf16.msra.mxu0 0
    %514 = vmatprep.subr.bf16.mxu0 0
    %515 = vmatpush2.bf16.msra.mxu0 0
    %516 = vmatprep.subr.bf16.mxu0 0
    %517 = vmatpush2.bf16.msra.mxu0 0
    %518 = vmatprep.mubr.bf16.mxu0 0
    %519 = vmatmul.mubr.bf16.gmra.mxu0 %v472
    %v520 = vpop.f32.mrf.mxu0
    %v521 = vadd.f32 %v464, %v520
    %v522 = vpop.f32.mrf.mxu0
    %v523 = vpop.f32.mrf.mxu0
    %v524 = vadd.f32 %v464, %v523
    %v525 = vpop.f32.mrf.mxu0
    %526 = vmatprep.mubr.bf16.mxu0 0
    %527 = vmatmul.mubr.bf16.gmra.mxu0 %v475
    %v528 = vpop.f32.mrf.mxu0
    %v529 = vadd.f32 %v464, %v528
    %v530 = vpop.f32.mrf.mxu0
    %v531 = vpop.f32.mrf.mxu0
    %v532 = vadd.f32 %v464, %v531
    %v533 = vpop.f32.mrf.mxu0
    %534 = vmatprep.mubr.bf16.mxu0 0
    %535 = vmatmul.mubr.bf16.gmra.mxu0 %v478
    %v536 = vpop.f32.mrf.mxu0
    %v537 = vadd.f32 %v464, %v536
    %v538 = vpop.f32.mrf.mxu0
    %v539 = vpop.f32.mrf.mxu0
    %v540 = vadd.f32 %v464, %v539
    %v541 = vpop.f32.mrf.mxu0
    %542 = vmatprep.mubr.bf16.mxu0 0
    %543 = vmatmul.mubr.bf16.gmra.mxu0 %v481
    %v544 = vpop.f32.mrf.mxu0
    %v545 = vadd.f32 %v464, %v544
    %v546 = vpop.f32.mrf.mxu0
    %v547 = vpop.f32.mrf.mxu0
    %v548 = vadd.f32 %v464, %v547
    %v549 = vpop.f32.mrf.mxu0
    %550 = vmatprep.mubr.bf16.mxu0 0
    %551 = vmatmul.mubr.bf16.gmra.mxu0 %v484
    %v552 = vpop.f32.mrf.mxu0
    %v553 = vadd.f32 %v464, %v552
    %v554 = vpop.f32.mrf.mxu0
    %v555 = vpop.f32.mrf.mxu0
    %v556 = vadd.f32 %v464, %v555
    %v557 = vpop.f32.mrf.mxu0
    %558 = vdwg.mxu0
    %v559 = vld [vmem:[#allocation4 + $0x50] sm:$0xff]
    %v560 = vld [vmem:[#allocation4 + $0x58] sm:$0xff]
    %v561 = vld [vmem:[#allocation4 + $0x60] sm:$0xff]
    %v562 = vld [vmem:[#allocation4 + $0x68] sm:$0xff]
    %v563 = vld [vmem:[#allocation4 + $0x70] sm:$0xff]
    %v564 = vld [vmem:[#allocation4 + $0x78] sm:$0xff]
    %v565 = vld [vmem:[#allocation4 + $0x80] sm:$0xff]
    %v566 = vld [vmem:[#allocation4 + $0x88] sm:$0xff]
    %v567 = vld [vmem:[#allocation4 + $0x90] sm:$0xff]
    %v568 = vld [vmem:[#allocation4 + $0x98] sm:$0xff]
    %v569 = vld [vmem:[#allocation4 + $0xa0] sm:$0xff]
    %v570 = vld [vmem:[#allocation4 + $0xa8] sm:$0xff]
    %v571 = vld [vmem:[#allocation4 + $0xb0] sm:$0xff]
    %v572 = vld [vmem:[#allocation4 + $0xb8] sm:$0xff]
    %v574 = vsel %vm151, %v521, 0
    %v577 = vsel %vm151, %v524, 0
    %v580 = vsel %vm151, %v529, 0
    %v583 = vsel %vm151, %v532, 0
    %v586 = vsel %vm151, %v537, 0
    %v589 = vsel %vm151, %v540, 0
    %v592 = vsel %vm151, %v545, 0
    %v595 = vsel %vm151, %v548, 0
    %v598 = vsel %vm151, %v553, 0
    %v601 = vsel %vm151, %v556, 0
    %603 = vmatprep.subr.mxu0 0.0
    %604 = vmatpush1.msra.mxu0 0.0
    %605 = vmatprep.subr.mxu0 0.0
    %606 = vmatpush1.msra.mxu0 0.0
    %607 = vmatprep.subr.mxu0 0.0
    %608 = vmatpush1.msra.mxu0 0.0
    %609 = vmatprep.subr.mxu0 0.0
    %610 = vmatpush1.msra.mxu0 0.0
    %611 = vmatprep.subr.mxu0 0.0
    %612 = vmatpush1.msra.mxu0 0.0
    %613 = vmatprep.subr.mxu0 0.0
    %614 = vmatpush1.msra.mxu0 0.0
    %615 = vmatprep.subr.mxu0 0.0
    %616 = vmatpush1.msra.mxu0 0.0
    %617 = vmatprep.subr.mxu0 0.0
    %618 = vmatpush1.msra.mxu0 0.0
    %619 = vmatprep.subr.mxu0 0.0
    %620 = vmatpush1.msra.mxu0 0.0
    %621 = vmatprep.subr.mxu0 0.0
    %622 = vmatpush1.msra.mxu0 0.0
    %623 = vmatprep.subr.mxu0 0.0
    %624 = vmatpush1.msra.mxu0 0.0
    %625 = vmatprep.subr.mxu0 0.0
    %626 = vmatpush1.msra.mxu0 0.0
    %627 = vmatprep.subr.mxu0 0.0
    %628 = vmatpush1.msra.mxu0 0.0
    %629 = vmatprep.subr.mxu0 0.0
    %630 = vmatpush1.msra.mxu0 0.0
    %631 = vmatprep.subr.mxu0 0.0
    %632 = vmatpush1.msra.mxu0 %v560
    %633 = vmatprep.subr.mxu0 0.0
    %634 = vmatpush1.msra.mxu0 %v559
    %635 = vmatprep.subr.mxu0 0.0
    %636 = vmatpush2.msra.mxu0 0.0
    %637 = vmatprep.subr.mxu0 0.0
    %638 = vmatpush2.msra.mxu0 0.0
    %639 = vmatprep.subr.mxu0 0.0
    %640 = vmatpush2.msra.mxu0 0.0
    %641 = vmatprep.subr.mxu0 0.0
    %642 = vmatpush2.msra.mxu0 0.0
    %643 = vmatprep.subr.mxu0 0.0
    %644 = vmatpush2.msra.mxu0 0.0
    %645 = vmatprep.subr.mxu0 0.0
    %646 = vmatpush2.msra.mxu0 0.0
    %647 = vmatprep.subr.mxu0 0.0
    %648 = vmatpush2.msra.mxu0 0.0
    %649 = vmatprep.subr.mxu0 0.0
    %650 = vmatpush2.msra.mxu0 0.0
    %651 = vmatprep.subr.mxu0 0.0
    %652 = vmatpush2.msra.mxu0 0.0
    %653 = vmatprep.subr.mxu0 0.0
    %654 = vmatpush2.msra.mxu0 0.0
    %655 = vmatprep.subr.mxu0 0.0
    %656 = vmatpush2.msra.mxu0 0.0
    %657 = vmatprep.subr.mxu0 0.0
    %658 = vmatpush2.msra.mxu0 0.0
    %659 = vmatprep.subr.mxu0 0.0
    %660 = vmatpush2.msra.mxu0 0.0
    %661 = vmatprep.subr.mxu0 0.0
    %662 = vmatpush2.msra.mxu0 0.0
    %663 = vmatprep.subr.mxu0 0.0
    %664 = vmatpush2.msra.mxu0 0.0
    %665 = vmatprep.subr.mxu0 0.0
    %666 = vmatpush2.msra.mxu0 0.0
    %667 = vmatprep.mubr.f32.mxu0 0.0
    %668 = vmatmul.mubr.f32.gmra.mxu0 %v574
    %v669 = vpop.f32.mrf.mxu0
    %v670 = vadd.f32 0.0, %v669
    %v671 = vpop.f32.mrf.mxu0
    %672 = vmatprep.mubr.f32.mxu0 0.0
    %673 = vmatmul.mubr.f32.gmra.mxu0 %v577
    %v674 = vpop.f32.mrf.mxu0
    %v675 = vadd.f32 0.0, %v674
    %v676 = vpop.f32.mrf.mxu0
    %677 = vmatprep.mubr.f32.mxu0 0.0
    %678 = vmatmul.mubr.f32.gmra.mxu0 %v580
    %v679 = vpop.f32.mrf.mxu0
    %v680 = vadd.f32 0.0, %v679
    %v681 = vpop.f32.mrf.mxu0
    %682 = vmatprep.mubr.f32.mxu0 0.0
    %683 = vmatmul.mubr.f32.gmra.mxu0 %v583
    %v684 = vpop.f32.mrf.mxu0
    %v685 = vadd.f32 0.0, %v684
    %v686 = vpop.f32.mrf.mxu0
    %687 = vmatprep.mubr.f32.mxu0 0.0
    %688 = vmatmul.mubr.f32.gmra.mxu0 %v586
    %v689 = vpop.f32.mrf.mxu0
    %v690 = vadd.f32 0.0, %v689
    %v691 = vpop.f32.mrf.mxu0
    %692 = vmatprep.mubr.f32.mxu0 0.0
    %693 = vmatmul.mubr.f32.gmra.mxu0 %v589
    %v694 = vpop.f32.mrf.mxu0
    %v695 = vadd.f32 0.0, %v694
    %v696 = vpop.f32.mrf.mxu0
    %697 = vmatprep.mubr.f32.mxu0 0.0
    %698 = vmatmul.mubr.f32.gmra.mxu0 %v592
    %v699 = vpop.f32.mrf.mxu0
    %v700 = vadd.f32 0.0, %v699
    %v701 = vpop.f32.mrf.mxu0
    %702 = vmatprep.mubr.f32.mxu0 0.0
    %703 = vmatmul.mubr.f32.gmra.mxu0 %v595
    %v704 = vpop.f32.mrf.mxu0
    %v705 = vadd.f32 0.0, %v704
    %v706 = vpop.f32.mrf.mxu0
    %707 = vmatprep.mubr.f32.mxu0 0.0
    %708 = vmatmul.mubr.f32.gmra.mxu0 %v598
    %v709 = vpop.f32.mrf.mxu0
    %v710 = vadd.f32 0.0, %v709
    %v711 = vpop.f32.mrf.mxu0
    %712 = vmatprep.mubr.f32.mxu0 0.0
    %713 = vmatmul.mubr.f32.gmra.mxu0 %v601
    %v714 = vpop.f32.mrf.mxu0
    %v715 = vadd.f32 0.0, %v714
    %v716 = vpop.f32.mrf.mxu0
    %717 = vdwg.mxu0
    %718 = vrot.lane.b32.xlu0 %v521, 112
    %v719 = vpop.permute.xlu0 %718
    %720 = vrot.lane.b32.xlu0 %v524, 112
    %v721 = vpop.permute.xlu0 %720
    %722 = vrot.lane.b32.xlu0 %v529, 112
    %v723 = vpop.permute.xlu0 %722
    %724 = vrot.lane.b32.xlu0 %v532, 112
    %v725 = vpop.permute.xlu0 %724
    %726 = vrot.lane.b32.xlu0 %v537, 112
    %v727 = vpop.permute.xlu0 %726
    %728 = vrot.lane.b32.xlu0 %v540, 112
    %v729 = vpop.permute.xlu0 %728
    %730 = vrot.lane.b32.xlu0 %v545, 112
    %v731 = vpop.permute.xlu0 %730
    %732 = vrot.lane.b32.xlu0 %v548, 112
    %v733 = vpop.permute.xlu0 %732
    %734 = vrot.lane.b32.xlu0 %v553, 112
    %v735 = vpop.permute.xlu0 %734
    %736 = vrot.lane.b32.xlu0 %v556, 112
    %v737 = vpop.permute.xlu0 %736
    %v738 = vsel %vm151, %v719, 0
    %v740 = vsel %vm151, %v721, 0
    %v742 = vsel %vm151, %v723, 0
    %v744 = vsel %vm151, %v725, 0
    %v746 = vsel %vm151, %v727, 0
    %v748 = vsel %vm151, %v729, 0
    %v750 = vsel %vm151, %v731, 0
    %v752 = vsel %vm151, %v733, 0
    %v754 = vsel %vm151, %v735, 0
    %v756 = vsel %vm151, %v737, 0
    %758 = vmatprep.subr.mxu0 0.0
    %759 = vmatpush1.msra.mxu0 0.0
    %760 = vmatprep.subr.mxu0 0.0
    %761 = vmatpush1.msra.mxu0 0.0
    %762 = vmatprep.subr.mxu0 0.0
    %763 = vmatpush1.msra.mxu0 0.0
    %764 = vmatprep.subr.mxu0 0.0
    %765 = vmatpush1.msra.mxu0 0.0
    %766 = vmatprep.subr.mxu0 0.0
    %767 = vmatpush1.msra.mxu0 0.0
    %768 = vmatprep.subr.mxu0 0.0
    %769 = vmatpush1.msra.mxu0 0.0
    %770 = vmatprep.subr.mxu0 0.0
    %771 = vmatpush1.msra.mxu0 0.0
    %772 = vmatprep.subr.mxu0 0.0
    %773 = vmatpush1.msra.mxu0 0.0
    %774 = vmatprep.subr.mxu0 0.0
    %775 = vmatpush1.msra.mxu0 0.0
    %776 = vmatprep.subr.mxu0 0.0
    %777 = vmatpush1.msra.mxu0 0.0
    %778 = vmatprep.subr.mxu0 0.0
    %779 = vmatpush1.msra.mxu0 0.0
    %780 = vmatprep.subr.mxu0 0.0
    %781 = vmatpush1.msra.mxu0 0.0
    %782 = vmatprep.subr.mxu0 0.0
    %783 = vmatpush1.msra.mxu0 0.0
    %784 = vmatprep.subr.mxu0 0.0
    %785 = vmatpush1.msra.mxu0 0.0
    %786 = vmatprep.subr.mxu0 0.0
    %787 = vmatpush1.msra.mxu0 %v560
    %788 = vmatprep.subr.mxu0 0.0
    %789 = vmatpush1.msra.mxu0 %v559
    %790 = vmatprep.subr.mxu0 0.0
    %791 = vmatpush2.msra.mxu0 0.0
    %792 = vmatprep.subr.mxu0 0.0
    %793 = vmatpush2.msra.mxu0 0.0
    %794 = vmatprep.subr.mxu0 0.0
    %795 = vmatpush2.msra.mxu0 0.0
    %796 = vmatprep.subr.mxu0 0.0
    %797 = vmatpush2.msra.mxu0 0.0
    %798 = vmatprep.subr.mxu0 0.0
    %799 = vmatpush2.msra.mxu0 0.0
    %800 = vmatprep.subr.mxu0 0.0
    %801 = vmatpush2.msra.mxu0 0.0
    %802 = vmatprep.subr.mxu0 0.0
    %803 = vmatpush2.msra.mxu0 0.0
    %804 = vmatprep.subr.mxu0 0.0
    %805 = vmatpush2.msra.mxu0 0.0
    %806 = vmatprep.subr.mxu0 0.0
    %807 = vmatpush2.msra.mxu0 0.0
    %808 = vmatprep.subr.mxu0 0.0
    %809 = vmatpush2.msra.mxu0 0.0
    %810 = vmatprep.subr.mxu0 0.0
    %811 = vmatpush2.msra.mxu0 0.0
    %812 = vmatprep.subr.mxu0 0.0
    %813 = vmatpush2.msra.mxu0 0.0
    %814 = vmatprep.subr.mxu0 0.0
    %815 = vmatpush2.msra.mxu0 0.0
    %816 = vmatprep.subr.mxu0 0.0
    %817 = vmatpush2.msra.mxu0 0.0
    %818 = vmatprep.subr.mxu0 0.0
    %819 = vmatpush2.msra.mxu0 0.0
    %820 = vmatprep.subr.mxu0 0.0
    %821 = vmatpush2.msra.mxu0 0.0
    %822 = vmatprep.mubr.f32.mxu0 0.0
    %823 = vmatmul.mubr.f32.gmra.mxu0 %v738
    %v824 = vpop.f32.mrf.mxu0
    %v825 = vadd.f32 0.0, %v824
    %v826 = vpop.f32.mrf.mxu0
    %827 = vmatprep.mubr.f32.mxu0 0.0
    %828 = vmatmul.mubr.f32.gmra.mxu0 %v740
    %v829 = vpop.f32.mrf.mxu0
    %v830 = vadd.f32 0.0, %v829
    %v831 = vpop.f32.mrf.mxu0
    %832 = vmatprep.mubr.f32.mxu0 0.0
    %833 = vmatmul.mubr.f32.gmra.mxu0 %v742
    %v834 = vpop.f32.mrf.mxu0
    %v835 = vadd.f32 0.0, %v834
    %v836 = vpop.f32.mrf.mxu0
    %837 = vmatprep.mubr.f32.mxu0 0.0
    %838 = vmatmul.mubr.f32.gmra.mxu0 %v744
    %v839 = vpop.f32.mrf.mxu0
    %v840 = vadd.f32 0.0, %v839
    %v841 = vpop.f32.mrf.mxu0
    %842 = vmatprep.mubr.f32.mxu0 0.0
    %843 = vmatmul.mubr.f32.gmra.mxu0 %v746
    %v844 = vpop.f32.mrf.mxu0
    %v845 = vadd.f32 0.0, %v844
    %v846 = vpop.f32.mrf.mxu0
    %847 = vmatprep.mubr.f32.mxu0 0.0
    %848 = vmatmul.mubr.f32.gmra.mxu0 %v748
    %v849 = vpop.f32.mrf.mxu0
    %v850 = vadd.f32 0.0, %v849
    %v851 = vpop.f32.mrf.mxu0
    %852 = vmatprep.mubr.f32.mxu0 0.0
    %853 = vmatmul.mubr.f32.gmra.mxu0 %v750
    %v854 = vpop.f32.mrf.mxu0
    %v855 = vadd.f32 0.0, %v854
    %v856 = vpop.f32.mrf.mxu0
    %857 = vmatprep.mubr.f32.mxu0 0.0
    %858 = vmatmul.mubr.f32.gmra.mxu0 %v752
    %v859 = vpop.f32.mrf.mxu0
    %v860 = vadd.f32 0.0, %v859
    %v861 = vpop.f32.mrf.mxu0
    %862 = vmatprep.mubr.f32.mxu0 0.0
    %863 = vmatmul.mubr.f32.gmra.mxu0 %v754
    %v864 = vpop.f32.mrf.mxu0
    %v865 = vadd.f32 0.0, %v864
    %v866 = vpop.f32.mrf.mxu0
    %867 = vmatprep.mubr.f32.mxu0 0.0
    %868 = vmatmul.mubr.f32.gmra.mxu0 %v756
    %v869 = vpop.f32.mrf.mxu0
    %v870 = vadd.f32 0.0, %v869
    %v871 = vpop.f32.mrf.mxu0
    %872 = vdwg.mxu0
    %v873 = vmul.f32 %v825, %v561
    %v874 = vmul.f32 %v830, %v562
    %v875 = vmul.f32 %v835, %v563
    %v876 = vmul.f32 %v840, %v564
    %v877 = vmul.f32 %v845, %v565
    %v878 = vmul.f32 %v850, %v566
    %v879 = vmul.f32 %v855, %v567
    %v880 = vmul.f32 %v860, %v568
    %v881 = vmul.f32 %v865, %v569
    %v882 = vmul.f32 %v870, %v570
    %vm883 = vcmask 654336
    %v885 = vsel %vm883, %v571, 0
    %v888 = vsel %vm883, %v572, 0
    %890 = vmatprep.subr.mxu0 0.0
    %891 = vmatpush1.msra.mxu0 0.0
    %892 = vmatprep.subr.mxu0 0.0
    %893 = vmatpush1.msra.mxu0 0.0
    %894 = vmatprep.subr.mxu0 0.0
    %895 = vmatpush1.msra.mxu0 0.0
    %896 = vmatprep.subr.mxu0 0.0
    %897 = vmatpush1.msra.mxu0 0.0
    %898 = vmatprep.subr.mxu0 0.0
    %899 = vmatpush1.msra.mxu0 0.0
    %900 = vmatprep.subr.mxu0 0.0
    %901 = vmatpush1.msra.mxu0 0.0
    %902 = vmatprep.subr.mxu0 0.0
    %903 = vmatpush1.msra.mxu0 %v882
    %904 = vmatprep.subr.mxu0 0.0
    %905 = vmatpush1.msra.mxu0 %v881
    %906 = vmatprep.subr.mxu0 0.0
    %907 = vmatpush1.msra.mxu0 %v880
    %908 = vmatprep.subr.mxu0 0.0
    %909 = vmatpush1.msra.mxu0 %v879
    %910 = vmatprep.subr.mxu0 0.0
    %911 = vmatpush1.msra.mxu0 %v878
    %912 = vmatprep.subr.mxu0 0.0
    %913 = vmatpush1.msra.mxu0 %v877
    %914 = vmatprep.subr.mxu0 0.0
    %915 = vmatpush1.msra.mxu0 %v876
    %916 = vmatprep.subr.mxu0 0.0
    %917 = vmatpush1.msra.mxu0 %v875
    %918 = vmatprep.subr.mxu0 0.0
    %919 = vmatpush1.msra.mxu0 %v874
    %920 = vmatprep.subr.mxu0 0.0
    %921 = vmatpush1.msra.mxu0 %v873
    %922 = vmatprep.subr.mxu0 0.0
    %923 = vmatpush2.msra.mxu0 0.0
    %924 = vmatprep.subr.mxu0 0.0
    %925 = vmatpush2.msra.mxu0 0.0
    %926 = vmatprep.subr.mxu0 0.0
    %927 = vmatpush2.msra.mxu0 0.0
    %928 = vmatprep.subr.mxu0 0.0
    %929 = vmatpush2.msra.mxu0 0.0
    %930 = vmatprep.subr.mxu0 0.0
    %931 = vmatpush2.msra.mxu0 0.0
    %932 = vmatprep.subr.mxu0 0.0
    %933 = vmatpush2.msra.mxu0 0.0
    %934 = vmatprep.subr.mxu0 0.0
    %935 = vmatpush2.msra.mxu0 0.0
    %936 = vmatprep.subr.mxu0 0.0
    %937 = vmatpush2.msra.mxu0 0.0
    %938 = vmatprep.subr.mxu0 0.0
    %939 = vmatpush2.msra.mxu0 0.0
    %940 = vmatprep.subr.mxu0 0.0
    %941 = vmatpush2.msra.mxu0 0.0
    %942 = vmatprep.subr.mxu0 0.0
    %943 = vmatpush2.msra.mxu0 0.0
    %944 = vmatprep.subr.mxu0 0.0
    %945 = vmatpush2.msra.mxu0 0.0
    %946 = vmatprep.subr.mxu0 0.0
    %947 = vmatpush2.msra.mxu0 0.0
    %948 = vmatprep.subr.mxu0 0.0
    %949 = vmatpush2.msra.mxu0 0.0
    %950 = vmatprep.subr.mxu0 0.0
    %951 = vmatpush2.msra.mxu0 0.0
    %952 = vmatprep.subr.mxu0 0.0
    %953 = vmatpush2.msra.mxu0 0.0
    %954 = vmatprep.mubr.f32.mxu0 0.0
    %955 = vmatmul.mubr.f32.gmra.mxu0 %v885
    %v956 = vpop.f32.mrf.mxu0
    %v957 = vadd.f32 0.0, %v956
    %v958 = vpop.f32.mrf.mxu0
    %959 = vmatprep.mubr.f32.mxu0 0.0
    %960 = vmatmul.mubr.f32.gmra.mxu0 %v888
    %v961 = vpop.f32.mrf.mxu0
    %v962 = vadd.f32 0.0, %v961
    %v963 = vpop.f32.mrf.mxu0
    %964 = vdwg.mxu0
    %v965 = vmul.f32 %v670, %v957
    %v966 = vmul.f32 %v675, %v962
    %v967 = vmul.f32 %v680, %v957
    %v968 = vmul.f32 %v685, %v962
    %v969 = vmul.f32 %v690, %v957
    %v970 = vmul.f32 %v695, %v962
    %v971 = vmul.f32 %v700, %v957
    %v972 = vmul.f32 %v705, %v962
    %v973 = vmul.f32 %v710, %v957
    %v974 = vmul.f32 %v715, %v962
    %v975 = vld [vmem:[#allocation4 + $0xc0] sm:$0xff]
    %v976 = vld [vmem:[#allocation4 + $0xc8] sm:$0xff]
    %v977 = vld [vmem:[#allocation4 + $0xd0] sm:$0xff]
    %v978 = vld [vmem:[#allocation4 + $0xd8] sm:$0xff]
    %v979 = vld [vmem:[#allocation4 + $0xe0] sm:$0xff]
    %v980 = vld [vmem:[#allocation4 + $0xe8] sm:$0xff]
    %v981 = vld [vmem:[#allocation4 + $0xf0] sm:$0xff]
    %v982 = vld [vmem:[#allocation4 + $0xf8] sm:$0xff]
    %v983 = vld [vmem:[#allocation4 + $0x100] sm:$0xff]
    %v984 = vld [vmem:[#allocation4 + $0x108] sm:$0xff]
    %v986 = vsel %vm883, %v965, 0
    %v989 = vsel %vm883, %v966, 0
    %v992 = vsel %vm883, %v967, 0
    %v995 = vsel %vm883, %v968, 0
    %v998 = vsel %vm883, %v969, 0
    %v1001 = vsel %vm883, %v970, 0
    %v1004 = vsel %vm883, %v971, 0
    %v1007 = vsel %vm883, %v972, 0
    %v1010 = vsel %vm883, %v973, 0
    %v1013 = vsel %vm883, %v974, 0
    %1015 = vmatprep.subr.mxu0 0.0
    %1016 = vmatpush1.msra.mxu0 0.0
    %1017 = vmatprep.subr.mxu0 0.0
    %1018 = vmatpush1.msra.mxu0 0.0
    %1019 = vmatprep.subr.mxu0 0.0
    %1020 = vmatpush1.msra.mxu0 0.0
    %1021 = vmatprep.subr.mxu0 0.0
    %1022 = vmatpush1.msra.mxu0 0.0
    %1023 = vmatprep.subr.mxu0 0.0
    %1024 = vmatpush1.msra.mxu0 0.0
    %1025 = vmatprep.subr.mxu0 0.0
    %1026 = vmatpush1.msra.mxu0 0.0
    %1027 = vmatprep.subr.mxu0 0.0
    %1028 = vmatpush1.msra.mxu0 %v984
    %1029 = vmatprep.subr.mxu0 0.0
    %1030 = vmatpush1.msra.mxu0 %v983
    %1031 = vmatprep.subr.mxu0 0.0
    %1032 = vmatpush1.msra.mxu0 %v982
    %1033 = vmatprep.subr.mxu0 0.0
    %1034 = vmatpush1.msra.mxu0 %v981
    %1035 = vmatprep.subr.mxu0 0.0
    %1036 = vmatpush1.msra.mxu0 %v980
    %1037 = vmatprep.subr.mxu0 0.0
    %1038 = vmatpush1.msra.mxu0 %v979
    %1039 = vmatprep.subr.mxu0 0.0
    %1040 = vmatpush1.msra.mxu0 %v978
    %1041 = vmatprep.subr.mxu0 0.0
    %1042 = vmatpush1.msra.mxu0 %v977
    %1043 = vmatprep.subr.mxu0 0.0
    %1044 = vmatpush1.msra.mxu0 %v976
    %1045 = vmatprep.subr.mxu0 0.0
    %1046 = vmatpush1.msra.mxu0 %v975
    %1047 = vmatprep.subr.mxu0 0.0
    %1048 = vmatpush2.msra.mxu0 0.0
    %1049 = vmatprep.subr.mxu0 0.0
    %1050 = vmatpush2.msra.mxu0 0.0
    %1051 = vmatprep.subr.mxu0 0.0
    %1052 = vmatpush2.msra.mxu0 0.0
    %1053 = vmatprep.subr.mxu0 0.0
    %1054 = vmatpush2.msra.mxu0 0.0
    %1055 = vmatprep.subr.mxu0 0.0
    %1056 = vmatpush2.msra.mxu0 0.0
    %1057 = vmatprep.subr.mxu0 0.0
    %1058 = vmatpush2.msra.mxu0 0.0
    %1059 = vmatprep.subr.mxu0 0.0
    %1060 = vmatpush2.msra.mxu0 0.0
    %1061 = vmatprep.subr.mxu0 0.0
    %1062 = vmatpush2.msra.mxu0 0.0
    %1063 = vmatprep.subr.mxu0 0.0
    %1064 = vmatpush2.msra.mxu0 0.0
    %1065 = vmatprep.subr.mxu0 0.0
    %1066 = vmatpush2.msra.mxu0 0.0
    %1067 = vmatprep.subr.mxu0 0.0
    %1068 = vmatpush2.msra.mxu0 0.0
    %1069 = vmatprep.subr.mxu0 0.0
    %1070 = vmatpush2.msra.mxu0 0.0
    %1071 = vmatprep.subr.mxu0 0.0
    %1072 = vmatpush2.msra.mxu0 0.0
    %1073 = vmatprep.subr.mxu0 0.0
    %1074 = vmatpush2.msra.mxu0 0.0
    %1075 = vmatprep.subr.mxu0 0.0
    %1076 = vmatpush2.msra.mxu0 0.0
    %1077 = vmatprep.subr.mxu0 0.0
    %1078 = vmatpush2.msra.mxu0 0.0
    %1079 = vmatprep.mubr.f32.mxu0 0.0
    %1080 = vmatmul.mubr.f32.gmra.mxu0 %v986
    %v1081 = vpop.f32.mrf.mxu0
    %v1082 = vadd.f32 0.0, %v1081
    %v1083 = vpop.f32.mrf.mxu0
    %1084 = vmatprep.mubr.f32.mxu0 0.0
    %1085 = vmatmul.mubr.f32.gmra.mxu0 %v989
    %v1086 = vpop.f32.mrf.mxu0
    %v1087 = vadd.f32 0.0, %v1086
    %v1088 = vpop.f32.mrf.mxu0
    %1089 = vmatprep.mubr.f32.mxu0 0.0
    %1090 = vmatmul.mubr.f32.gmra.mxu0 %v992
    %v1091 = vpop.f32.mrf.mxu0
    %v1092 = vadd.f32 0.0, %v1091
    %v1093 = vpop.f32.mrf.mxu0
    %1094 = vmatprep.mubr.f32.mxu0 0.0
    %1095 = vmatmul.mubr.f32.gmra.mxu0 %v995
    %v1096 = vpop.f32.mrf.mxu0
    %v1097 = vadd.f32 0.0, %v1096
    %v1098 = vpop.f32.mrf.mxu0
    %1099 = vmatprep.mubr.f32.mxu0 0.0
    %1100 = vmatmul.mubr.f32.gmra.mxu0 %v998
    %v1101 = vpop.f32.mrf.mxu0
    %v1102 = vadd.f32 0.0, %v1101
    %v1103 = vpop.f32.mrf.mxu0
    %1104 = vmatprep.mubr.f32.mxu0 0.0
    %1105 = vmatmul.mubr.f32.gmra.mxu0 %v1001
    %v1106 = vpop.f32.mrf.mxu0
    %v1107 = vadd.f32 0.0, %v1106
    %v1108 = vpop.f32.mrf.mxu0
    %1109 = vmatprep.mubr.f32.mxu0 0.0
    %1110 = vmatmul.mubr.f32.gmra.mxu0 %v1004
    %v1111 = vpop.f32.mrf.mxu0
    %v1112 = vadd.f32 0.0, %v1111
    %v1113 = vpop.f32.mrf.mxu0
    %1114 = vmatprep.mubr.f32.mxu0 0.0
    %1115 = vmatmul.mubr.f32.gmra.mxu0 %v1007
    %v1116 = vpop.f32.mrf.mxu0
    %v1117 = vadd.f32 0.0, %v1116
    %v1118 = vpop.f32.mrf.mxu0
    %1119 = vmatprep.mubr.f32.mxu0 0.0
    %1120 = vmatmul.mubr.f32.gmra.mxu0 %v1010
    %v1121 = vpop.f32.mrf.mxu0
    %v1122 = vadd.f32 0.0, %v1121
    %v1123 = vpop.f32.mrf.mxu0
    %1124 = vmatprep.mubr.f32.mxu0 0.0
    %1125 = vmatmul.mubr.f32.gmra.mxu0 %v1013
    %v1126 = vpop.f32.mrf.mxu0
    %v1127 = vadd.f32 0.0, %v1126
    %v1128 = vpop.f32.mrf.mxu0
    %1129 = vdwg.mxu0
    %vm1130 = vcmask 162816
    %v1131 = vsel %vm1130, %v1082, -inf
    %1132 = vmax.xlane.f32.xlu0 %v1131
    %v1133 = vpop.xlane.xlu0 %1132
    %v1134 = vsel %vm1130, %v1087, -inf
    %1135 = vmax.xlane.f32.xlu0 %v1134
    %v1136 = vpop.xlane.xlu0 %1135
    %v1137 = vsel %vm1130, %v1092, -inf
    %1138 = vmax.xlane.f32.xlu0 %v1137
    %v1139 = vpop.xlane.xlu0 %1138
    %v1140 = vsel %vm1130, %v1097, -inf
    %1141 = vmax.xlane.f32.xlu0 %v1140
    %v1142 = vpop.xlane.xlu0 %1141
    %v1143 = vsel %vm1130, %v1102, -inf
    %1144 = vmax.xlane.f32.xlu0 %v1143
    %v1145 = vpop.xlane.xlu0 %1144
    %v1146 = vsel %vm1130, %v1107, -inf
    %1147 = vmax.xlane.f32.xlu0 %v1146
    %v1148 = vpop.xlane.xlu0 %1147
    %v1149 = vsel %vm1130, %v1112, -inf
    %1150 = vmax.xlane.f32.xlu0 %v1149
    %v1151 = vpop.xlane.xlu0 %1150
    %v1152 = vsel %vm1130, %v1117, -inf
    %1153 = vmax.xlane.f32.xlu0 %v1152
    %v1154 = vpop.xlane.xlu0 %1153
    %v1155 = vsel %vm1130, %v1122, -inf
    %1156 = vmax.xlane.f32.xlu0 %v1155
    %v1157 = vpop.xlane.xlu0 %1156
    %v1158 = vsel %vm1130, %v1127, -inf
    %1159 = vmax.xlane.f32.xlu0 %v1158
    %v1160 = vpop.xlane.xlu0 %1159
    %v1161 = vsub.f32 %v1082, %v1133
    %v1162 = vsub.f32 %v1087, %v1136
    %v1163 = vsub.f32 %v1092, %v1139
    %v1164 = vsub.f32 %v1097, %v1142
    %v1165 = vsub.f32 %v1102, %v1145
    %v1166 = vsub.f32 %v1107, %v1148
    %v1167 = vsub.f32 %v1112, %v1151
    %v1168 = vsub.f32 %v1117, %v1154
    %v1169 = vsub.f32 %v1122, %v1157
    %v1170 = vsub.f32 %v1127, %v1160
    %v1171 = vmul.f32 %v1161, 1.442695
    %v1172 = vpow.pop %v1171
    %v1173 = vmul.f32 %v1162, 1.442695
    %v1174 = vpow.pop %v1173
    %v1175 = vmul.f32 %v1163, 1.442695
    %v1176 = vpow.pop %v1175
    %v1177 = vmul.f32 %v1164, 1.442695
    %v1178 = vpow.pop %v1177
    %v1179 = vmul.f32 %v1165, 1.442695
    %v1180 = vpow.pop %v1179
    %v1181 = vmul.f32 %v1166, 1.442695
    %v1182 = vpow.pop %v1181
    %v1183 = vmul.f32 %v1167, 1.442695
    %v1184 = vpow.pop %v1183
    %v1185 = vmul.f32 %v1168, 1.442695
    %v1186 = vpow.pop %v1185
    %v1187 = vmul.f32 %v1169, 1.442695
    %v1188 = vpow.pop %v1187
    %v1189 = vmul.f32 %v1170, 1.442695
    %v1190 = vpow.pop %v1189
    %v1191 = vld [vmem:[#allocation4 + $0x110] sm:$0xff]
    %v1192 = vld [vmem:[#allocation4 + $0x118] sm:$0xff]
    %v1193 = vld [vmem:[#allocation4 + $0x120] sm:$0xf]
    %v1195 = vsel %vm1130, %v1172, 0
    %v1198 = vsel %vm1130, %v1174, 0
    %v1201 = vsel %vm1130, %v1176, 0
    %v1204 = vsel %vm1130, %v1178, 0
    %v1207 = vsel %vm1130, %v1180, 0
    %v1210 = vsel %vm1130, %v1182, 0
    %v1213 = vsel %vm1130, %v1184, 0
    %v1216 = vsel %vm1130, %v1186, 0
    %v1219 = vsel %vm1130, %v1188, 0
    %v1222 = vsel %vm1130, %v1190, 0
    %v1225 = vsel %vm225, %v1193, 0
    %1227 = vmatprep.subr.mxu0 0.0
    %1228 = vmatpush1.msra.mxu0 0.0
    %1229 = vmatprep.subr.mxu0 0.0
    %1230 = vmatpush1.msra.mxu0 0.0
    %1231 = vmatprep.subr.mxu0 0.0
    %1232 = vmatpush1.msra.mxu0 0.0
    %1233 = vmatprep.subr.mxu0 0.0
    %1234 = vmatpush1.msra.mxu0 0.0
    %1235 = vmatprep.subr.mxu0 0.0
    %1236 = vmatpush1.msra.mxu0 0.0
    %1237 = vmatprep.subr.mxu0 0.0
    %1238 = vmatpush1.msra.mxu0 0.0
    %1239 = vmatprep.subr.mxu0 0.0
    %1240 = vmatpush1.msra.mxu0 0.0
    %1241 = vmatprep.subr.mxu0 0.0
    %1242 = vmatpush1.msra.mxu0 0.0
    %1243 = vmatprep.subr.mxu0 0.0
    %1244 = vmatpush1.msra.mxu0 0.0
    %1245 = vmatprep.subr.mxu0 0.0
    %1246 = vmatpush1.msra.mxu0 0.0
    %1247 = vmatprep.subr.mxu0 0.0
    %1248 = vmatpush1.msra.mxu0 0.0
    %1249 = vmatprep.subr.mxu0 0.0
    %1250 = vmatpush1.msra.mxu0 0.0
    %1251 = vmatprep.subr.mxu0 0.0
    %1252 = vmatpush1.msra.mxu0 0.0
    %1253 = vmatprep.subr.mxu0 0.0
    %1254 = vmatpush1.msra.mxu0 %v1225
    %1255 = vmatprep.subr.mxu0 0.0
    %1256 = vmatpush1.msra.mxu0 %v1192
    %1257 = vmatprep.subr.mxu0 0.0
    %1258 = vmatpush1.msra.mxu0 %v1191
    %1259 = vmatprep.subr.mxu0 0.0
    %1260 = vmatpush2.msra.mxu0 0.0
    %1261 = vmatprep.subr.mxu0 0.0
    %1262 = vmatpush2.msra.mxu0 0.0
    %1263 = vmatprep.subr.mxu0 0.0
    %1264 = vmatpush2.msra.mxu0 0.0
    %1265 = vmatprep.subr.mxu0 0.0
    %1266 = vmatpush2.msra.mxu0 0.0
    %1267 = vmatprep.subr.mxu0 0.0
    %1268 = vmatpush2.msra.mxu0 0.0
    %1269 = vmatprep.subr.mxu0 0.0
    %1270 = vmatpush2.msra.mxu0 0.0
    %1271 = vmatprep.subr.mxu0 0.0
    %1272 = vmatpush2.msra.mxu0 0.0
    %1273 = vmatprep.subr.mxu0 0.0
    %1274 = vmatpush2.msra.mxu0 0.0
    %1275 = vmatprep.subr.mxu0 0.0
    %1276 = vmatpush2.msra.mxu0 0.0
    %1277 = vmatprep.subr.mxu0 0.0
    %1278 = vmatpush2.msra.mxu0 0.0
    %1279 = vmatprep.subr.mxu0 0.0
    %1280 = vmatpush2.msra.mxu0 0.0
    %1281 = vmatprep.subr.mxu0 0.0
    %1282 = vmatpush2.msra.mxu0 0.0
    %1283 = vmatprep.subr.mxu0 0.0
    %1284 = vmatpush2.msra.mxu0 0.0
    %1285 = vmatprep.subr.mxu0 0.0
    %1286 = vmatpush2.msra.mxu0 0.0
    %1287 = vmatprep.subr.mxu0 0.0
    %1288 = vmatpush2.msra.mxu0 0.0
    %1289 = vmatprep.subr.mxu0 0.0
    %1290 = vmatpush2.msra.mxu0 0.0
    %1291 = vmatprep.mubr.f32.mxu0 0.0
    %1292 = vmatmul.mubr.f32.gmra.mxu0 %v1195
    %v1293 = vpop.f32.mrf.mxu0
    %v1294 = vadd.f32 0.0, %v1293
    %v1295 = vpop.f32.mrf.mxu0
    %1296 = vmatprep.mubr.f32.mxu0 0.0
    %1297 = vmatmul.mubr.f32.gmra.mxu0 %v1198
    %v1298 = vpop.f32.mrf.mxu0
    %v1299 = vadd.f32 0.0, %v1298
    %v1300 = vpop.f32.mrf.mxu0
    %1301 = vmatprep.mubr.f32.mxu0 0.0
    %1302 = vmatmul.mubr.f32.gmra.mxu0 %v1201
    %v1303 = vpop.f32.mrf.mxu0
    %v1304 = vadd.f32 0.0, %v1303
    %v1305 = vpop.f32.mrf.mxu0
    %1306 = vmatprep.mubr.f32.mxu0 0.0
    %1307 = vmatmul.mubr.f32.gmra.mxu0 %v1204
    %v1308 = vpop.f32.mrf.mxu0
    %v1309 = vadd.f32 0.0, %v1308
    %v1310 = vpop.f32.mrf.mxu0
    %1311 = vmatprep.mubr.f32.mxu0 0.0
    %1312 = vmatmul.mubr.f32.gmra.mxu0 %v1207
    %v1313 = vpop.f32.mrf.mxu0
    %v1314 = vadd.f32 0.0, %v1313
    %v1315 = vpop.f32.mrf.mxu0
    %1316 = vmatprep.mubr.f32.mxu0 0.0
    %1317 = vmatmul.mubr.f32.gmra.mxu0 %v1210
    %v1318 = vpop.f32.mrf.mxu0
    %v1319 = vadd.f32 0.0, %v1318
    %v1320 = vpop.f32.mrf.mxu0
    %1321 = vmatprep.mubr.f32.mxu0 0.0
    %1322 = vmatmul.mubr.f32.gmra.mxu0 %v1213
    %v1323 = vpop.f32.mrf.mxu0
    %v1324 = vadd.f32 0.0, %v1323
    %v1325 = vpop.f32.mrf.mxu0
    %1326 = vmatprep.mubr.f32.mxu0 0.0
    %1327 = vmatmul.mubr.f32.gmra.mxu0 %v1216
    %v1328 = vpop.f32.mrf.mxu0
    %v1329 = vadd.f32 0.0, %v1328
    %v1330 = vpop.f32.mrf.mxu0
    %1331 = vmatprep.mubr.f32.mxu0 0.0
    %1332 = vmatmul.mubr.f32.gmra.mxu0 %v1219
    %v1333 = vpop.f32.mrf.mxu0
    %v1334 = vadd.f32 0.0, %v1333
    %v1335 = vpop.f32.mrf.mxu0
    %1336 = vmatprep.mubr.f32.mxu0 0.0
    %1337 = vmatmul.mubr.f32.gmra.mxu0 %v1222
    %v1338 = vpop.f32.mrf.mxu0
    %v1339 = vadd.f32 0.0, %v1338
    %v1340 = vpop.f32.mrf.mxu0
    %1341 = vdwg.mxu0
    %v1342 = vld [vmem:[#allocation4 + $0x128] sm:$0xff]
    %v1343 = vld [vmem:[#allocation4 + $0x130] sm:$0xff]
    %v1344 = vld [vmem:[#allocation4 + $0x138] sm:$0xf]
    %v1346 = vsel %vm225, %v1344, 0
    %1348 = vmatprep.subr.mxu0 0.0
    %1349 = vmatpush1.msra.mxu0 0.0
    %1350 = vmatprep.subr.mxu0 0.0
    %1351 = vmatpush1.msra.mxu0 0.0
    %1352 = vmatprep.subr.mxu0 0.0
    %1353 = vmatpush1.msra.mxu0 0.0
    %1354 = vmatprep.subr.mxu0 0.0
    %1355 = vmatpush1.msra.mxu0 0.0
    %1356 = vmatprep.subr.mxu0 0.0
    %1357 = vmatpush1.msra.mxu0 0.0
    %1358 = vmatprep.subr.mxu0 0.0
    %1359 = vmatpush1.msra.mxu0 0.0
    %1360 = vmatprep.subr.mxu0 0.0
    %1361 = vmatpush1.msra.mxu0 0.0
    %1362 = vmatprep.subr.mxu0 0.0
    %1363 = vmatpush1.msra.mxu0 0.0
    %1364 = vmatprep.subr.mxu0 0.0
    %1365 = vmatpush1.msra.mxu0 0.0
    %1366 = vmatprep.subr.mxu0 0.0
    %1367 = vmatpush1.msra.mxu0 0.0
    %1368 = vmatprep.subr.mxu0 0.0
    %1369 = vmatpush1.msra.mxu0 0.0
    %1370 = vmatprep.subr.mxu0 0.0
    %1371 = vmatpush1.msra.mxu0 0.0
    %1372 = vmatprep.subr.mxu0 0.0
    %1373 = vmatpush1.msra.mxu0 0.0
    %1374 = vmatprep.subr.mxu0 0.0
    %1375 = vmatpush1.msra.mxu0 %v1346
    %1376 = vmatprep.subr.mxu0 0.0
    %1377 = vmatpush1.msra.mxu0 %v1343
    %1378 = vmatprep.subr.mxu0 0.0
    %1379 = vmatpush1.msra.mxu0 %v1342
    %1380 = vmatprep.subr.mxu0 0.0
    %1381 = vmatpush2.msra.mxu0 0.0
    %1382 = vmatprep.subr.mxu0 0.0
    %1383 = vmatpush2.msra.mxu0 0.0
    %1384 = vmatprep.subr.mxu0 0.0
    %1385 = vmatpush2.msra.mxu0 0.0
    %1386 = vmatprep.subr.mxu0 0.0
    %1387 = vmatpush2.msra.mxu0 0.0
    %1388 = vmatprep.subr.mxu0 0.0
    %1389 = vmatpush2.msra.mxu0 0.0
    %1390 = vmatprep.subr.mxu0 0.0
    %1391 = vmatpush2.msra.mxu0 0.0
    %1392 = vmatprep.subr.mxu0 0.0
    %1393 = vmatpush2.msra.mxu0 0.0
    %1394 = vmatprep.subr.mxu0 0.0
    %1395 = vmatpush2.msra.mxu0 0.0
    %1396 = vmatprep.subr.mxu0 0.0
    %1397 = vmatpush2.msra.mxu0 0.0
    %1398 = vmatprep.subr.mxu0 0.0
    %1399 = vmatpush2.msra.mxu0 0.0
    %1400 = vmatprep.subr.mxu0 0.0
    %1401 = vmatpush2.msra.mxu0 0.0
    %1402 = vmatprep.subr.mxu0 0.0
    %1403 = vmatpush2.msra.mxu0 0.0
    %1404 = vmatprep.subr.mxu0 0.0
    %1405 = vmatpush2.msra.mxu0 0.0
    %1406 = vmatprep.subr.mxu0 0.0
    %1407 = vmatpush2.msra.mxu0 0.0
    %1408 = vmatprep.subr.mxu0 0.0
    %1409 = vmatpush2.msra.mxu0 0.0
    %1410 = vmatprep.subr.mxu0 0.0
    %1411 = vmatpush2.msra.mxu0 0.0
    %1412 = vmatprep.mubr.f32.mxu0 0.0
    %1413 = vmatmul.mubr.f32.gmra.mxu0 %v1195
    %v1414 = vpop.f32.mrf.mxu0
    %v1415 = vadd.f32 0.0, %v1414
    %v1416 = vpop.f32.mrf.mxu0
    %1417 = vmatprep.mubr.f32.mxu0 0.0
    %1418 = vmatmul.mubr.f32.gmra.mxu0 %v1198
    %v1419 = vpop.f32.mrf.mxu0
    %v1420 = vadd.f32 0.0, %v1419
    %v1421 = vpop.f32.mrf.mxu0
    %1422 = vmatprep.mubr.f32.mxu0 0.0
    %1423 = vmatmul.mubr.f32.gmra.mxu0 %v1201
    %v1424 = vpop.f32.mrf.mxu0
    %v1425 = vadd.f32 0.0, %v1424
    %v1426 = vpop.f32.mrf.mxu0
    %1427 = vmatprep.mubr.f32.mxu0 0.0
    %1428 = vmatmul.mubr.f32.gmra.mxu0 %v1204
    %v1429 = vpop.f32.mrf.mxu0
    %v1430 = vadd.f32 0.0, %v1429
    %v1431 = vpop.f32.mrf.mxu0
    %1432 = vmatprep.mubr.f32.mxu0 0.0
    %1433 = vmatmul.mubr.f32.gmra.mxu0 %v1207
    %v1434 = vpop.f32.mrf.mxu0
    %v1435 = vadd.f32 0.0, %v1434
    %v1436 = vpop.f32.mrf.mxu0
    %1437 = vmatprep.mubr.f32.mxu0 0.0
    %1438 = vmatmul.mubr.f32.gmra.mxu0 %v1210
    %v1439 = vpop.f32.mrf.mxu0
    %v1440 = vadd.f32 0.0, %v1439
    %v1441 = vpop.f32.mrf.mxu0
    %1442 = vmatprep.mubr.f32.mxu0 0.0
    %1443 = vmatmul.mubr.f32.gmra.mxu0 %v1213
    %v1444 = vpop.f32.mrf.mxu0
    %v1445 = vadd.f32 0.0, %v1444
    %v1446 = vpop.f32.mrf.mxu0
    %1447 = vmatprep.mubr.f32.mxu0 0.0
    %1448 = vmatmul.mubr.f32.gmra.mxu0 %v1216
    %v1449 = vpop.f32.mrf.mxu0
    %v1450 = vadd.f32 0.0, %v1449
    %v1451 = vpop.f32.mrf.mxu0
    %1452 = vmatprep.mubr.f32.mxu0 0.0
    %1453 = vmatmul.mubr.f32.gmra.mxu0 %v1219
    %v1454 = vpop.f32.mrf.mxu0
    %v1455 = vadd.f32 0.0, %v1454
    %v1456 = vpop.f32.mrf.mxu0
    %1457 = vmatprep.mubr.f32.mxu0 0.0
    %1458 = vmatmul.mubr.f32.gmra.mxu0 %v1222
    %v1459 = vpop.f32.mrf.mxu0
    %v1460 = vadd.f32 0.0, %v1459
    %v1461 = vpop.f32.mrf.mxu0
    %1462 = vdwg.mxu0
    %1463 = vrot.lane.b32.xlu0 %v521, 96
    %v1464 = vpop.permute.xlu0 %1463
    %1465 = vrot.lane.b32.xlu0 %v524, 96
    %v1466 = vpop.permute.xlu0 %1465
    %1467 = vrot.lane.b32.xlu0 %v529, 96
    %v1468 = vpop.permute.xlu0 %1467
    %1469 = vrot.lane.b32.xlu0 %v532, 96
    %v1470 = vpop.permute.xlu0 %1469
    %1471 = vrot.lane.b32.xlu0 %v537, 96
    %v1472 = vpop.permute.xlu0 %1471
    %1473 = vrot.lane.b32.xlu0 %v540, 96
    %v1474 = vpop.permute.xlu0 %1473
    %1475 = vrot.lane.b32.xlu0 %v545, 96
    %v1476 = vpop.permute.xlu0 %1475
    %1477 = vrot.lane.b32.xlu0 %v548, 96
    %v1478 = vpop.permute.xlu0 %1477
    %1479 = vrot.lane.b32.xlu0 %v553, 96
    %v1480 = vpop.permute.xlu0 %1479
    %1481 = vrot.lane.b32.xlu0 %v556, 96
    %v1482 = vpop.permute.xlu0 %1481
    %v1483 = vsel %vm151, %v1464, 0
    %v1485 = vsel %vm151, %v1466, 0
    %v1487 = vsel %vm151, %v1468, 0
    %v1489 = vsel %vm151, %v1470, 0
    %v1491 = vsel %vm151, %v1472, 0
    %v1493 = vsel %vm151, %v1474, 0
    %v1495 = vsel %vm151, %v1476, 0
    %v1497 = vsel %vm151, %v1478, 0
    %v1499 = vsel %vm151, %v1480, 0
    %v1501 = vsel %vm151, %v1482, 0
    %1503 = vmatprep.subr.mxu0 0.0
    %1504 = vmatpush1.msra.mxu0 0.0
    %1505 = vmatprep.subr.mxu0 0.0
    %1506 = vmatpush1.msra.mxu0 0.0
    %1507 = vmatprep.subr.mxu0 0.0
    %1508 = vmatpush1.msra.mxu0 0.0
    %1509 = vmatprep.subr.mxu0 0.0
    %1510 = vmatpush1.msra.mxu0 0.0
    %1511 = vmatprep.subr.mxu0 0.0
    %1512 = vmatpush1.msra.mxu0 0.0
    %1513 = vmatprep.subr.mxu0 0.0
    %1514 = vmatpush1.msra.mxu0 0.0
    %1515 = vmatprep.subr.mxu0 0.0
    %1516 = vmatpush1.msra.mxu0 0.0
    %1517 = vmatprep.subr.mxu0 0.0
    %1518 = vmatpush1.msra.mxu0 0.0
    %1519 = vmatprep.subr.mxu0 0.0
    %1520 = vmatpush1.msra.mxu0 0.0
    %1521 = vmatprep.subr.mxu0 0.0
    %1522 = vmatpush1.msra.mxu0 0.0
    %1523 = vmatprep.subr.mxu0 0.0
    %1524 = vmatpush1.msra.mxu0 0.0
    %1525 = vmatprep.subr.mxu0 0.0
    %1526 = vmatpush1.msra.mxu0 0.0
    %1527 = vmatprep.subr.mxu0 0.0
    %1528 = vmatpush1.msra.mxu0 0.0
    %1529 = vmatprep.subr.mxu0 0.0
    %1530 = vmatpush1.msra.mxu0 0.0
    %1531 = vmatprep.subr.mxu0 0.0
    %1532 = vmatpush1.msra.mxu0 %v560
    %1533 = vmatprep.subr.mxu0 0.0
    %1534 = vmatpush1.msra.mxu0 %v559
    %1535 = vmatprep.subr.mxu0 0.0
    %1536 = vmatpush2.msra.mxu0 0.0
    %1537 = vmatprep.subr.mxu0 0.0
    %1538 = vmatpush2.msra.mxu0 0.0
    %1539 = vmatprep.subr.mxu0 0.0
    %1540 = vmatpush2.msra.mxu0 0.0
    %1541 = vmatprep.subr.mxu0 0.0
    %1542 = vmatpush2.msra.mxu0 0.0
    %1543 = vmatprep.subr.mxu0 0.0
    %1544 = vmatpush2.msra.mxu0 0.0
    %1545 = vmatprep.subr.mxu0 0.0
    %1546 = vmatpush2.msra.mxu0 0.0
    %1547 = vmatprep.subr.mxu0 0.0
    %1548 = vmatpush2.msra.mxu0 0.0
    %1549 = vmatprep.subr.mxu0 0.0
    %1550 = vmatpush2.msra.mxu0 0.0
    %1551 = vmatprep.subr.mxu0 0.0
    %1552 = vmatpush2.msra.mxu0 0.0
    %1553 = vmatprep.subr.mxu0 0.0
    %1554 = vmatpush2.msra.mxu0 0.0
    %1555 = vmatprep.subr.mxu0 0.0
    %1556 = vmatpush2.msra.mxu0 0.0
    %1557 = vmatprep.subr.mxu0 0.0
    %1558 = vmatpush2.msra.mxu0 0.0
    %1559 = vmatprep.subr.mxu0 0.0
    %1560 = vmatpush2.msra.mxu0 0.0
    %1561 = vmatprep.subr.mxu0 0.0
    %1562 = vmatpush2.msra.mxu0 0.0
    %1563 = vmatprep.subr.mxu0 0.0
    %1564 = vmatpush2.msra.mxu0 0.0
    %1565 = vmatprep.subr.mxu0 0.0
    %1566 = vmatpush2.msra.mxu0 0.0
    %1567 = vmatprep.mubr.f32.mxu0 0.0
    %1568 = vmatmul.mubr.f32.gmra.mxu0 %v1483
    %v1569 = vpop.f32.mrf.mxu0
    %v1570 = vadd.f32 0.0, %v1569
    %v1571 = vpop.f32.mrf.mxu0
    %1572 = vmatprep.mubr.f32.mxu0 0.0
    %1573 = vmatmul.mubr.f32.gmra.mxu0 %v1485
    %v1574 = vpop.f32.mrf.mxu0
    %v1575 = vadd.f32 0.0, %v1574
    %v1576 = vpop.f32.mrf.mxu0
    %1577 = vmatprep.mubr.f32.mxu0 0.0
    %1578 = vmatmul.mubr.f32.gmra.mxu0 %v1487
    %v1579 = vpop.f32.mrf.mxu0
    %v1580 = vadd.f32 0.0, %v1579
    %v1581 = vpop.f32.mrf.mxu0
    %1582 = vmatprep.mubr.f32.mxu0 0.0
    %1583 = vmatmul.mubr.f32.gmra.mxu0 %v1489
    %v1584 = vpop.f32.mrf.mxu0
    %v1585 = vadd.f32 0.0, %v1584
    %v1586 = vpop.f32.mrf.mxu0
    %1587 = vmatprep.mubr.f32.mxu0 0.0
    %1588 = vmatmul.mubr.f32.gmra.mxu0 %v1491
    %v1589 = vpop.f32.mrf.mxu0
    %v1590 = vadd.f32 0.0, %v1589
    %v1591 = vpop.f32.mrf.mxu0
    %1592 = vmatprep.mubr.f32.mxu0 0.0
    %1593 = vmatmul.mubr.f32.gmra.mxu0 %v1493
    %v1594 = vpop.f32.mrf.mxu0
    %v1595 = vadd.f32 0.0, %v1594
    %v1596 = vpop.f32.mrf.mxu0
    %1597 = vmatprep.mubr.f32.mxu0 0.0
    %1598 = vmatmul.mubr.f32.gmra.mxu0 %v1495
    %v1599 = vpop.f32.mrf.mxu0
    %v1600 = vadd.f32 0.0, %v1599
    %v1601 = vpop.f32.mrf.mxu0
    %1602 = vmatprep.mubr.f32.mxu0 0.0
    %1603 = vmatmul.mubr.f32.gmra.mxu0 %v1497
    %v1604 = vpop.f32.mrf.mxu0
    %v1605 = vadd.f32 0.0, %v1604
    %v1606 = vpop.f32.mrf.mxu0
    %1607 = vmatprep.mubr.f32.mxu0 0.0
    %1608 = vmatmul.mubr.f32.gmra.mxu0 %v1499
    %v1609 = vpop.f32.mrf.mxu0
    %v1610 = vadd.f32 0.0, %v1609
    %v1611 = vpop.f32.mrf.mxu0
    %1612 = vmatprep.mubr.f32.mxu0 0.0
    %1613 = vmatmul.mubr.f32.gmra.mxu0 %v1501
    %v1614 = vpop.f32.mrf.mxu0
    %v1615 = vadd.f32 0.0, %v1614
    %v1616 = vpop.f32.mrf.mxu0
    %1617 = vdwg.mxu0
    %v1618 = vmul.f32 %v1570, %v561
    %v1619 = vmul.f32 %v1575, %v562
    %v1620 = vmul.f32 %v1580, %v563
    %v1621 = vmul.f32 %v1585, %v564
    %v1622 = vmul.f32 %v1590, %v565
    %v1623 = vmul.f32 %v1595, %v566
    %v1624 = vmul.f32 %v1600, %v567
    %v1625 = vmul.f32 %v1605, %v568
    %v1626 = vmul.f32 %v1610, %v569
    %v1627 = vmul.f32 %v1615, %v570
    %1628 = vmatprep.subr.mxu0 0.0
    %1629 = vmatpush1.msra.mxu0 0.0
    %1630 = vmatprep.subr.mxu0 0.0
    %1631 = vmatpush1.msra.mxu0 0.0
    %1632 = vmatprep.subr.mxu0 0.0
    %1633 = vmatpush1.msra.mxu0 0.0
    %1634 = vmatprep.subr.mxu0 0.0
    %1635 = vmatpush1.msra.mxu0 0.0
    %1636 = vmatprep.subr.mxu0 0.0
    %1637 = vmatpush1.msra.mxu0 0.0
    %1638 = vmatprep.subr.mxu0 0.0
    %1639 = vmatpush1.msra.mxu0 0.0
    %1640 = vmatprep.subr.mxu0 0.0
    %1641 = vmatpush1.msra.mxu0 %v1627
    %1642 = vmatprep.subr.mxu0 0.0
    %1643 = vmatpush1.msra.mxu0 %v1626
    %1644 = vmatprep.subr.mxu0 0.0
    %1645 = vmatpush1.msra.mxu0 %v1625
    %1646 = vmatprep.subr.mxu0 0.0
    %1647 = vmatpush1.msra.mxu0 %v1624
    %1648 = vmatprep.subr.mxu0 0.0
    %1649 = vmatpush1.msra.mxu0 %v1623
    %1650 = vmatprep.subr.mxu0 0.0
    %1651 = vmatpush1.msra.mxu0 %v1622
    %1652 = vmatprep.subr.mxu0 0.0
    %1653 = vmatpush1.msra.mxu0 %v1621
    %1654 = vmatprep.subr.mxu0 0.0
    %1655 = vmatpush1.msra.mxu0 %v1620
    %1656 = vmatprep.subr.mxu0 0.0
    %1657 = vmatpush1.msra.mxu0 %v1619
    %1658 = vmatprep.subr.mxu0 0.0
    %1659 = vmatpush1.msra.mxu0 %v1618
    %1660 = vmatprep.subr.mxu0 0.0
    %1661 = vmatpush2.msra.mxu0 0.0
    %1662 = vmatprep.subr.mxu0 0.0
    %1663 = vmatpush2.msra.mxu0 0.0
    %1664 = vmatprep.subr.mxu0 0.0
    %1665 = vmatpush2.msra.mxu0 0.0
    %1666 = vmatprep.subr.mxu0 0.0
    %1667 = vmatpush2.msra.mxu0 0.0
    %1668 = vmatprep.subr.mxu0 0.0
    %1669 = vmatpush2.msra.mxu0 0.0
    %1670 = vmatprep.subr.mxu0 0.0
    %1671 = vmatpush2.msra.mxu0 0.0
    %1672 = vmatprep.subr.mxu0 0.0
    %1673 = vmatpush2.msra.mxu0 0.0
    %1674 = vmatprep.subr.mxu0 0.0
    %1675 = vmatpush2.msra.mxu0 0.0
    %1676 = vmatprep.subr.mxu0 0.0
    %1677 = vmatpush2.msra.mxu0 0.0
    %1678 = vmatprep.subr.mxu0 0.0
    %1679 = vmatpush2.msra.mxu0 0.0
    %1680 = vmatprep.subr.mxu0 0.0
    %1681 = vmatpush2.msra.mxu0 0.0
    %1682 = vmatprep.subr.mxu0 0.0
    %1683 = vmatpush2.msra.mxu0 0.0
    %1684 = vmatprep.subr.mxu0 0.0
    %1685 = vmatpush2.msra.mxu0 0.0
    %1686 = vmatprep.subr.mxu0 0.0
    %1687 = vmatpush2.msra.mxu0 0.0
    %1688 = vmatprep.subr.mxu0 0.0
    %1689 = vmatpush2.msra.mxu0 0.0
    %1690 = vmatprep.subr.mxu0 0.0
    %1691 = vmatpush2.msra.mxu0 0.0
    %1692 = vmatprep.mubr.f32.mxu0 0.0
    %1693 = vmatmul.mubr.f32.gmra.mxu0 %v885
    %v1694 = vpop.f32.mrf.mxu0
    %v1695 = vadd.f32 0.0, %v1694
    %v1696 = vpop.f32.mrf.mxu0
    %1697 = vmatprep.mubr.f32.mxu0 0.0
    %1698 = vmatmul.mubr.f32.gmra.mxu0 %v888
    %v1699 = vpop.f32.mrf.mxu0
    %v1700 = vadd.f32 0.0, %v1699
    %v1701 = vpop.f32.mrf.mxu0
    %1702 = vdwg.mxu0
    %v1703 = vmul.f32 %v1415, %v1695
    %v1704 = vmul.f32 %v1420, %v1700
    %v1705 = vmul.f32 %v1425, %v1695
    %v1706 = vmul.f32 %v1430, %v1700
    %v1707 = vmul.f32 %v1435, %v1695
    %v1708 = vmul.f32 %v1440, %v1700
    %v1709 = vmul.f32 %v1445, %v1695
    %v1710 = vmul.f32 %v1450, %v1700
    %v1711 = vmul.f32 %v1455, %v1695
    %v1712 = vmul.f32 %v1460, %v1700
    %v1713 = vld [vmem:[#allocation4 + $0x140] sm:$0xff]
    %v1714 = vld [vmem:[#allocation4 + $0x148] sm:$0xff]
    %v1715 = vld [vmem:[#allocation4 + $0x150] sm:$0xff]
    %v1716 = vld [vmem:[#allocation4 + $0x158] sm:$0xff]
    %v1717 = vld [vmem:[#allocation4 + $0x160] sm:$0xff]
    %v1718 = vld [vmem:[#allocation4 + $0x168] sm:$0xff]
    %v1719 = vld [vmem:[#allocation4 + $0x170] sm:$0xff]
    %v1720 = vld [vmem:[#allocation4 + $0x178] sm:$0xff]
    %v1721 = vld [vmem:[#allocation4 + $0x180] sm:$0xff]
    %v1722 = vld [vmem:[#allocation4 + $0x188] sm:$0xff]
    %v1724 = vsel %vm883, %v1703, 0
    %v1727 = vsel %vm883, %v1704, 0
    %v1730 = vsel %vm883, %v1705, 0
    %v1733 = vsel %vm883, %v1706, 0
    %v1736 = vsel %vm883, %v1707, 0
    %v1739 = vsel %vm883, %v1708, 0
    %v1742 = vsel %vm883, %v1709, 0
    %v1745 = vsel %vm883, %v1710, 0
    %v1748 = vsel %vm883, %v1711, 0
    %v1751 = vsel %vm883, %v1712, 0
    %1753 = vmatprep.subr.mxu0 0.0
    %1754 = vmatpush1.msra.mxu0 0.0
    %1755 = vmatprep.subr.mxu0 0.0
    %1756 = vmatpush1.msra.mxu0 0.0
    %1757 = vmatprep.subr.mxu0 0.0
    %1758 = vmatpush1.msra.mxu0 0.0
    %1759 = vmatprep.subr.mxu0 0.0
    %1760 = vmatpush1.msra.mxu0 0.0
    %1761 = vmatprep.subr.mxu0 0.0
    %1762 = vmatpush1.msra.mxu0 0.0
    %1763 = vmatprep.subr.mxu0 0.0
    %1764 = vmatpush1.msra.mxu0 0.0
    %1765 = vmatprep.subr.mxu0 0.0
    %1766 = vmatpush1.msra.mxu0 %v1722
    %1767 = vmatprep.subr.mxu0 0.0
    %1768 = vmatpush1.msra.mxu0 %v1721
    %1769 = vmatprep.subr.mxu0 0.0
    %1770 = vmatpush1.msra.mxu0 %v1720
    %1771 = vmatprep.subr.mxu0 0.0
    %1772 = vmatpush1.msra.mxu0 %v1719
    %1773 = vmatprep.subr.mxu0 0.0
    %1774 = vmatpush1.msra.mxu0 %v1718
    %1775 = vmatprep.subr.mxu0 0.0
    %1776 = vmatpush1.msra.mxu0 %v1717
    %1777 = vmatprep.subr.mxu0 0.0
    %1778 = vmatpush1.msra.mxu0 %v1716
    %1779 = vmatprep.subr.mxu0 0.0
    %1780 = vmatpush1.msra.mxu0 %v1715
    %1781 = vmatprep.subr.mxu0 0.0
    %1782 = vmatpush1.msra.mxu0 %v1714
    %1783 = vmatprep.subr.mxu0 0.0
    %1784 = vmatpush1.msra.mxu0 %v1713
    %1785 = vmatprep.subr.mxu0 0.0
    %1786 = vmatpush2.msra.mxu0 0.0
    %1787 = vmatprep.subr.mxu0 0.0
    %1788 = vmatpush2.msra.mxu0 0.0
    %1789 = vmatprep.subr.mxu0 0.0
    %1790 = vmatpush2.msra.mxu0 0.0
    %1791 = vmatprep.subr.mxu0 0.0
    %1792 = vmatpush2.msra.mxu0 0.0
    %1793 = vmatprep.subr.mxu0 0.0
    %1794 = vmatpush2.msra.mxu0 0.0
    %1795 = vmatprep.subr.mxu0 0.0
    %1796 = vmatpush2.msra.mxu0 0.0
    %1797 = vmatprep.subr.mxu0 0.0
    %1798 = vmatpush2.msra.mxu0 0.0
    %1799 = vmatprep.subr.mxu0 0.0
    %1800 = vmatpush2.msra.mxu0 0.0
    %1801 = vmatprep.subr.mxu0 0.0
    %1802 = vmatpush2.msra.mxu0 0.0
    %1803 = vmatprep.subr.mxu0 0.0
    %1804 = vmatpush2.msra.mxu0 0.0
    %1805 = vmatprep.subr.mxu0 0.0
    %1806 = vmatpush2.msra.mxu0 0.0
    %1807 = vmatprep.subr.mxu0 0.0
    %1808 = vmatpush2.msra.mxu0 0.0
    %1809 = vmatprep.subr.mxu0 0.0
    %1810 = vmatpush2.msra.mxu0 0.0
    %1811 = vmatprep.subr.mxu0 0.0
    %1812 = vmatpush2.msra.mxu0 0.0
    %1813 = vmatprep.subr.mxu0 0.0
    %1814 = vmatpush2.msra.mxu0 0.0
    %1815 = vmatprep.subr.mxu0 0.0
    %1816 = vmatpush2.msra.mxu0 0.0
    %1817 = vmatprep.mubr.f32.mxu0 0.0
    %1818 = vmatmul.mubr.f32.gmra.mxu0 %v1724
    %v1819 = vpop.f32.mrf.mxu0
    %v1820 = vadd.f32 0.0, %v1819
    %v1821 = vpop.f32.mrf.mxu0
    %1822 = vmatprep.mubr.f32.mxu0 0.0
    %1823 = vmatmul.mubr.f32.gmra.mxu0 %v1727
    %v1824 = vpop.f32.mrf.mxu0
    %v1825 = vadd.f32 0.0, %v1824
    %v1826 = vpop.f32.mrf.mxu0
    %1827 = vmatprep.mubr.f32.mxu0 0.0
    %1828 = vmatmul.mubr.f32.gmra.mxu0 %v1730
    %v1829 = vpop.f32.mrf.mxu0
    %v1830 = vadd.f32 0.0, %v1829
    %v1831 = vpop.f32.mrf.mxu0
    %1832 = vmatprep.mubr.f32.mxu0 0.0
    %1833 = vmatmul.mubr.f32.gmra.mxu0 %v1733
    %v1834 = vpop.f32.mrf.mxu0
    %v1835 = vadd.f32 0.0, %v1834
    %v1836 = vpop.f32.mrf.mxu0
    %1837 = vmatprep.mubr.f32.mxu0 0.0
    %1838 = vmatmul.mubr.f32.gmra.mxu0 %v1736
    %v1839 = vpop.f32.mrf.mxu0
    %v1840 = vadd.f32 0.0, %v1839
    %v1841 = vpop.f32.mrf.mxu0
    %1842 = vmatprep.mubr.f32.mxu0 0.0
    %1843 = vmatmul.mubr.f32.gmra.mxu0 %v1739
    %v1844 = vpop.f32.mrf.mxu0
    %v1845 = vadd.f32 0.0, %v1844
    %v1846 = vpop.f32.mrf.mxu0
    %1847 = vmatprep.mubr.f32.mxu0 0.0
    %1848 = vmatmul.mubr.f32.gmra.mxu0 %v1742
    %v1849 = vpop.f32.mrf.mxu0
    %v1850 = vadd.f32 0.0, %v1849
    %v1851 = vpop.f32.mrf.mxu0
    %1852 = vmatprep.mubr.f32.mxu0 0.0
    %1853 = vmatmul.mubr.f32.gmra.mxu0 %v1745
    %v1854 = vpop.f32.mrf.mxu0
    %v1855 = vadd.f32 0.0, %v1854
    %v1856 = vpop.f32.mrf.mxu0
    %1857 = vmatprep.mubr.f32.mxu0 0.0
    %1858 = vmatmul.mubr.f32.gmra.mxu0 %v1748
    %v1859 = vpop.f32.mrf.mxu0
    %v1860 = vadd.f32 0.0, %v1859
    %v1861 = vpop.f32.mrf.mxu0
    %1862 = vmatprep.mubr.f32.mxu0 0.0
    %1863 = vmatmul.mubr.f32.gmra.mxu0 %v1751
    %v1864 = vpop.f32.mrf.mxu0
    %v1865 = vadd.f32 0.0, %v1864
    %v1866 = vpop.f32.mrf.mxu0
    %1867 = vdwg.mxu0
    %v1868 = vrcp.pop %v1294
    %v1869 = vrcp.pop %v1299
    %v1870 = vrcp.pop %v1304
    %v1871 = vrcp.pop %v1309
    %v1872 = vrcp.pop %v1314
    %v1873 = vrcp.pop %v1319
    %v1874 = vrcp.pop %v1324
    %v1875 = vrcp.pop %v1329
    %v1876 = vrcp.pop %v1334
    %v1877 = vrcp.pop %v1339
    %v1878 = vld [vmem:[#allocation4 + $0x190] sm:$0xf]
    %vm1879 = vcmask 31744
    %v1881 = vsel %vm1879, %v1868, 0
    %v1884 = vsel %vm1879, %v1869, 0
    %v1887 = vsel %vm1879, %v1870, 0
    %v1890 = vsel %vm1879, %v1871, 0
    %v1893 = vsel %vm1879, %v1872, 0
    %v1896 = vsel %vm1879, %v1873, 0
    %v1899 = vsel %vm1879, %v1874, 0
    %v1902 = vsel %vm1879, %v1875, 0
    %v1905 = vsel %vm1879, %v1876, 0
    %v1908 = vsel %vm1879, %v1877, 0
    %v1911 = vsel %vm225, %v1878, 0
    %1913 = vmatprep.subr.mxu0 0.0
    %1914 = vmatpush1.msra.mxu0 0.0
    %1915 = vmatprep.subr.mxu0 0.0
    %1916 = vmatpush1.msra.mxu0 0.0
    %1917 = vmatprep.subr.mxu0 0.0
    %1918 = vmatpush1.msra.mxu0 0.0
    %1919 = vmatprep.subr.mxu0 0.0
    %1920 = vmatpush1.msra.mxu0 0.0
    %1921 = vmatprep.subr.mxu0 0.0
    %1922 = vmatpush1.msra.mxu0 0.0
    %1923 = vmatprep.subr.mxu0 0.0
    %1924 = vmatpush1.msra.mxu0 0.0
    %1925 = vmatprep.subr.mxu0 0.0
    %1926 = vmatpush1.msra.mxu0 0.0
    %1927 = vmatprep.subr.mxu0 0.0
    %1928 = vmatpush1.msra.mxu0 0.0
    %1929 = vmatprep.subr.mxu0 0.0
    %1930 = vmatpush1.msra.mxu0 0.0
    %1931 = vmatprep.subr.mxu0 0.0
    %1932 = vmatpush1.msra.mxu0 0.0
    %1933 = vmatprep.subr.mxu0 0.0
    %1934 = vmatpush1.msra.mxu0 0.0
    %1935 = vmatprep.subr.mxu0 0.0
    %1936 = vmatpush1.msra.mxu0 0.0
    %1937 = vmatprep.subr.mxu0 0.0
    %1938 = vmatpush1.msra.mxu0 0.0
    %1939 = vmatprep.subr.mxu0 0.0
    %1940 = vmatpush1.msra.mxu0 0.0
    %1941 = vmatprep.subr.mxu0 0.0
    %1942 = vmatpush1.msra.mxu0 0.0
    %1943 = vmatprep.subr.mxu0 0.0
    %1944 = vmatpush1.msra.mxu0 %v1911
    %1945 = vmatprep.subr.mxu0 0.0
    %1946 = vmatpush2.msra.mxu0 0.0
    %1947 = vmatprep.subr.mxu0 0.0
    %1948 = vmatpush2.msra.mxu0 0.0
    %1949 = vmatprep.subr.mxu0 0.0
    %1950 = vmatpush2.msra.mxu0 0.0
    %1951 = vmatprep.subr.mxu0 0.0
    %1952 = vmatpush2.msra.mxu0 0.0
    %1953 = vmatprep.subr.mxu0 0.0
    %1954 = vmatpush2.msra.mxu0 0.0
    %1955 = vmatprep.subr.mxu0 0.0
    %1956 = vmatpush2.msra.mxu0 0.0
    %1957 = vmatprep.subr.mxu0 0.0
    %1958 = vmatpush2.msra.mxu0 0.0
    %1959 = vmatprep.subr.mxu0 0.0
    %1960 = vmatpush2.msra.mxu0 0.0
    %1961 = vmatprep.subr.mxu0 0.0
    %1962 = vmatpush2.msra.mxu0 0.0
    %1963 = vmatprep.subr.mxu0 0.0
    %1964 = vmatpush2.msra.mxu0 0.0
    %1965 = vmatprep.subr.mxu0 0.0
    %1966 = vmatpush2.msra.mxu0 0.0
    %1967 = vmatprep.subr.mxu0 0.0
    %1968 = vmatpush2.msra.mxu0 0.0
    %1969 = vmatprep.subr.mxu0 0.0
    %1970 = vmatpush2.msra.mxu0 0.0
    %1971 = vmatprep.subr.mxu0 0.0
    %1972 = vmatpush2.msra.mxu0 0.0
    %1973 = vmatprep.subr.mxu0 0.0
    %1974 = vmatpush2.msra.mxu0 0.0
    %1975 = vmatprep.subr.mxu0 0.0
    %1976 = vmatpush2.msra.mxu0 0.0
    %1977 = vmatprep.mubr.f32.mxu0 0.0
    %1978 = vmatmul.mubr.f32.gmra.mxu0 %v1881
    %v1979 = vpop.f32.mrf.mxu0
    %v1980 = vadd.f32 0.0, %v1979
    %v1981 = vpop.f32.mrf.mxu0
    %1982 = vmatprep.mubr.f32.mxu0 0.0
    %1983 = vmatmul.mubr.f32.gmra.mxu0 %v1884
    %v1984 = vpop.f32.mrf.mxu0
    %v1985 = vadd.f32 0.0, %v1984
    %v1986 = vpop.f32.mrf.mxu0
    %1987 = vmatprep.mubr.f32.mxu0 0.0
    %1988 = vmatmul.mubr.f32.gmra.mxu0 %v1887
    %v1989 = vpop.f32.mrf.mxu0
    %v1990 = vadd.f32 0.0, %v1989
    %v1991 = vpop.f32.mrf.mxu0
    %1992 = vmatprep.mubr.f32.mxu0 0.0
    %1993 = vmatmul.mubr.f32.gmra.mxu0 %v1890
    %v1994 = vpop.f32.mrf.mxu0
    %v1995 = vadd.f32 0.0, %v1994
    %v1996 = vpop.f32.mrf.mxu0
    %1997 = vmatprep.mubr.f32.mxu0 0.0
    %1998 = vmatmul.mubr.f32.gmra.mxu0 %v1893
    %v1999 = vpop.f32.mrf.mxu0
    %v2000 = vadd.f32 0.0, %v1999
    %v2001 = vpop.f32.mrf.mxu0
    %2002 = vmatprep.mubr.f32.mxu0 0.0
    %2003 = vmatmul.mubr.f32.gmra.mxu0 %v1896
    %v2004 = vpop.f32.mrf.mxu0
    %v2005 = vadd.f32 0.0, %v2004
    %v2006 = vpop.f32.mrf.mxu0
    %2007 = vmatprep.mubr.f32.mxu0 0.0
    %2008 = vmatmul.mubr.f32.gmra.mxu0 %v1899
    %v2009 = vpop.f32.mrf.mxu0
    %v2010 = vadd.f32 0.0, %v2009
    %v2011 = vpop.f32.mrf.mxu0
    %2012 = vmatprep.mubr.f32.mxu0 0.0
    %2013 = vmatmul.mubr.f32.gmra.mxu0 %v1902
    %v2014 = vpop.f32.mrf.mxu0
    %v2015 = vadd.f32 0.0, %v2014
    %v2016 = vpop.f32.mrf.mxu0
    %2017 = vmatprep.mubr.f32.mxu0 0.0
    %2018 = vmatmul.mubr.f32.gmra.mxu0 %v1905
    %v2019 = vpop.f32.mrf.mxu0
    %v2020 = vadd.f32 0.0, %v2019
    %v2021 = vpop.f32.mrf.mxu0
    %2022 = vmatprep.mubr.f32.mxu0 0.0
    %2023 = vmatmul.mubr.f32.gmra.mxu0 %v1908
    %v2024 = vpop.f32.mrf.mxu0
    %v2025 = vadd.f32 0.0, %v2024
    %v2026 = vpop.f32.mrf.mxu0
    %2027 = vdwg.mxu0
    %v2028 = vmul.f32 %v1820, %v1980
    %v2029 = vmul.f32 %v1825, %v1985
    %v2030 = vmul.f32 %v1830, %v1990
    %v2031 = vmul.f32 %v1835, %v1995
    %v2032 = vmul.f32 %v1840, %v2000
    %v2033 = vmul.f32 %v1845, %v2005
    %v2034 = vmul.f32 %v1850, %v2010
    %v2035 = vmul.f32 %v1855, %v2015
    %v2036 = vmul.f32 %v1860, %v2020
    %v2037 = vmul.f32 %v1865, %v2025
    %v2038 = vpack.c.bf16 %v2029, %v2028
    %v2039 = vpack.c.bf16 %v2031, %v2030
    %v2040 = vpack.c.bf16 %v2033, %v2032
    %v2041 = vpack.c.bf16 %v2035, %v2034
    %v2042 = vpack.c.bf16 %v2037, %v2036
    %v2043 = vld [vmem:[#allocation2 + $0x30] sm:$0xf]
    %v2044 = vld [vmem:[#allocation2 + $0x34] sm:$0xf]
    %v2045 = vld [vmem:[#allocation4 + $0x8] sm:$0x1]
    %v2046 = vlaneseq
    %v2047 = vshrl.u32 %v2046, 7
    %v2048 = vsub.s32 0, %v2047
    %v2049 = vrot.slane %v2045, %v2048
    %v2052 = vunpack.c.l.b16 %v2043
    %v2053 = vunpack.c.l.b16 %v2044
    %v2054 = vpack.c.b16 %v2053, %v2052
    %v2057 = vsel %vm151, %v2038, 0
    %v2060 = vsel %vm151, %v2039, 0
    %v2063 = vsel %vm151, %v2040, 0
    %v2066 = vsel %vm151, %v2041, 0
    %v2069 = vsel %vm151, %v2042, 0
    %2071 = vmatprep.subr.bf16.mxu0 0
    %2072 = vmatpush1.bf16.msra.mxu0 0
    %2073 = vmatprep.subr.bf16.mxu0 0
    %2074 = vmatpush1.bf16.msra.mxu0 0
    %2075 = vmatprep.subr.bf16.mxu0 0
    %2076 = vmatpush1.bf16.msra.mxu0 0
    %2077 = vmatprep.subr.bf16.mxu0 0
    %2078 = vmatpush1.bf16.msra.mxu0 0
    %2079 = vmatprep.subr.bf16.mxu0 0
    %2080 = vmatpush1.bf16.msra.mxu0 0
    %2081 = vmatprep.subr.bf16.mxu0 0
    %2082 = vmatpush1.bf16.msra.mxu0 0
    %2083 = vmatprep.subr.bf16.mxu0 0
    %2084 = vmatpush1.bf16.msra.mxu0 0
    %2085 = vmatprep.subr.bf16.mxu0 0
    %2086 = vmatpush1.bf16.msra.mxu0 %v2054
    %2087 = vmatprep.subr.bf16.mxu0 0
    %2088 = vmatpush2.bf16.msra.mxu0 0
    %2089 = vmatprep.subr.bf16.mxu0 0
    %2090 = vmatpush2.bf16.msra.mxu0 0
    %2091 = vmatprep.subr.bf16.mxu0 0
    %2092 = vmatpush2.bf16.msra.mxu0 0
    %2093 = vmatprep.subr.bf16.mxu0 0
    %2094 = vmatpush2.bf16.msra.mxu0 0
    %2095 = vmatprep.subr.bf16.mxu0 0
    %2096 = vmatpush2.bf16.msra.mxu0 0
    %2097 = vmatprep.subr.bf16.mxu0 0
    %2098 = vmatpush2.bf16.msra.mxu0 0
    %2099 = vmatprep.subr.bf16.mxu0 0
    %2100 = vmatpush2.bf16.msra.mxu0 0
    %2101 = vmatprep.subr.bf16.mxu0 0
    %2102 = vmatpush2.bf16.msra.mxu0 0
    %2103 = vmatprep.mubr.bf16.mxu0 0
    %2104 = vmatmul.mubr.bf16.gmra.mxu0 %v2057
    %v2105 = vpop.f32.mrf.mxu0
    %v2106 = vadd.f32 %v2049, %v2105
    %v2107 = vpop.f32.mrf.mxu0
    %v2108 = vpop.f32.mrf.mxu0
    %v2109 = vadd.f32 %v2049, %v2108
    %v2110 = vpop.f32.mrf.mxu0
    %2111 = vmatprep.mubr.bf16.mxu0 0
    %2112 = vmatmul.mubr.bf16.gmra.mxu0 %v2060
    %v2113 = vpop.f32.mrf.mxu0
    %v2114 = vpop.f32.mrf.mxu0
    %v2115 = vpop.f32.mrf.mxu0
    %v2116 = vpop.f32.mrf.mxu0
    %2117 = vmatprep.mubr.bf16.mxu0 0
    %2118 = vmatmul.mubr.bf16.gmra.mxu0 %v2063
    %v2119 = vpop.f32.mrf.mxu0
    %v2120 = vadd.f32 %v2049, %v2119
    %v2121 = vpop.f32.mrf.mxu0
    %v2122 = vpop.f32.mrf.mxu0
    %v2123 = vadd.f32 %v2049, %v2122
    %v2124 = vpop.f32.mrf.mxu0
    %2125 = vmatprep.mubr.bf16.mxu0 0
    %2126 = vmatmul.mubr.bf16.gmra.mxu0 %v2066
    %v2127 = vpop.f32.mrf.mxu0
    %v2128 = vadd.f32 %v2049, %v2127
    %v2129 = vpop.f32.mrf.mxu0
    %v2130 = vpop.f32.mrf.mxu0
    %v2131 = vadd.f32 %v2049, %v2130
    %v2132 = vpop.f32.mrf.mxu0
    %2133 = vmatprep.mubr.bf16.mxu0 0
    %2134 = vmatmul.mubr.bf16.gmra.mxu0 %v2069
    %v2135 = vpop.f32.mrf.mxu0
    %v2136 = vadd.f32 %v2049, %v2135
    %v2137 = vpop.f32.mrf.mxu0
    %v2138 = vpop.f32.mrf.mxu0
    %v2139 = vadd.f32 %v2049, %v2138
    %v2140 = vpop.f32.mrf.mxu0
    %2141 = vdwg.mxu0
    %v2142 = vadd.f32 %v273, %v2106
    %v2143 = vadd.f32 %v273, %v2109
    %v2144 = vadd.f32 %v196, %v2120
    %v2145 = vadd.f32 %v199, %v2123
    %v2146 = vadd.f32 %v204, %v2128
    %v2147 = vadd.f32 %v207, %v2131
    %v2148 = vadd.f32 %v212, %v2136
    %v2149 = vadd.f32 %v215, %v2139
    %v2150 = vld [vmem:[#allocation4 + $0x198] sm:$0xf]
    %v2152 = vsel %vm151, %v2150, 0
    %2154 = vmatprep.subr.mxu0 0.0
    %2155 = vmatpush1.msra.mxu0 0.0
    %2156 = vmatprep.subr.mxu0 0.0
    %2157 = vmatpush1.msra.mxu0 0.0
    %2158 = vmatprep.subr.mxu0 0.0
    %2159 = vmatpush1.msra.mxu0 0.0
    %2160 = vmatprep.subr.mxu0 0.0
    %2161 = vmatpush1.msra.mxu0 0.0
    %2162 = vmatprep.subr.mxu0 0.0
    %2163 = vmatpush1.msra.mxu0 0.0
    %2164 = vmatprep.subr.mxu0 0.0
    %2165 = vmatpush1.msra.mxu0 0.0
    %2166 = vmatprep.subr.mxu0 0.0
    %2167 = vmatpush1.msra.mxu0 0.0
    %2168 = vmatprep.subr.mxu0 0.0
    %2169 = vmatpush1.msra.mxu0 0.0
    %2170 = vmatprep.subr.mxu0 0.0
    %2171 = vmatpush1.msra.mxu0 0.0
    %2172 = vmatprep.subr.mxu0 0.0
    %2173 = vmatpush1.msra.mxu0 0.0
    %2174 = vmatprep.subr.mxu0 0.0
    %2175 = vmatpush1.msra.mxu0 0.0
    %2176 = vmatprep.subr.mxu0 0.0
    %2177 = vmatpush1.msra.mxu0 0.0
    %2178 = vmatprep.subr.mxu0 0.0
    %2179 = vmatpush1.msra.mxu0 0.0
    %2180 = vmatprep.subr.mxu0 0.0
    %2181 = vmatpush1.msra.mxu0 0.0
    %2182 = vmatprep.subr.mxu0 0.0
    %2183 = vmatpush1.msra.mxu0 %v2143
    %2184 = vmatprep.subr.mxu0 0.0
    %2185 = vmatpush1.msra.mxu0 %v2142
    %2186 = vmatprep.subr.mxu0 0.0
    %2187 = vmatpush2.msra.mxu0 0.0
    %2188 = vmatprep.subr.mxu0 0.0
    %2189 = vmatpush2.msra.mxu0 0.0
    %2190 = vmatprep.subr.mxu0 0.0
    %2191 = vmatpush2.msra.mxu0 0.0
    %2192 = vmatprep.subr.mxu0 0.0
    %2193 = vmatpush2.msra.mxu0 0.0
    %2194 = vmatprep.subr.mxu0 0.0
    %2195 = vmatpush2.msra.mxu0 0.0
    %2196 = vmatprep.subr.mxu0 0.0
    %2197 = vmatpush2.msra.mxu0 0.0
    %2198 = vmatprep.subr.mxu0 0.0
    %2199 = vmatpush2.msra.mxu0 0.0
    %2200 = vmatprep.subr.mxu0 0.0
    %2201 = vmatpush2.msra.mxu0 0.0
    %2202 = vmatprep.subr.mxu0 0.0
    %2203 = vmatpush2.msra.mxu0 0.0
    %2204 = vmatprep.subr.mxu0 0.0
    %2205 = vmatpush2.msra.mxu0 0.0
    %2206 = vmatprep.subr.mxu0 0.0
    %2207 = vmatpush2.msra.mxu0 0.0
    %2208 = vmatprep.subr.mxu0 0.0
    %2209 = vmatpush2.msra.mxu0 0.0
    %2210 = vmatprep.subr.mxu0 0.0
    %2211 = vmatpush2.msra.mxu0 0.0
    %2212 = vmatprep.subr.mxu0 0.0
    %2213 = vmatpush2.msra.mxu0 0.0
    %2214 = vmatprep.subr.mxu0 0.0
    %2215 = vmatpush2.msra.mxu0 0.0
    %2216 = vmatprep.subr.mxu0 0.0
    %2217 = vmatpush2.msra.mxu0 0.0
    %2218 = vmatprep.mubr.f32.mxu0 0.0
    %2219 = vmatmul.mubr.f32.gmra.mxu0 %v2152
    %v2220 = vpop.f32.mrf.mxu0
    %v2221 = vadd.f32 0.0, %v2220
    %v2222 = vpop.f32.mrf.mxu0
    %2223 = vdwg.mxu0
    %v2224 = vld [vmem:[#allocation2 + $0x38] sm:$0xf]
    %v2225 = vld [vmem:[#allocation2 + $0x3c] sm:$0xf]
    %v2226 = vld [vmem:[#allocation2 + $0x40] sm:$0xf]
    %v2227 = vld [vmem:[#allocation2 + $0x44] sm:$0xf]
    %v2228 = vld [vmem:[#allocation2 + $0x48] sm:$0xf]
    %v2229 = vld [vmem:[#allocation2 + $0x4c] sm:$0xf]
    %v2230 = vpack.c.bf16 %v2221, %v2221
    %v2232 = vrot.slane %v2230, 1
    %v2235 = vunpack.c.l.b16 %v2226
    %v2236 = vunpack.c.l.b16 %v2227
    %v2237 = vpack.c.b16 %v2236, %v2235
    %v2240 = vsel %vm151, %v2232, 0
    %2242 = vmatprep.subr.bf16.mxu0 0
    %2243 = vmatpush1.bf16.msra.mxu0 0
    %2244 = vmatprep.subr.bf16.mxu0 0
    %2245 = vmatpush1.bf16.msra.mxu0 0
    %2246 = vmatprep.subr.bf16.mxu0 0
    %2247 = vmatpush1.bf16.msra.mxu0 0
    %2248 = vmatprep.subr.bf16.mxu0 0
    %2249 = vmatpush1.bf16.msra.mxu0 0
    %2250 = vmatprep.subr.bf16.mxu0 0
    %2251 = vmatpush1.bf16.msra.mxu0 0
    %2252 = vmatprep.subr.bf16.mxu0 0
    %2253 = vmatpush1.bf16.msra.mxu0 0
    %2254 = vmatprep.subr.bf16.mxu0 0
    %2255 = vmatpush1.bf16.msra.mxu0 0
    %2256 = vmatprep.subr.bf16.mxu0 0
    %2257 = vmatpush1.bf16.msra.mxu0 %v2237
    %2258 = vmatprep.subr.bf16.mxu0 0
    %2259 = vmatpush2.bf16.msra.mxu0 0
    %2260 = vmatprep.subr.bf16.mxu0 0
    %2261 = vmatpush2.bf16.msra.mxu0 0
    %2262 = vmatprep.subr.bf16.mxu0 0
    %2263 = vmatpush2.bf16.msra.mxu0 0
    %2264 = vmatprep.subr.bf16.mxu0 0
    %2265 = vmatpush2.bf16.msra.mxu0 0
    %2266 = vmatprep.subr.bf16.mxu0 0
    %2267 = vmatpush2.bf16.msra.mxu0 0
    %2268 = vmatprep.subr.bf16.mxu0 0
    %2269 = vmatpush2.bf16.msra.mxu0 0
    %2270 = vmatprep.subr.bf16.mxu0 0
    %2271 = vmatpush2.bf16.msra.mxu0 0
    %2272 = vmatprep.subr.bf16.mxu0 0
    %2273 = vmatpush2.bf16.msra.mxu0 0
    %2274 = vmatprep.mubr.bf16.mxu0 0
    %2275 = vmatmul.mubr.bf16.gmra.mxu0 %v2240
    %v2276 = vpop.f32.mrf.mxu0
    %v2277 = vadd.f32 0.0, %v2276
    %v2278 = vpop.f32.mrf.mxu0
    %v2279 = vpop.f32.mrf.mxu0
    %v2280 = vpop.f32.mrf.mxu0
    %2281 = vdwg.mxu0
    %v2284 = vunpack.c.l.b16 %v2224
    %v2285 = vunpack.c.l.b16 %v2225
    %v2286 = vpack.c.b16 %v2285, %v2284
    %v2289 = vsel %vm151, %v2230, 0
    %2291 = vmatprep.subr.bf16.mxu0 0
    %2292 = vmatpush1.bf16.msra.mxu0 0
    %2293 = vmatprep.subr.bf16.mxu0 0
    %2294 = vmatpush1.bf16.msra.mxu0 0
    %2295 = vmatprep.subr.bf16.mxu0 0
    %2296 = vmatpush1.bf16.msra.mxu0 0
    %2297 = vmatprep.subr.bf16.mxu0 0
    %2298 = vmatpush1.bf16.msra.mxu0 0
    %2299 = vmatprep.subr.bf16.mxu0 0
    %2300 = vmatpush1.bf16.msra.mxu0 0
    %2301 = vmatprep.subr.bf16.mxu0 0
    %2302 = vmatpush1.bf16.msra.mxu0 0
    %2303 = vmatprep.subr.bf16.mxu0 0
    %2304 = vmatpush1.bf16.msra.mxu0 0
    %2305 = vmatprep.subr.bf16.mxu0 0
    %2306 = vmatpush1.bf16.msra.mxu0 %v2286
    %2307 = vmatprep.subr.bf16.mxu0 0
    %2308 = vmatpush2.bf16.msra.mxu0 0
    %2309 = vmatprep.subr.bf16.mxu0 0
    %2310 = vmatpush2.bf16.msra.mxu0 0
    %2311 = vmatprep.subr.bf16.mxu0 0
    %2312 = vmatpush2.bf16.msra.mxu0 0
    %2313 = vmatprep.subr.bf16.mxu0 0
    %2314 = vmatpush2.bf16.msra.mxu0 0
    %2315 = vmatprep.subr.bf16.mxu0 0
    %2316 = vmatpush2.bf16.msra.mxu0 0
    %2317 = vmatprep.subr.bf16.mxu0 0
    %2318 = vmatpush2.bf16.msra.mxu0 0
    %2319 = vmatprep.subr.bf16.mxu0 0
    %2320 = vmatpush2.bf16.msra.mxu0 0
    %2321 = vmatprep.subr.bf16.mxu0 0
    %2322 = vmatpush2.bf16.msra.mxu0 0
    %2323 = vmatprep.mubr.bf16.mxu0 0
    %2324 = vmatmul.mubr.bf16.gmra.mxu0 %v2289
    %v2325 = vpop.f32.mrf.mxu0
    %v2326 = vadd.f32 %v2277, %v2325
    %v2327 = vpop.f32.mrf.mxu0
    %v2328 = vpop.f32.mrf.mxu0
    %v2329 = vpop.f32.mrf.mxu0
    %2330 = vdwg.mxu0
    %v2331 = vpack.c.bf16 %v264, %v264
    %v2334 = vunpack.c.l.b16 %v2228
    %v2335 = vunpack.c.l.b16 %v2229
    %v2336 = vpack.c.b16 %v2335, %v2334
    %v2339 = vsel %vm151, %v2331, 0
    %2341 = vmatprep.subr.bf16.mxu0 0
    %2342 = vmatpush1.bf16.msra.mxu0 0
    %2343 = vmatprep.subr.bf16.mxu0 0
    %2344 = vmatpush1.bf16.msra.mxu0 0
    %2345 = vmatprep.subr.bf16.mxu0 0
    %2346 = vmatpush1.bf16.msra.mxu0 0
    %2347 = vmatprep.subr.bf16.mxu0 0
    %2348 = vmatpush1.bf16.msra.mxu0 0
    %2349 = vmatprep.subr.bf16.mxu0 0
    %2350 = vmatpush1.bf16.msra.mxu0 0
    %2351 = vmatprep.subr.bf16.mxu0 0
    %2352 = vmatpush1.bf16.msra.mxu0 0
    %2353 = vmatprep.subr.bf16.mxu0 0
    %2354 = vmatpush1.bf16.msra.mxu0 0
    %2355 = vmatprep.subr.bf16.mxu0 0
    %2356 = vmatpush1.bf16.msra.mxu0 %v2336
    %2357 = vmatprep.subr.bf16.mxu0 0
    %2358 = vmatpush2.bf16.msra.mxu0 0
    %2359 = vmatprep.subr.bf16.mxu0 0
    %2360 = vmatpush2.bf16.msra.mxu0 0
    %2361 = vmatprep.subr.bf16.mxu0 0
    %2362 = vmatpush2.bf16.msra.mxu0 0
    %2363 = vmatprep.subr.bf16.mxu0 0
    %2364 = vmatpush2.bf16.msra.mxu0 0
    %2365 = vmatprep.subr.bf16.mxu0 0
    %2366 = vmatpush2.bf16.msra.mxu0 0
    %2367 = vmatprep.subr.bf16.mxu0 0
    %2368 = vmatpush2.bf16.msra.mxu0 0
    %2369 = vmatprep.subr.bf16.mxu0 0
    %2370 = vmatpush2.bf16.msra.mxu0 0
    %2371 = vmatprep.subr.bf16.mxu0 0
    %2372 = vmatpush2.bf16.msra.mxu0 0
    %2373 = vmatprep.mubr.bf16.mxu0 0
    %2374 = vmatmul.mubr.bf16.gmra.mxu0 %v2339
    %v2375 = vpop.f32.mrf.mxu0
    %v2376 = vadd.f32 0.0, %v2375
    %v2377 = vpop.f32.mrf.mxu0
    %v2378 = vpop.f32.mrf.mxu0
    %v2379 = vpop.f32.mrf.mxu0
    %2380 = vdwg.mxu0
    %v2381 = vadd.f32 %v2326, %v2376
    %v2382 = vld [vmem:[#allocation4 + $0x10] sm:$0x1]
    %v2383 = vlaneseq
    %v2384 = vshrl.u32 %v2383, 7
    %v2385 = vsub.s32 0, %v2384
    %v2386 = vrot.slane %v2382, %v2385
    %v2387 = vadd.f32 %v2381, %v2386
    %v2388 = vmax.f32 %v2387, 0.0
    %v2389 = vpack.c.bf16 %v2388, %v2388
    %v2390 = vld [vmem:[#allocation2 + $0x50] sm:$0xf]
    %v2391 = vld [vmem:[#allocation2 + $0x54] sm:$0xf]
    %v2392 = vld [vmem:[#allocation2 + $0x58] sm:$0xf]
    %v2393 = vld [vmem:[#allocation2 + $0x5c] sm:$0xf]
    %v2394 = vld [vmem:[#allocation4 + $0x18] sm:$0x1]
    %v2395 = vlaneseq
    %v2396 = vshrl.u32 %v2395, 7
    %v2397 = vsub.s32 0, %v2396
    %v2398 = vrot.slane %v2394, %v2397
    %v2403 = vunpack.c.l.b16 %v2390
    %v2404 = vunpack.c.l.b16 %v2391
    %v2405 = vunpack.c.l.b16 %v2392
    %v2406 = vunpack.c.l.b16 %v2393
    %v2407 = vpack.c.b16 %v2404, %v2403
    %v2408 = vpack.c.b16 %v2406, %v2405
    %vm2411 = vcmask 261120
    %v2413 = vsel %vm2411, %v2389, 0
    %2415 = vmatprep.subr.bf16.mxu0 0
    %2416 = vmatpush1.bf16.msra.mxu0 0
    %2417 = vmatprep.subr.bf16.mxu0 0
    %2418 = vmatpush1.bf16.msra.mxu0 0
    %2419 = vmatprep.subr.bf16.mxu0 0
    %2420 = vmatpush1.bf16.msra.mxu0 0
    %2421 = vmatprep.subr.bf16.mxu0 0
    %2422 = vmatpush1.bf16.msra.mxu0 0
    %2423 = vmatprep.subr.bf16.mxu0 0
    %2424 = vmatpush1.bf16.msra.mxu0 0
    %2425 = vmatprep.subr.bf16.mxu0 0
    %2426 = vmatpush1.bf16.msra.mxu0 0
    %2427 = vmatprep.subr.bf16.mxu0 0
    %2428 = vmatpush1.bf16.msra.mxu0 %v2408
    %2429 = vmatprep.subr.bf16.mxu0 0
    %2430 = vmatpush1.bf16.msra.mxu0 %v2407
    %2431 = vmatprep.subr.bf16.mxu0 0
    %2432 = vmatpush2.bf16.msra.mxu0 0
    %2433 = vmatprep.subr.bf16.mxu0 0
    %2434 = vmatpush2.bf16.msra.mxu0 0
    %2435 = vmatprep.subr.bf16.mxu0 0
    %2436 = vmatpush2.bf16.msra.mxu0 0
    %2437 = vmatprep.subr.bf16.mxu0 0
    %2438 = vmatpush2.bf16.msra.mxu0 0
    %2439 = vmatprep.subr.bf16.mxu0 0
    %2440 = vmatpush2.bf16.msra.mxu0 0
    %2441 = vmatprep.subr.bf16.mxu0 0
    %2442 = vmatpush2.bf16.msra.mxu0 0
    %2443 = vmatprep.subr.bf16.mxu0 0
    %2444 = vmatpush2.bf16.msra.mxu0 0
    %2445 = vmatprep.subr.bf16.mxu0 0
    %2446 = vmatpush2.bf16.msra.mxu0 0
    %2447 = vmatprep.mubr.bf16.mxu0 0
    %2448 = vmatmul.mubr.bf16.gmra.mxu0 %v2413
    %v2449 = vpop.f32.mrf.mxu0
    %v2450 = vadd.f32 %v2398, %v2449
    %v2451 = vpop.f32.mrf.mxu0
    %v2452 = vpop.f32.mrf.mxu0
    %v2453 = vpop.f32.mrf.mxu0
    %2454 = vdwg.mxu0
    %v2455 = vpack.c.bf16 %v2450, %v2450
    %v2456 = vld [vmem:[#allocation2 + $0x60] sm:$0xf]
    %v2457 = vld [vmem:[#allocation2 + $0x64] sm:$0xf]
    %v2458 = vld [vmem:[#allocation2 + $0x68] sm:$0xf]
    %v2459 = vld [vmem:[#allocation2 + $0x6c] sm:$0xf]
    %v2460 = vld [vmem:[#allocation4 + $0x20] sm:$0x1]
    %v2461 = vlaneseq
    %v2462 = vshrl.u32 %v2461, 7
    %v2463 = vsub.s32 0, %v2462
    %v2464 = vrot.slane %v2460, %v2463
    %v2469 = vunpack.c.l.b16 %v2456
    %v2470 = vunpack.c.l.b16 %v2457
    %v2471 = vunpack.c.l.b16 %v2458
    %v2472 = vunpack.c.l.b16 %v2459
    %v2473 = vpack.c.b16 %v2470, %v2469
    %v2474 = vpack.c.b16 %v2472, %v2471
    %v2478 = vsel %vm2411, %v2455, 0
    %2480 = vmatprep.subr.bf16.mxu0 0
    %2481 = vmatpush1.bf16.msra.mxu0 0
    %2482 = vmatprep.subr.bf16.mxu0 0
    %2483 = vmatpush1.bf16.msra.mxu0 0
    %2484 = vmatprep.subr.bf16.mxu0 0
    %2485 = vmatpush1.bf16.msra.mxu0 0
    %2486 = vmatprep.subr.bf16.mxu0 0
    %2487 = vmatpush1.bf16.msra.mxu0 0
    %2488 = vmatprep.subr.bf16.mxu0 0
    %2489 = vmatpush1.bf16.msra.mxu0 0
    %2490 = vmatprep.subr.bf16.mxu0 0
    %2491 = vmatpush1.bf16.msra.mxu0 0
    %2492 = vmatprep.subr.bf16.mxu0 0
    %2493 = vmatpush1.bf16.msra.mxu0 %v2474
    %2494 = vmatprep.subr.bf16.mxu0 0
    %2495 = vmatpush1.bf16.msra.mxu0 %v2473
    %2496 = vmatprep.subr.bf16.mxu0 0
    %2497 = vmatpush2.bf16.msra.mxu0 0
    %2498 = vmatprep.subr.bf16.mxu0 0
    %2499 = vmatpush2.bf16.msra.mxu0 0
    %2500 = vmatprep.subr.bf16.mxu0 0
    %2501 = vmatpush2.bf16.msra.mxu0 0
    %2502 = vmatprep.subr.bf16.mxu0 0
    %2503 = vmatpush2.bf16.msra.mxu0 0
    %2504 = vmatprep.subr.bf16.mxu0 0
    %2505 = vmatpush2.bf16.msra.mxu0 0
    %2506 = vmatprep.subr.bf16.mxu0 0
    %2507 = vmatpush2.bf16.msra.mxu0 0
    %2508 = vmatprep.subr.bf16.mxu0 0
    %2509 = vmatpush2.bf16.msra.mxu0 0
    %2510 = vmatprep.subr.bf16.mxu0 0
    %2511 = vmatpush2.bf16.msra.mxu0 0
    %2512 = vmatprep.mubr.bf16.mxu0 0
    %2513 = vmatmul.mubr.bf16.gmra.mxu0 %v2478
    %v2514 = vpop.f32.mrf.mxu0
    %v2515 = vadd.f32 %v2464, %v2514
    %v2516 = vpop.f32.mrf.mxu0
    %v2517 = vpop.f32.mrf.mxu0
    %v2518 = vpop.f32.mrf.mxu0
    %2519 = vdwg.mxu0
    %vm2520 = vcmask 9216
    %v2521 = vsel %vm2520, %v2515, -inf
    %2522 = vmax.xlane.f32.xlu0 %v2521
    %v2523 = vpop.xlane.xlu0 %2522
    %v2524 = vsub.f32 %v2515, %v2523
    %v2525 = vmul.f32 %v2524, 1.442695
    %v2526 = vpow.pop %v2525
    %v2527 = vsel %vm2520, %v2526, 0.0
    %2528 = vadd.xlane.f32.xlu0 %v2527
    %v2529 = vpop.xlane.xlu0 %2528
    %v2530 = vrcp.pop %v2529
    %v2531 = vmul.f32 %v2526, %v2530
    %v2532 = vld [vmem:[#allocation4 + $0x1d8] sm:$0x3]
    %v2533 = vpack.c.bf16 %v2145, %v2144
    %v2534 = vpack.c.bf16 %v2147, %v2146
    %v2535 = vpack.c.bf16 %v2149, %v2148
    %v2536 = vld [vmem:[#allocation2 + $0x70] sm:$0xf]
    %v2537 = vld [vmem:[#allocation2 + $0x74] sm:$0xf]
    %v2540 = vunpack.c.l.b16 %v2536
    %v2541 = vunpack.c.l.b16 %v2537
    %v2542 = vpack.c.b16 %v2541, %v2540
    %v2545 = vsel %vm151, %v2533, 0
    %v2548 = vsel %vm151, %v2534, 0
    %v2551 = vsel %vm151, %v2535, 0
    %2553 = vmatprep.subr.bf16.mxu0 0
    %2554 = vmatpush1.bf16.msra.mxu0 0
    %2555 = vmatprep.subr.bf16.mxu0 0
    %2556 = vmatpush1.bf16.msra.mxu0 0
    %2557 = vmatprep.subr.bf16.mxu0 0
    %2558 = vmatpush1.bf16.msra.mxu0 0
    %2559 = vmatprep.subr.bf16.mxu0 0
    %2560 = vmatpush1.bf16.msra.mxu0 0
    %2561 = vmatprep.subr.bf16.mxu0 0
    %2562 = vmatpush1.bf16.msra.mxu0 0
    %2563 = vmatprep.subr.bf16.mxu0 0
    %2564 = vmatpush1.bf16.msra.mxu0 0
    %2565 = vmatprep.subr.bf16.mxu0 0
    %2566 = vmatpush1.bf16.msra.mxu0 0
    %2567 = vmatprep.subr.bf16.mxu0 0
    %2568 = vmatpush1.bf16.msra.mxu0 %v2542
    %2569 = vmatprep.subr.bf16.mxu0 0
    %2570 = vmatpush2.bf16.msra.mxu0 0
    %2571 = vmatprep.subr.bf16.mxu0 0
    %2572 = vmatpush2.bf16.msra.mxu0 0
    %2573 = vmatprep.subr.bf16.mxu0 0
    %2574 = vmatpush2.bf16.msra.mxu0 0
    %2575 = vmatprep.subr.bf16.mxu0 0
    %2576 = vmatpush2.bf16.msra.mxu0 0
    %2577 = vmatprep.subr.bf16.mxu0 0
    %2578 = vmatpush2.bf16.msra.mxu0 0
    %2579 = vmatprep.subr.bf16.mxu0 0
    %2580 = vmatpush2.bf16.msra.mxu0 0
    %2581 = vmatprep.subr.bf16.mxu0 0
    %2582 = vmatpush2.bf16.msra.mxu0 0
    %2583 = vmatprep.subr.bf16.mxu0 0
    %2584 = vmatpush2.bf16.msra.mxu0 0
    %2585 = vmatprep.mubr.bf16.mxu0 0
    %2586 = vmatmul.mubr.bf16.gmra.mxu0 %v2545
    %v2587 = vpop.f32.mrf.mxu0
    %v2588 = vadd.f32 0.0, %v2587
    %v2589 = vpop.f32.mrf.mxu0
    %v2590 = vpop.f32.mrf.mxu0
    %v2591 = vadd.f32 0.0, %v2590
    %v2592 = vpop.f32.mrf.mxu0
    %2593 = vmatprep.mubr.bf16.mxu0 0
    %2594 = vmatmul.mubr.bf16.gmra.mxu0 %v2548
    %v2595 = vpop.f32.mrf.mxu0
    %v2596 = vadd.f32 0.0, %v2595
    %v2597 = vpop.f32.mrf.mxu0
    %v2598 = vpop.f32.mrf.mxu0
    %v2599 = vadd.f32 0.0, %v2598
    %v2600 = vpop.f32.mrf.mxu0
    %2601 = vmatprep.mubr.bf16.mxu0 0
    %2602 = vmatmul.mubr.bf16.gmra.mxu0 %v2551
    %v2603 = vpop.f32.mrf.mxu0
    %v2604 = vadd.f32 0.0, %v2603
    %v2605 = vpop.f32.mrf.mxu0
    %v2606 = vpop.f32.mrf.mxu0
    %v2607 = vadd.f32 0.0, %v2606
    %v2608 = vpop.f32.mrf.mxu0
    %2609 = vdwg.mxu0
    %vm2610 = vcmask 15360
    %v2612 = vsel %vm2610, %v2588, 0
    %v2615 = vsel %vm2610, %v2591, 0
    %v2618 = vsel %vm2610, %v2596, 0
    %v2621 = vsel %vm2610, %v2599, 0
    %v2624 = vsel %vm2610, %v2604, 0
    %v2627 = vsel %vm2610, %v2607, 0
    %vm2629 = vcmask 1041408
    %v2631 = vsel %vm2629, %v2532, 0
    %2633 = vmatprep.subr.mxu0 0.0
    %2634 = vmatpush1.msra.mxu0 0.0
    %2635 = vmatprep.subr.mxu0 0.0
    %2636 = vmatpush1.msra.mxu0 0.0
    %2637 = vmatprep.subr.mxu0 0.0
    %2638 = vmatpush1.msra.mxu0 0.0
    %2639 = vmatprep.subr.mxu0 0.0
    %2640 = vmatpush1.msra.mxu0 0.0
    %2641 = vmatprep.subr.mxu0 0.0
    %2642 = vmatpush1.msra.mxu0 0.0
    %2643 = vmatprep.subr.mxu0 0.0
    %2644 = vmatpush1.msra.mxu0 0.0
    %2645 = vmatprep.subr.mxu0 0.0
    %2646 = vmatpush1.msra.mxu0 0.0
    %2647 = vmatprep.subr.mxu0 0.0
    %2648 = vmatpush1.msra.mxu0 0.0
    %2649 = vmatprep.subr.mxu0 0.0
    %2650 = vmatpush1.msra.mxu0 0.0
    %2651 = vmatprep.subr.mxu0 0.0
    %2652 = vmatpush1.msra.mxu0 0.0
    %2653 = vmatprep.subr.mxu0 0.0
    %2654 = vmatpush1.msra.mxu0 0.0
    %2655 = vmatprep.subr.mxu0 0.0
    %2656 = vmatpush1.msra.mxu0 0.0
    %2657 = vmatprep.subr.mxu0 0.0
    %2658 = vmatpush1.msra.mxu0 0.0
    %2659 = vmatprep.subr.mxu0 0.0
    %2660 = vmatpush1.msra.mxu0 0.0
    %2661 = vmatprep.subr.mxu0 0.0
    %2662 = vmatpush1.msra.mxu0 0.0
    %2663 = vmatprep.subr.mxu0 0.0
    %2664 = vmatpush1.msra.mxu0 %v2631
    %2665 = vmatprep.subr.mxu0 0.0
    %2666 = vmatpush2.msra.mxu0 0.0
    %2667 = vmatprep.subr.mxu0 0.0
    %2668 = vmatpush2.msra.mxu0 0.0
    %2669 = vmatprep.subr.mxu0 0.0
    %2670 = vmatpush2.msra.mxu0 0.0
    %2671 = vmatprep.subr.mxu0 0.0
    %2672 = vmatpush2.msra.mxu0 0.0
    %2673 = vmatprep.subr.mxu0 0.0
    %2674 = vmatpush2.msra.mxu0 0.0
    %2675 = vmatprep.subr.mxu0 0.0
    %2676 = vmatpush2.msra.mxu0 0.0
    %2677 = vmatprep.subr.mxu0 0.0
    %2678 = vmatpush2.msra.mxu0 0.0
    %2679 = vmatprep.subr.mxu0 0.0
    %2680 = vmatpush2.msra.mxu0 0.0
    %2681 = vmatprep.subr.mxu0 0.0
    %2682 = vmatpush2.msra.mxu0 0.0
    %2683 = vmatprep.subr.mxu0 0.0
    %2684 = vmatpush2.msra.mxu0 0.0
    %2685 = vmatprep.subr.mxu0 0.0
    %2686 = vmatpush2.msra.mxu0 0.0
    %2687 = vmatprep.subr.mxu0 0.0
    %2688 = vmatpush2.msra.mxu0 0.0
    %2689 = vmatprep.subr.mxu0 0.0
    %2690 = vmatpush2.msra.mxu0 0.0
    %2691 = vmatprep.subr.mxu0 0.0
    %2692 = vmatpush2.msra.mxu0 0.0
    %2693 = vmatprep.subr.mxu0 0.0
    %2694 = vmatpush2.msra.mxu0 0.0
    %2695 = vmatprep.subr.mxu0 0.0
    %2696 = vmatpush2.msra.mxu0 0.0
    %2697 = vmatprep.mubr.f32.mxu0 0.0
    %2698 = vmatmul.mubr.f32.gmra.mxu0 %v2612
    %v2699 = vpop.f32.mrf.mxu0
    %v2700 = vadd.f32 0.0, %v2699
    %v2701 = vpop.f32.mrf.mxu0
    %2702 = vmatprep.mubr.f32.mxu0 0.0
    %2703 = vmatmul.mubr.f32.gmra.mxu0 %v2615
    %v2704 = vpop.f32.mrf.mxu0
    %v2705 = vadd.f32 0.0, %v2704
    %v2706 = vpop.f32.mrf.mxu0
    %2707 = vmatprep.mubr.f32.mxu0 0.0
    %2708 = vmatmul.mubr.f32.gmra.mxu0 %v2618
    %v2709 = vpop.f32.mrf.mxu0
    %v2710 = vadd.f32 0.0, %v2709
    %v2711 = vpop.f32.mrf.mxu0
    %2712 = vmatprep.mubr.f32.mxu0 0.0
    %2713 = vmatmul.mubr.f32.gmra.mxu0 %v2621
    %v2714 = vpop.f32.mrf.mxu0
    %v2715 = vadd.f32 0.0, %v2714
    %v2716 = vpop.f32.mrf.mxu0
    %2717 = vmatprep.mubr.f32.mxu0 0.0
    %2718 = vmatmul.mubr.f32.gmra.mxu0 %v2624
    %v2719 = vpop.f32.mrf.mxu0
    %v2720 = vadd.f32 0.0, %v2719
    %v2721 = vpop.f32.mrf.mxu0
    %2722 = vmatprep.mubr.f32.mxu0 0.0
    %2723 = vmatmul.mubr.f32.gmra.mxu0 %v2627
    %v2724 = vpop.f32.mrf.mxu0
    %v2725 = vadd.f32 0.0, %v2724
    %v2726 = vpop.f32.mrf.mxu0
    %2727 = vdwg.mxu0
    %v2728 = vld [vmem:[#allocation4 + $0x1a0] sm:$0xff]
    %v2729 = vld [vmem:[#allocation4 + $0x1a8] sm:$0xff]
    %v2730 = vld [vmem:[#allocation4 + $0x1b0] sm:$0xff]
    %v2731 = vld [vmem:[#allocation4 + $0x1b8] sm:$0xff]
    %v2732 = vld [vmem:[#allocation4 + $0x1c0] sm:$0xff]
    %v2733 = vld [vmem:[#allocation4 + $0x1c8] sm:$0xff]
    %v2734 = vmul.f32 %v2700, %v2728
    %v2735 = vmul.f32 %v2705, %v2729
    %v2736 = vmul.f32 %v2710, %v2730
    %v2737 = vmul.f32 %v2715, %v2731
    %v2738 = vmul.f32 %v2720, %v2732
    %v2739 = vmul.f32 %v2725, %v2733
    %v2740 = vld [vmem:[#allocation4 + $0x1d0] sm:$0x3]
    %v2741 = vld [vmem:[#allocation2 + $0x78] sm:$0xf]
    %v2742 = vld [vmem:[#allocation2 + $0x7c] sm:$0xf]
    %v2743 = vld [vmem:[#allocation2 + $0x80] sm:$0xf]
    %v2744 = vld [vmem:[#allocation2 + $0x84] sm:$0xf]
    %v2745 = vld [vmem:[#allocation4 + $0x28] sm:$0x1]
    %v2746 = vlaneseq
    %v2747 = vshrl.u32 %v2746, 7
    %v2748 = vsub.s32 0, %v2747
    %v2749 = vrot.slane %v2745, %v2748
    %v2754 = vunpack.c.l.b16 %v2741
    %v2755 = vunpack.c.l.b16 %v2742
    %v2756 = vunpack.c.l.b16 %v2743
    %v2757 = vunpack.c.l.b16 %v2744
    %v2758 = vpack.c.b16 %v2755, %v2754
    %v2759 = vpack.c.b16 %v2757, %v2756
    %2762 = vmatprep.subr.bf16.mxu0 0
    %2763 = vmatpush1.bf16.msra.mxu0 0
    %2764 = vmatprep.subr.bf16.mxu0 0
    %2765 = vmatpush1.bf16.msra.mxu0 0
    %2766 = vmatprep.subr.bf16.mxu0 0
    %2767 = vmatpush1.bf16.msra.mxu0 0
    %2768 = vmatprep.subr.bf16.mxu0 0
    %2769 = vmatpush1.bf16.msra.mxu0 0
    %2770 = vmatprep.subr.bf16.mxu0 0
    %2771 = vmatpush1.bf16.msra.mxu0 0
    %2772 = vmatprep.subr.bf16.mxu0 0
    %2773 = vmatpush1.bf16.msra.mxu0 0
    %2774 = vmatprep.subr.bf16.mxu0 0
    %2775 = vmatpush1.bf16.msra.mxu0 %v2759
    %2776 = vmatprep.subr.bf16.mxu0 0
    %2777 = vmatpush1.bf16.msra.mxu0 %v2758
    %2778 = vmatprep.subr.bf16.mxu0 0
    %2779 = vmatpush2.bf16.msra.mxu0 0
    %2780 = vmatprep.subr.bf16.mxu0 0
    %2781 = vmatpush2.bf16.msra.mxu0 0
    %2782 = vmatprep.subr.bf16.mxu0 0
    %2783 = vmatpush2.bf16.msra.mxu0 0
    %2784 = vmatprep.subr.bf16.mxu0 0
    %2785 = vmatpush2.bf16.msra.mxu0 0
    %2786 = vmatprep.subr.bf16.mxu0 0
    %2787 = vmatpush2.bf16.msra.mxu0 0
    %2788 = vmatprep.subr.bf16.mxu0 0
    %2789 = vmatpush2.bf16.msra.mxu0 0
    %2790 = vmatprep.subr.bf16.mxu0 0
    %2791 = vmatpush2.bf16.msra.mxu0 0
    %2792 = vmatprep.subr.bf16.mxu0 0
    %2793 = vmatpush2.bf16.msra.mxu0 0
    %2794 = vmatprep.mubr.bf16.mxu0 0
    %2795 = vmatmul.mubr.bf16.gmra.mxu0 %v2478
    %v2796 = vpop.f32.mrf.mxu0
    %v2797 = vadd.f32 %v2749, %v2796
    %v2798 = vpop.f32.mrf.mxu0
    %v2799 = vpop.f32.mrf.mxu0
    %v2800 = vpop.f32.mrf.mxu0
    %2801 = vdwg.mxu0
    %v2802 = vld [vmem:[#allocation2 + $0x88] sm:$0xf]
    %v2803 = vld [vmem:[#allocation2 + $0x8c] sm:$0xf]
    %v2804 = vld [vmem:[#allocation2 + $0x90] sm:$0xf]
    %v2805 = vld [vmem:[#allocation2 + $0x94] sm:$0xf]
    %v2806 = vld [vmem:[#allocation4 + $0x30] sm:$0x1]
    %v2807 = vlaneseq
    %v2808 = vshrl.u32 %v2807, 7
    %v2809 = vsub.s32 0, %v2808
    %v2810 = vrot.slane %v2806, %v2809
    %v2815 = vunpack.c.l.b16 %v2802
    %v2816 = vunpack.c.l.b16 %v2803
    %v2817 = vunpack.c.l.b16 %v2804
    %v2818 = vunpack.c.l.b16 %v2805
    %v2819 = vpack.c.b16 %v2816, %v2815
    %v2820 = vpack.c.b16 %v2818, %v2817
    %2823 = vmatprep.subr.bf16.mxu0 0
    %2824 = vmatpush1.bf16.msra.mxu0 0
    %2825 = vmatprep.subr.bf16.mxu0 0
    %2826 = vmatpush1.bf16.msra.mxu0 0
    %2827 = vmatprep.subr.bf16.mxu0 0
    %2828 = vmatpush1.bf16.msra.mxu0 0
    %2829 = vmatprep.subr.bf16.mxu0 0
    %2830 = vmatpush1.bf16.msra.mxu0 0
    %2831 = vmatprep.subr.bf16.mxu0 0
    %2832 = vmatpush1.bf16.msra.mxu0 0
    %2833 = vmatprep.subr.bf16.mxu0 0
    %2834 = vmatpush1.bf16.msra.mxu0 0
    %2835 = vmatprep.subr.bf16.mxu0 0
    %2836 = vmatpush1.bf16.msra.mxu0 %v2820
    %2837 = vmatprep.subr.bf16.mxu0 0
    %2838 = vmatpush1.bf16.msra.mxu0 %v2819
    %2839 = vmatprep.subr.bf16.mxu0 0
    %2840 = vmatpush2.bf16.msra.mxu0 0
    %2841 = vmatprep.subr.bf16.mxu0 0
    %2842 = vmatpush2.bf16.msra.mxu0 0
    %2843 = vmatprep.subr.bf16.mxu0 0
    %2844 = vmatpush2.bf16.msra.mxu0 0
    %2845 = vmatprep.subr.bf16.mxu0 0
    %2846 = vmatpush2.bf16.msra.mxu0 0
    %2847 = vmatprep.subr.bf16.mxu0 0
    %2848 = vmatpush2.bf16.msra.mxu0 0
    %2849 = vmatprep.subr.bf16.mxu0 0
    %2850 = vmatpush2.bf16.msra.mxu0 0
    %2851 = vmatprep.subr.bf16.mxu0 0
    %2852 = vmatpush2.bf16.msra.mxu0 0
    %2853 = vmatprep.subr.bf16.mxu0 0
    %2854 = vmatpush2.bf16.msra.mxu0 0
    %2855 = vmatprep.mubr.bf16.mxu0 0
    %2856 = vmatmul.mubr.bf16.gmra.mxu0 %v2478
    %v2857 = vpop.f32.mrf.mxu0
    %v2858 = vadd.f32 %v2810, %v2857
    %v2859 = vpop.f32.mrf.mxu0
    %v2860 = vpop.f32.mrf.mxu0
    %v2861 = vpop.f32.mrf.mxu0
    %2862 = vdwg.mxu0
    %v2864 = vsel %vm2610, %v2797, 0
    %2866 = vmatprep.subr.mxu0 0.0
    %2867 = vmatpush1.msra.mxu0 0.0
    %2868 = vmatprep.subr.mxu0 0.0
    %2869 = vmatpush1.msra.mxu0 0.0
    %2870 = vmatprep.subr.mxu0 0.0
    %2871 = vmatpush1.msra.mxu0 0.0
    %2872 = vmatprep.subr.mxu0 0.0
    %2873 = vmatpush1.msra.mxu0 0.0
    %2874 = vmatprep.subr.mxu0 0.0
    %2875 = vmatpush1.msra.mxu0 0.0
    %2876 = vmatprep.subr.mxu0 0.0
    %2877 = vmatpush1.msra.mxu0 0.0
    %2878 = vmatprep.subr.mxu0 0.0
    %2879 = vmatpush1.msra.mxu0 0.0
    %2880 = vmatprep.subr.mxu0 0.0
    %2881 = vmatpush1.msra.mxu0 0.0
    %2882 = vmatprep.subr.mxu0 0.0
    %2883 = vmatpush1.msra.mxu0 0.0
    %2884 = vmatprep.subr.mxu0 0.0
    %2885 = vmatpush1.msra.mxu0 0.0
    %2886 = vmatprep.subr.mxu0 0.0
    %2887 = vmatpush1.msra.mxu0 0.0
    %2888 = vmatprep.subr.mxu0 0.0
    %2889 = vmatpush1.msra.mxu0 0.0
    %2890 = vmatprep.subr.mxu0 0.0
    %2891 = vmatpush1.msra.mxu0 0.0
    %2892 = vmatprep.subr.mxu0 0.0
    %2893 = vmatpush1.msra.mxu0 0.0
    %2894 = vmatprep.subr.mxu0 0.0
    %2895 = vmatpush1.msra.mxu0 0.0
    %2896 = vmatprep.subr.mxu0 0.0
    %2897 = vmatpush1.msra.mxu0 %v2631
    %2898 = vmatprep.subr.mxu0 0.0
    %2899 = vmatpush2.msra.mxu0 0.0
    %2900 = vmatprep.subr.mxu0 0.0
    %2901 = vmatpush2.msra.mxu0 0.0
    %2902 = vmatprep.subr.mxu0 0.0
    %2903 = vmatpush2.msra.mxu0 0.0
    %2904 = vmatprep.subr.mxu0 0.0
    %2905 = vmatpush2.msra.mxu0 0.0
    %2906 = vmatprep.subr.mxu0 0.0
    %2907 = vmatpush2.msra.mxu0 0.0
    %2908 = vmatprep.subr.mxu0 0.0
    %2909 = vmatpush2.msra.mxu0 0.0
    %2910 = vmatprep.subr.mxu0 0.0
    %2911 = vmatpush2.msra.mxu0 0.0
    %2912 = vmatprep.subr.mxu0 0.0
    %2913 = vmatpush2.msra.mxu0 0.0
    %2914 = vmatprep.subr.mxu0 0.0
    %2915 = vmatpush2.msra.mxu0 0.0
    %2916 = vmatprep.subr.mxu0 0.0
    %2917 = vmatpush2.msra.mxu0 0.0
    %2918 = vmatprep.subr.mxu0 0.0
    %2919 = vmatpush2.msra.mxu0 0.0
    %2920 = vmatprep.subr.mxu0 0.0
    %2921 = vmatpush2.msra.mxu0 0.0
    %2922 = vmatprep.subr.mxu0 0.0
    %2923 = vmatpush2.msra.mxu0 0.0
    %2924 = vmatprep.subr.mxu0 0.0
    %2925 = vmatpush2.msra.mxu0 0.0
    %2926 = vmatprep.subr.mxu0 0.0
    %2927 = vmatpush2.msra.mxu0 0.0
    %2928 = vmatprep.subr.mxu0 0.0
    %2929 = vmatpush2.msra.mxu0 0.0
    %2930 = vmatprep.mubr.f32.mxu0 0.0
    %2931 = vmatmul.mubr.f32.gmra.mxu0 %v2864
    %v2932 = vpop.f32.mrf.mxu0
    %v2933 = vadd.f32 0.0, %v2932
    %v2934 = vpop.f32.mrf.mxu0
    %2935 = vdwg.mxu0
    %v2937 = vsel %vm73, %v2740, 0
    %2939 = vmatprep.subr.mxu0 0.0
    %2940 = vmatpush1.msra.mxu0 0.0
    %2941 = vmatprep.subr.mxu0 0.0
    %2942 = vmatpush1.msra.mxu0 0.0
    %2943 = vmatprep.subr.mxu0 0.0
    %2944 = vmatpush1.msra.mxu0 0.0
    %2945 = vmatprep.subr.mxu0 0.0
    %2946 = vmatpush1.msra.mxu0 0.0
    %2947 = vmatprep.subr.mxu0 0.0
    %2948 = vmatpush1.msra.mxu0 0.0
    %2949 = vmatprep.subr.mxu0 0.0
    %2950 = vmatpush1.msra.mxu0 0.0
    %2951 = vmatprep.subr.mxu0 0.0
    %2952 = vmatpush1.msra.mxu0 0.0
    %2953 = vmatprep.subr.mxu0 0.0
    %2954 = vmatpush1.msra.mxu0 0.0
    %2955 = vmatprep.subr.mxu0 0.0
    %2956 = vmatpush1.msra.mxu0 0.0
    %2957 = vmatprep.subr.mxu0 0.0
    %2958 = vmatpush1.msra.mxu0 0.0
    %2959 = vmatprep.subr.mxu0 0.0
    %2960 = vmatpush1.msra.mxu0 %v2739
    %2961 = vmatprep.subr.mxu0 0.0
    %2962 = vmatpush1.msra.mxu0 %v2738
    %2963 = vmatprep.subr.mxu0 0.0
    %2964 = vmatpush1.msra.mxu0 %v2737
    %2965 = vmatprep.subr.mxu0 0.0
    %2966 = vmatpush1.msra.mxu0 %v2736
    %2967 = vmatprep.subr.mxu0 0.0
    %2968 = vmatpush1.msra.mxu0 %v2735
    %2969 = vmatprep.subr.mxu0 0.0
    %2970 = vmatpush1.msra.mxu0 %v2734
    %2971 = vmatprep.subr.mxu0 0.0
    %2972 = vmatpush2.msra.mxu0 0.0
    %2973 = vmatprep.subr.mxu0 0.0
    %2974 = vmatpush2.msra.mxu0 0.0
    %2975 = vmatprep.subr.mxu0 0.0
    %2976 = vmatpush2.msra.mxu0 0.0
    %2977 = vmatprep.subr.mxu0 0.0
    %2978 = vmatpush2.msra.mxu0 0.0
    %2979 = vmatprep.subr.mxu0 0.0
    %2980 = vmatpush2.msra.mxu0 0.0
    %2981 = vmatprep.subr.mxu0 0.0
    %2982 = vmatpush2.msra.mxu0 0.0
    %2983 = vmatprep.subr.mxu0 0.0
    %2984 = vmatpush2.msra.mxu0 0.0
    %2985 = vmatprep.subr.mxu0 0.0
    %2986 = vmatpush2.msra.mxu0 0.0
    %2987 = vmatprep.subr.mxu0 0.0
    %2988 = vmatpush2.msra.mxu0 0.0
    %2989 = vmatprep.subr.mxu0 0.0
    %2990 = vmatpush2.msra.mxu0 0.0
    %2991 = vmatprep.subr.mxu0 0.0
    %2992 = vmatpush2.msra.mxu0 0.0
    %2993 = vmatprep.subr.mxu0 0.0
    %2994 = vmatpush2.msra.mxu0 0.0
    %2995 = vmatprep.subr.mxu0 0.0
    %2996 = vmatpush2.msra.mxu0 0.0
    %2997 = vmatprep.subr.mxu0 0.0
    %2998 = vmatpush2.msra.mxu0 0.0
    %2999 = vmatprep.subr.mxu0 0.0
    %3000 = vmatpush2.msra.mxu0 0.0
    %3001 = vmatprep.subr.mxu0 0.0
    %3002 = vmatpush2.msra.mxu0 0.0
    %3003 = vmatprep.mubr.f32.mxu0 0.0
    %3004 = vmatmul.mubr.f32.gmra.mxu0 %v2937
    %v3005 = vpop.f32.mrf.mxu0
    %v3006 = vadd.f32 %v2933, %v3005
    %v3007 = vpop.f32.mrf.mxu0
    %3008 = vdwg.mxu0
    %3010 = vrot.lane.b32.xlu0 %v3006, 4
    %v3011 = vpop.permute.xlu0 %3010
    %v3013 = vsel %vm1879, %v2858, %v3011
    %v3014 = vld [vmem:[%s0 + $0x32] sm:$0x3]
    %vm3015 = vcmp.ne.f32.partialorder %v3014, 0.0
    %v3016 = vsel %vm3015, %v3013, -1e+10
    %3018 = vrot.lane.b32.xlu0 %v3016, 4
    %v3019 = vpop.permute.xlu0 %3018
    %v3021 = vsel %vm2610, %v2531, 0.0
    %v3022 = vsel %vm1879, %v3021, %v3019
    %v3023 = vsel %vm2411, %v3022, 0.0
    %v3024 = vsel %vm2629, %v3023, 0.0
    %3025 = vst [vmem:[%s3] sm:$0xff] %v3024
    // Predicated region
    $region22: #{equivariant_skynet_forward.1} parent=1 // pred_check
      _
    $region23: #{equivariant_skynet_forward.1} parent=1 // pred_check_branch
      %3027 = sbr.rel (0) target = $region25
    $region24: #{equivariant_skynet_forward.1} parent=1 // pred_region
      _
    $region25: #{equivariant_skynet_forward.1} parent=1 // pred_fallthru
      _
    // Predicated region
    $region26: #{equivariant_skynet_forward.1} parent=1 // pred_check
      _
    $region27: #{equivariant_skynet_forward.1} parent=1 // pred_check_branch
      %3029 = sbr.rel (0) target = $region29
    $region28: #{equivariant_skynet_forward.1} parent=1 // pred_region
      _
    $region29: #{equivariant_skynet_forward.1} parent=1 // pred_fallthru
      _
    %3030 = vsyncpa [#allocation3], 1
    %3031 = vsyncpa [#allocation5], 1

</llo_original>
